<compile_context>
chip_gen: v7x
topology: tpu7x:2x2x1
jax: 0.10.0
libtpu: 0.0.40
codegen_flags: <defaults>
</compile_context>

<pallas_src>
import jax
import jax.numpy as jnp
from jax.experimental import pallas as pl
from jax.experimental.pallas import tpu as pltpu


def _round_up(n, m):
    return ((n + m - 1) // m) * m


# ---------------------------------------------------------------------------
# Fused kernel: 3x (int8-weight Linear + ReLU)  +  folded (Linear @ word2vec.T)
# Grid = (batch_tiles, vocab_tiles); hidden activation cached in VMEM scratch.
# ---------------------------------------------------------------------------
def _dnn3word_fused_kernel(x_ref,
                           w1_ref, s1_ref, b1_ref,
                           w2_ref, s2_ref, b2_ref,
                           w3_ref, s3_ref, b3_ref,
                           wf_ref, sf_ref, bf_ref,
                           o_ref, h_ref):
    def hidden_layer(h, wq_ref, s_ref, b_ref):
        # int8 weights -> bf16 (exact: |q| <= 127), bf16 x bf16 MXU, f32 acc.
        w = wq_ref[...].astype(jnp.bfloat16)
        y = jnp.dot(h, w, preferred_element_type=jnp.float32)
        y = y * s_ref[...] + b_ref[...]          # per-out-channel dequant + bias
        return jnp.maximum(y, 0.0).astype(jnp.bfloat16)

    # Hidden stack only once per batch tile (v == 0); reused for all vocab tiles.
    @pl.when(pl.program_id(1) == 0)
    def _():
        h = hidden_layer(x_ref[...], w1_ref, s1_ref, b1_ref)
        h = hidden_layer(h,          w2_ref, s2_ref, b2_ref)
        h = hidden_layer(h,          w3_ref, s3_ref, b3_ref)
        h_ref[...] = h

    # Folded (Linear @ word2vec.T) for this vocab tile.
    wf = wf_ref[...].astype(jnp.bfloat16)
    y = jnp.dot(h_ref[...], wf, preferred_element_type=jnp.float32)
    o_ref[...] = (y * sf_ref[...] + bf_ref[...]).astype(o_ref.dtype)


# ---------------------------------------------------------------------------
# One-time parameter prep: fold, per-output-channel int8 quantize, pad
# ---------------------------------------------------------------------------
def dnn3word_prepare(params, word2vec):
    (w1, b1), (w2, b2), (w3, b3), (w4, b4) = params
    V, D = word2vec.shape
    assert w4.shape[1] == D

    # Fold last Linear into the word2vec projection (no nonlinearity between),
    # in f32, BEFORE quantization.
    wf = w4 @ word2vec.T                      # (1000, V)
    bf = b4 @ word2vec.T                      # (V,)

    in_p = _round_up(w1.shape[0], 128)        # 500  -> 512
    hid_p = _round_up(w1.shape[1], 128)       # 1000 -> 1024
    v_p = _round_up(V, 128)

    def quant_pad(w, rows, cols):
        # Symmetric per-output-channel int8; f32 scale applied in-kernel.
        amax = jnp.max(jnp.abs(w), axis=0, keepdims=True)          # (1, N)
        scale = jnp.where(amax > 0, amax / 127.0, 1.0).astype(jnp.float32)
        q = jnp.clip(jnp.round(w / scale), -127, 127).astype(jnp.int8)
        q = jnp.pad(q, ((0, rows - q.shape[0]), (0, cols - q.shape[1])))
        s = jnp.pad(scale, ((0, 0), (0, cols - scale.shape[1])),
                    constant_values=1.0)
        return q, s

    def pad_b(b, cols):
        return jnp.pad(b, (0, cols - b.shape[0])).reshape(1, cols).astype(jnp.float32)

    q1, s1 = quant_pad(w1, in_p, hid_p)
    q2, s2 = quant_pad(w2, hid_p, hid_p)
    q3, s3 = quant_pad(w3, hid_p, hid_p)
    qf, sf = quant_pad(wf, hid_p, v_p)

    tensors = (q1, s1, pad_b(b1, hid_p),
               q2, s2, pad_b(b2, hid_p),
               q3, s3, pad_b(b3, hid_p),
               qf, sf, pad_b(bf, v_p))
    meta = dict(in_dim=w1.shape[0], in_p=in_p, hid_p=hid_p, vocab=V, v_p=v_p)
    return tensors, meta


# ---------------------------------------------------------------------------
# Forward (single fused pallas_call, 2-D grid)
# ---------------------------------------------------------------------------
def dnn3word_forward(prepped, x, *, tm=None, tn=None):
    tensors, meta = prepped
    B, K = x.shape
    assert K == meta["in_dim"]
    in_p, hid_p, v_p = meta["in_p"], meta["hid_p"], meta["v_p"]

    # Batch tile: multiple of 16 (bf16 packed sublane tile is (16, 128)).
    if tm is None:
        tm = min(128, _round_up(max(B, 1), 16))
    assert tm % 8 == 0
    b_p = _round_up(max(B, tm), tm)

    # Vocab tile: multiple of 128 dividing v_p (keeps Wf tile small on v7x).
    if tn is None:
        tn = 128
        for cand in (2048, 1024, 512, 256, 128):
            if v_p % cand == 0:
                tn = cand
                break
    assert v_p % tn == 0 and tn % 128 == 0

    # Pre-cast x to bf16 in the wrapper (halves its DMA, drops in-kernel cast).
    x_p = jnp.pad(x, ((0, b_p - B), (0, in_p - K))).astype(jnp.bfloat16)

    grid = (b_p // tm, v_p // tn)

    def const2(shape):
        # Constant block index -> fetched once, VMEM-resident for the whole grid.
        return pl.BlockSpec(shape, lambda m, v: (0, 0))

    in_specs = [
        pl.BlockSpec((tm, in_p), lambda m, v: (m, 0)),                 # x
        const2((in_p, hid_p)),  const2((1, hid_p)), const2((1, hid_p)),  # W1q,s1,b1
        const2((hid_p, hid_p)), const2((1, hid_p)), const2((1, hid_p)),  # W2q,s2,b2
        const2((hid_p, hid_p)), const2((1, hid_p)), const2((1, hid_p)),  # W3q,s3,b3
        pl.BlockSpec((hid_p, tn), lambda m, v: (0, v)),                # Wf q
        pl.BlockSpec((1, tn),     lambda m, v: (0, v)),                # sf
        pl.BlockSpec((1, tn),     lambda m, v: (0, v)),                # bf
    ]
    out_specs = pl.BlockSpec((tm, tn), lambda m, v: (m, v))

    # Advisory cost (int8 weight bytes dominate) so XLA can overlap neighbours.
    flops = 2 * b_p * (in_p * hid_p + 2 * hid_p * hid_p + hid_p * v_p)
    weight_bytes = in_p * hid_p + 2 * hid_p * hid_p + hid_p * v_p        # int8
    misc_bytes = (3 * 2 * hid_p + 2 * v_p) * 4                           # scales+bias f32
    io_bytes = b_p * in_p * 2 + b_p * v_p * 4
    cost = pl.CostEstimate(flops=int(flops), transcendentals=0,
                           bytes_accessed=int(weight_bytes + misc_bytes + io_bytes))

    y_p = pl.pallas_call(
        _dnn3word_fused_kernel,
        out_shape=jax.ShapeDtypeStruct((b_p, v_p), jnp.float32),
        grid=grid,
        in_specs=in_specs,
        out_specs=out_specs,
        scratch_shapes=[pltpu.VMEM((tm, hid_p), jnp.bfloat16)],   # cached hidden act
        compiler_params=pltpu.CompilerParams(
            # batch tiles independent -> "parallel" (megacore on v7x);
            # vocab axis carries the hidden-activation scratch -> "arbitrary".
            dimension_semantics=("parallel", "arbitrary"),
            vmem_limit_bytes=32 << 20,
        ),
        cost_estimate=cost,
    )(x_p, *tensors)
    return y_p[:B, :meta["vocab"]]


# ---------------------------------------------------------------------------
# Parameters + references
# ---------------------------------------------------------------------------
def init_params(key, word2vec_dim):
    """Deterministic synthetic parameters matching the PyTorch module's shapes."""
    dims = [(500, 1000), (1000, 1000), (1000, 1000), (1000, word2vec_dim)]
    params = []
    for i, (fin, fout) in enumerate(dims):
        kw, kb, key = jax.random.split(jax.random.fold_in(key, i), 3)
        scale = 1.0 / jnp.sqrt(jnp.float32(fin))
        w = jax.random.uniform(kw, (fin, fout), jnp.float32, -scale, scale)
        b = jax.random.uniform(kb, (fout,), jnp.float32, -scale, scale)
        params.append((w, b))
    return params


def dnn3word_forward_ref_f32(params, x, word2vec):
    """Original-module semantics in pure f32 JAX (Dropout = identity in eval)."""
    h = x
    for i, (w, b) in enumerate(params):
        h = h @ w + b
        if i < 3:
            h = jnp.maximum(h, 0.0)
    return h @ word2vec.T


def dnn3word_forward_ref_matched(prepped, x):
    """Pure-JAX mirror of the exact kernel math (fold/pad/int8/bf16)."""
    tensors, meta = prepped
    (q1, s1, b1, q2, s2, b2, q3, s3, b3, qf, sf, bf) = tensors
    B = x.shape[0]
    h = jnp.pad(x, ((0, 0), (0, meta["in_p"] - x.shape[1]))).astype(jnp.bfloat16)
    for (q, s, b) in ((q1, s1, b1), (q2, s2, b2), (q3, s3, b3)):
        y = jnp.dot(h, q.astype(jnp.bfloat16), preferred_element_type=jnp.float32)
        y = y * s + b
        h = jnp.maximum(y, 0.0).astype(jnp.bfloat16)
    y = jnp.dot(h, qf.astype(jnp.bfloat16), preferred_element_type=jnp.float32)
    y = y * sf + bf
    return y[:B, :meta["vocab"]]


if __name__ == "__main__":
    B = 24                # batch (padded to 32 -> 2 batch tiles of 16)
    WORD2VEC_DIM = 128    # params.word2vecDIM
    VOCAB = 256           # number of word vectors (-> 2 vocab tiles of 128)

    key = jax.random.PRNGKey(0)
    kx, kv, kp = jax.random.split(key, 3)

    x = jax.random.normal(kx, (B, 500), jnp.float32)
    word2vec = jax.random.normal(kv, (VOCAB, WORD2VEC_DIM), jnp.float32)
    params = init_params(kp, WORD2VEC_DIM)

    # One-time prep (fold last Linear into word2vec, per-channel int8, pad).
    prepped = dnn3word_prepare(params, word2vec)

    # Small tiles chosen explicitly so the toy run exercises the full 2x2 grid
    # (batch tiling + vocab tiling + hidden-activation scratch reuse).
    fwd = jax.jit(lambda xx: dnn3word_forward(prepped, xx, tm=16, tn=128))
    y_hat = jax.block_until_ready(fwd(x))
    assert y_hat.shape == (B, VOCAB)

    # Tight check against a pure-JAX mirror of the exact kernel math.
    y_matched = dnn3word_forward_ref_matched(prepped, x)
    assert jnp.allclose(y_hat, y_matched, atol=2e-3, rtol=2e-3), (
        float(jnp.max(jnp.abs(y_hat - y_matched))))

    # Check against the original unfolded f32 module semantics: differences come
    # only from int8 weight quantization + bf16 activations + fold reassociation.
    y_f32 = dnn3word_forward_ref_f32(params, x, word2vec)
    rel_err = jnp.linalg.norm(y_hat - y_f32) / jnp.linalg.norm(y_f32)
    assert jnp.isfinite(rel_err) and rel_err < 0.05, float(rel_err)

    print("KERNEL_OK")
</pallas_src>

<mosaic_0001>
module attributes {stable_mosaic.version = 11 : i64} {
  func.func @_dnn3word_fused_kernel(%arg0: i32, %arg1: i32, %arg2: memref<16x512xbf16, #tpu.memory_space<vmem>>, %arg3: memref<512x1024xi8, #tpu.memory_space<vmem>>, %arg4: memref<1x1024xf32, #tpu.memory_space<vmem>>, %arg5: memref<1x1024xf32, #tpu.memory_space<vmem>>, %arg6: memref<1024x1024xi8, #tpu.memory_space<vmem>>, %arg7: memref<1x1024xf32, #tpu.memory_space<vmem>>, %arg8: memref<1x1024xf32, #tpu.memory_space<vmem>>, %arg9: memref<1024x1024xi8, #tpu.memory_space<vmem>>, %arg10: memref<1x1024xf32, #tpu.memory_space<vmem>>, %arg11: memref<1x1024xf32, #tpu.memory_space<vmem>>, %arg12: memref<1024x128xi8, #tpu.memory_space<vmem>>, %arg13: memref<1x128xf32, #tpu.memory_space<vmem>>, %arg14: memref<1x128xf32, #tpu.memory_space<vmem>>, %arg15: memref<16x128xf32, #tpu.memory_space<vmem>>, %arg16: memref<16x1024xbf16, #tpu.memory_space<vmem>>) attributes {dimension_semantics = [#tpu.dimension_semantics<parallel>, #tpu.dimension_semantics<arbitrary>], iteration_bounds = array<i64: 2, 2>, scalar_prefetch = 0 : i64, scratch_operands = 1 : i64, tpu.core_type = #tpu.core_type<tc>, window_params = [{transform_indices = @transform_0, window_bounds = array<i64: 16, 512>}, {pipeline_mode = #tpu.pipeline_mode<synchronous>, transform_indices = @transform_1, window_bounds = array<i64: 512, 1024>}, {pipeline_mode = #tpu.pipeline_mode<synchronous>, transform_indices = @transform_2, window_bounds = array<i64: 1, 1024>}, {pipeline_mode = #tpu.pipeline_mode<synchronous>, transform_indices = @transform_3, window_bounds = array<i64: 1, 1024>}, {pipeline_mode = #tpu.pipeline_mode<synchronous>, transform_indices = @transform_4, window_bounds = array<i64: 1024, 1024>}, {pipeline_mode = #tpu.pipeline_mode<synchronous>, transform_indices = @transform_5, window_bounds = array<i64: 1, 1024>}, {pipeline_mode = #tpu.pipeline_mode<synchronous>, transform_indices = @transform_6, window_bounds = array<i64: 1, 1024>}, {pipeline_mode = #tpu.pipeline_mode<synchronous>, transform_indices = @transform_7, window_bounds = array<i64: 1024, 1024>}, {pipeline_mode = #tpu.pipeline_mode<synchronous>, transform_indices = @transform_8, window_bounds = array<i64: 1, 1024>}, {pipeline_mode = #tpu.pipeline_mode<synchronous>, transform_indices = @transform_9, window_bounds = array<i64: 1, 1024>}, {transform_indices = @transform_10, window_bounds = array<i64: 1024, 128>}, {transform_indices = @transform_11, window_bounds = array<i64: 1, 128>}, {transform_indices = @transform_12, window_bounds = array<i64: 1, 128>}, {transform_indices = @transform_13, window_bounds = array<i64: 16, 128>}]} {
    %c0_i32 = arith.constant 0 : i32
    %0 = arith.cmpi eq, %arg1, %c0_i32 : i32
    %1 = arith.extui %0 : i1 to i32
    %c0_i32_0 = arith.constant 0 : i32
    %2 = arith.cmpi ne, %1, %c0_i32_0 : i32
    scf.if %2 {
      %c0_10 = arith.constant 0 : index
      %c0_11 = arith.constant 0 : index
      %14 = vector.load %arg2[%c0_10, %c0_11] : memref<16x512xbf16, #tpu.memory_space<vmem>>, vector<16x512xbf16>
      %c0_12 = arith.constant 0 : index
      %c0_13 = arith.constant 0 : index
      %15 = vector.load %arg3[%c0_12, %c0_13] : memref<512x1024xi8, #tpu.memory_space<vmem>>, vector<512x1024xi8>
      %16 = arith.sitofp %15 : vector<512x1024xi8> to vector<512x1024xbf16>
      %cst_14 = arith.constant dense<0.000000e+00> : vector<16x1024xf32>
      %17 = tpu.matmul %14, %16, %cst_14 {dimension_numbers = #tpu.dot_dimension_numbers<[1], [0], [0], [1], [0, 0, 1, 1], [], []>} : vector<16x512xbf16>, vector<512x1024xbf16>, vector<16x1024xf32> -> vector<16x1024xf32>
      %c0_15 = arith.constant 0 : index
      %c0_16 = arith.constant 0 : index
      %18 = vector.load %arg4[%c0_15, %c0_16] : memref<1x1024xf32, #tpu.memory_space<vmem>>, vector<1x1024xf32>
      %19 = vector.broadcast %18 : vector<1x1024xf32> to vector<16x1024xf32>
      %20 = arith.mulf %17, %19 : vector<16x1024xf32>
      %c0_17 = arith.constant 0 : index
      %c0_18 = arith.constant 0 : index
      %21 = vector.load %arg5[%c0_17, %c0_18] : memref<1x1024xf32, #tpu.memory_space<vmem>>, vector<1x1024xf32>
      %22 = vector.broadcast %21 : vector<1x1024xf32> to vector<16x1024xf32>
      %23 = arith.addf %20, %22 : vector<16x1024xf32>
      %cst_19 = arith.constant 0.000000e+00 : f32
      %24 = vector.broadcast %cst_19 : f32 to vector<16x1024xf32>
      %25 = arith.maximumf %23, %24 : vector<16x1024xf32>
      %26 = arith.truncf %25 : vector<16x1024xf32> to vector<16x1024xbf16>
      %c0_20 = arith.constant 0 : index
      %c0_21 = arith.constant 0 : index
      %27 = vector.load %arg6[%c0_20, %c0_21] : memref<1024x1024xi8, #tpu.memory_space<vmem>>, vector<1024x1024xi8>
      %28 = arith.sitofp %27 : vector<1024x1024xi8> to vector<1024x1024xbf16>
      %cst_22 = arith.constant dense<0.000000e+00> : vector<16x1024xf32>
      %29 = tpu.matmul %26, %28, %cst_22 {dimension_numbers = #tpu.dot_dimension_numbers<[1], [0], [0], [1], [0, 0, 1, 1], [], []>} : vector<16x1024xbf16>, vector<1024x1024xbf16>, vector<16x1024xf32> -> vector<16x1024xf32>
      %c0_23 = arith.constant 0 : index
      %c0_24 = arith.constant 0 : index
      %30 = vector.load %arg7[%c0_23, %c0_24] : memref<1x1024xf32, #tpu.memory_space<vmem>>, vector<1x1024xf32>
      %31 = vector.broadcast %30 : vector<1x1024xf32> to vector<16x1024xf32>
      %32 = arith.mulf %29, %31 : vector<16x1024xf32>
      %c0_25 = arith.constant 0 : index
      %c0_26 = arith.constant 0 : index
      %33 = vector.load %arg8[%c0_25, %c0_26] : memref<1x1024xf32, #tpu.memory_space<vmem>>, vector<1x1024xf32>
      %34 = vector.broadcast %33 : vector<1x1024xf32> to vector<16x1024xf32>
      %35 = arith.addf %32, %34 : vector<16x1024xf32>
      %cst_27 = arith.constant 0.000000e+00 : f32
      %36 = vector.broadcast %cst_27 : f32 to vector<16x1024xf32>
      %37 = arith.maximumf %35, %36 : vector<16x1024xf32>
      %38 = arith.truncf %37 : vector<16x1024xf32> to vector<16x1024xbf16>
      %c0_28 = arith.constant 0 : index
      %c0_29 = arith.constant 0 : index
      %39 = vector.load %arg9[%c0_28, %c0_29] : memref<1024x1024xi8, #tpu.memory_space<vmem>>, vector<1024x1024xi8>
      %40 = arith.sitofp %39 : vector<1024x1024xi8> to vector<1024x1024xbf16>
      %cst_30 = arith.constant dense<0.000000e+00> : vector<16x1024xf32>
      %41 = tpu.matmul %38, %40, %cst_30 {dimension_numbers = #tpu.dot_dimension_numbers<[1], [0], [0], [1], [0, 0, 1, 1], [], []>} : vector<16x1024xbf16>, vector<1024x1024xbf16>, vector<16x1024xf32> -> vector<16x1024xf32>
      %c0_31 = arith.constant 0 : index
      %c0_32 = arith.constant 0 : index
      %42 = vector.load %arg10[%c0_31, %c0_32] : memref<1x1024xf32, #tpu.memory_space<vmem>>, vector<1x1024xf32>
      %43 = vector.broadcast %42 : vector<1x1024xf32> to vector<16x1024xf32>
      %44 = arith.mulf %41, %43 : vector<16x1024xf32>
      %c0_33 = arith.constant 0 : index
      %c0_34 = arith.constant 0 : index
      %45 = vector.load %arg11[%c0_33, %c0_34] : memref<1x1024xf32, #tpu.memory_space<vmem>>, vector<1x1024xf32>
      %46 = vector.broadcast %45 : vector<1x1024xf32> to vector<16x1024xf32>
      %47 = arith.addf %44, %46 : vector<16x1024xf32>
      %cst_35 = arith.constant 0.000000e+00 : f32
      %48 = vector.broadcast %cst_35 : f32 to vector<16x1024xf32>
      %49 = arith.maximumf %47, %48 : vector<16x1024xf32>
      %50 = arith.truncf %49 : vector<16x1024xf32> to vector<16x1024xbf16>
      %c0_36 = arith.constant 0 : index
      %c0_37 = arith.constant 0 : index
      %51 = vector.load %arg16[%c0_36, %c0_37] : memref<16x1024xbf16, #tpu.memory_space<vmem>>, vector<16x1024xbf16>
      tpu.vector_store %arg16[%c0_36, %c0_37], %50 {strides = array<i32>} : memref<16x1024xbf16, #tpu.memory_space<vmem>>, vector<16x1024xbf16>,
    } else {
    }
    %c0 = arith.constant 0 : index
    %c0_1 = arith.constant 0 : index
    %3 = vector.load %arg12[%c0, %c0_1] : memref<1024x128xi8, #tpu.memory_space<vmem>>, vector<1024x128xi8>
    %4 = arith.sitofp %3 : vector<1024x128xi8> to vector<1024x128xbf16>
    %c0_2 = arith.constant 0 : index
    %c0_3 = arith.constant 0 : index
    %5 = vector.load %arg16[%c0_2, %c0_3] : memref<16x1024xbf16, #tpu.memory_space<vmem>>, vector<16x1024xbf16>
    %cst = arith.constant dense<0.000000e+00> : vector<16x128xf32>
    %6 = tpu.matmul %5, %4, %cst {dimension_numbers = #tpu.dot_dimension_numbers<[1], [0], [0], [1], [0, 0, 1, 1], [], []>} : vector<16x1024xbf16>, vector<1024x128xbf16>, vector<16x128xf32> -> vector<16x128xf32>
    %c0_4 = arith.constant 0 : index
    %c0_5 = arith.constant 0 : index
    %7 = vector.load %arg13[%c0_4, %c0_5] : memref<1x128xf32, #tpu.memory_space<vmem>>, vector<1x128xf32>
    %8 = vector.broadcast %7 : vector<1x128xf32> to vector<16x128xf32>
    %9 = arith.mulf %6, %8 : vector<16x128xf32>
    %c0_6 = arith.constant 0 : index
    %c0_7 = arith.constant 0 : index
    %10 = vector.load %arg14[%c0_6, %c0_7] : memref<1x128xf32, #tpu.memory_space<vmem>>, vector<1x128xf32>
    %11 = vector.broadcast %10 : vector<1x128xf32> to vector<16x128xf32>
    %12 = arith.addf %9, %11 : vector<16x128xf32>
    %c0_8 = arith.constant 0 : index
    %c0_9 = arith.constant 0 : index
    %13 = vector.load %arg15[%c0_8, %c0_9] : memref<16x128xf32, #tpu.memory_space<vmem>>, vector<16x128xf32>
    tpu.vector_store %arg15[%c0_8, %c0_9], %12 {strides = array<i32>} : memref<16x128xf32, #tpu.memory_space<vmem>>, vector<16x128xf32>,
    return
  }
  func.func @transform_0(%arg0: i32, %arg1: i32) -> (i32, i32) {
    %c0_i32 = arith.constant 0 : i32
    %c0_i32_0 = arith.constant 0 : i32
    return %arg0, %c0_i32 : i32, i32
  }
  func.func @transform_1(%arg0: i32, %arg1: i32) -> (i32, i32) {
    %c0_i32 = arith.constant 0 : i32
    %c0_i32_0 = arith.constant 0 : i32
    %c0_i32_1 = arith.constant 0 : i32
    return %c0_i32, %c0_i32_0 : i32, i32
  }
  func.func @transform_2(%arg0: i32, %arg1: i32) -> (i32, i32) {
    %c0_i32 = arith.constant 0 : i32
    %c0_i32_0 = arith.constant 0 : i32
    %c0_i32_1 = arith.constant 0 : i32
    return %c0_i32, %c0_i32_0 : i32, i32
  }
  func.func @transform_3(%arg0: i32, %arg1: i32) -> (i32, i32) {
    %c0_i32 = arith.constant 0 : i32
    %c0_i32_0 = arith.constant 0 : i32
    %c0_i32_1 = arith.constant 0 : i32
    return %c0_i32, %c0_i32_0 : i32, i32
  }
  func.func @transform_4(%arg0: i32, %arg1: i32) -> (i32, i32) {
    %c0_i32 = arith.constant 0 : i32
    %c0_i32_0 = arith.constant 0 : i32
    %c0_i32_1 = arith.constant 0 : i32
    return %c0_i32, %c0_i32_0 : i32, i32
  }
  func.func @transform_5(%arg0: i32, %arg1: i32) -> (i32, i32) {
    %c0_i32 = arith.constant 0 : i32
    %c0_i32_0 = arith.constant 0 : i32
    %c0_i32_1 = arith.constant 0 : i32
    return %c0_i32, %c0_i32_0 : i32, i32
  }
  func.func @transform_6(%arg0: i32, %arg1: i32) -> (i32, i32) {
    %c0_i32 = arith.constant 0 : i32
    %c0_i32_0 = arith.constant 0 : i32
    %c0_i32_1 = arith.constant 0 : i32
    return %c0_i32, %c0_i32_0 : i32, i32
  }
  func.func @transform_7(%arg0: i32, %arg1: i32) -> (i32, i32) {
    %c0_i32 = arith.constant 0 : i32
    %c0_i32_0 = arith.constant 0 : i32
    %c0_i32_1 = arith.constant 0 : i32
    return %c0_i32, %c0_i32_0 : i32, i32
  }
  func.func @transform_8(%arg0: i32, %arg1: i32) -> (i32, i32) {
    %c0_i32 = arith.constant 0 : i32
    %c0_i32_0 = arith.constant 0 : i32
    %c0_i32_1 = arith.constant 0 : i32
    return %c0_i32, %c0_i32_0 : i32, i32
  }
  func.func @transform_9(%arg0: i32, %arg1: i32) -> (i32, i32) {
    %c0_i32 = arith.constant 0 : i32
    %c0_i32_0 = arith.constant 0 : i32
    %c0_i32_1 = arith.constant 0 : i32
    return %c0_i32, %c0_i32_0 : i32, i32
  }
  func.func @transform_10(%arg0: i32, %arg1: i32) -> (i32, i32) {
    %c0_i32 = arith.constant 0 : i32
    %c0_i32_0 = arith.constant 0 : i32
    return %c0_i32, %arg1 : i32, i32
  }
  func.func @transform_11(%arg0: i32, %arg1: i32) -> (i32, i32) {
    %c0_i32 = arith.constant 0 : i32
    %c0_i32_0 = arith.constant 0 : i32
    return %c0_i32, %arg1 : i32, i32
  }
  func.func @transform_12(%arg0: i32, %arg1: i32) -> (i32, i32) {
    %c0_i32 = arith.constant 0 : i32
    %c0_i32_0 = arith.constant 0 : i32
    return %c0_i32, %arg1 : i32, i32
  }
  func.func @transform_13(%arg0: i32, %arg1: i32) -> (i32, i32) {
    %c0_i32 = arith.constant 0 : i32
    return %arg0, %arg1 : i32, i32
  }
}

</mosaic_0001>

<llo_original>
// kernel: _lambda_.1
$region0: #{_lambda_.1}
  #allocation0 [shape = 'u32[]', space=smem, size = 0x4, offset = 0x4, fixed_abs, tag = 'smem constant byte address 0x4 - core index']
  #allocation1 [shape = 'u32[144,128]{1,0:T(1,128)}', space=vmem, size = 0x12000, scoped, tag = 'internal scratch']
  #allocation2 [shape = 'bf16[16,1024]{1,0:T(16,128)(2,1)}', space=vmem, size = 0x8000, scoped, tag = 'scratch operand']
  %s0 = inlined_call_operand.vmem [shape: bf16[32,512], index: 0, kind: input, shape index: {}]
  %s1 = inlined_call_operand.hbm [shape: s8[512,1024], index: 1, kind: input, shape index: {}]
  %s2 = inlined_call_operand.vmem [shape: f32[1,1024], index: 2, kind: input, shape index: {}]
  %s3 = inlined_call_operand.vmem [shape: f32[1,1024], index: 3, kind: input, shape index: {}]
  %s4 = inlined_call_operand.hbm [shape: s8[1024,1024], index: 4, kind: input, shape index: {}]
  %s5 = inlined_call_operand.vmem [shape: f32[1,1024], index: 5, kind: input, shape index: {}]
  %s6 = inlined_call_operand.vmem [shape: f32[1,1024], index: 6, kind: input, shape index: {}]
  %s7 = inlined_call_operand.hbm [shape: s8[1024,1024], index: 7, kind: input, shape index: {}]
  %s8 = inlined_call_operand.vmem [shape: f32[1,1024], index: 8, kind: input, shape index: {}]
  %s9 = inlined_call_operand.vmem [shape: f32[1,1024], index: 9, kind: input, shape index: {}]
  %s10 = inlined_call_operand.hbm [shape: s8[1024,256], index: 10, kind: input, shape index: {}]
  %s11 = inlined_call_operand.vmem [shape: f32[1,256], index: 11, kind: input, shape index: {}]
  %s12 = inlined_call_operand.vmem [shape: f32[1,256], index: 12, kind: input, shape index: {}]
  %s13 = inlined_call_operand.vmem [shape: f32[32,256], index: 13, kind: output, shape index: {}]
  %s14 = sld [smem:[#allocation0]]
  $region139: #{_lambda_.1} parent=0
    _
  %s16 = ssub.s32 1, %s14
  %s17 = scalar_select 0, %s16, %s14
  $region1: #{_lambda_.1} parent=0
    #allocation3 [shape = 'u8[524288]{0}', space=vmem, size = 0x80000, scoped, tag = 'input window, operand 1, single buffered']
    #allocation4 [shape = 's32[2]{0}', space=sflag, size = 0x8, scoped, tag = 'scoped memory for _lambda_.1']
    #allocation5 [shape = 'u8[1048576]{0}', space=vmem, size = 0x100000, scoped, tag = 'input window, operand 4, single buffered']
    #allocation6 [shape = 's32[1]{0}', space=sflag, size = 0x4, scoped, tag = 'scoped memory for _lambda_.1']
    #allocation7 [shape = 'u8[1048576]{0}', space=vmem, size = 0x100000, scoped, tag = 'input window, operand 7, single buffered']
    #allocation8 [shape = 'u8[262144]{0}', space=vmem, size = 0x40000, scoped, tag = 'input window, operand 10']
    #allocation9 [shape = 's32[2]{0}', space=sflag, size = 0x8, scoped, tag = 'scoped memory for _lambda_.1']
    #allocation10 [shape = 'u8[16384]{0}', space=vmem, size = 0x4000, scoped, tag = 'output window, operand 0']
    %18 = vsyncpa [#allocation4], 0
    %19 = vsyncpa [#allocation6], 0
    %20 = vsyncpa [#allocation9], 0
    %s21 = scalar_lea.sflag [#allocation9], 1
    %22 = vsyncpa %s21, 0
    loop: start=0, step=1, limit=6
    $region2: #{_lambda_.1} parent=1 // loop_pre_header
      _
    $region3: #{_lambda_.1} parent=1 // loop_header
      %s24 = sphi 0, %s28
      %p25 = scmp.ge.s32.totalorder %s24, 6
      %s31 = sphi 0, %s43
      %s32 = sphi 0, %s39
      %s33 = sphi 0, %s31
      %s34 = sphi 0, %s32
      %s35 = sphi 0, %s33
      %s36 = sphi 0, %s34
      %s46 = sphi 0, %s48
      %s49 = sphi 0, %s46
      %s50 = sphi 0, %s49
      %s66 = sphi 0, %s50
      %s70 = sphi 0, %s70
      %s72 = sphi 0, %s70
      %s73 = sphi 0, %s72
      %s87 = sphi 0, %s73
      %s91 = sphi 0, %s91
      %s93 = sphi 0, %s91
      %s94 = sphi 0, %s93
      %s108 = sphi 0, %s94
      %s112 = sphi 0, %s112
      %s114 = sphi 0, %s112
      %s115 = sphi 0, %s114
      %s129 = sphi 0, %s115
      %s133 = sphi 0, %s133
      %s135 = sphi 0, %s133
      %s136 = sphi 0, %s135
      %s150 = sphi 0, %s136
      %s154 = sphi 0, %s154
      %s156 = sphi 0, %s154
      %s157 = sphi 0, %s156
      %s171 = sphi 0, %s157
      %s175 = sphi 0, %s175
      %s177 = sphi 0, %s175
      %s178 = sphi 0, %s177
      %s192 = sphi 0, %s178
      %s196 = sphi 0, %s196
      %s198 = sphi 0, %s196
      %s199 = sphi 0, %s198
      %s213 = sphi 0, %s199
      %s217 = sphi 0, %s217
      %s219 = sphi 0, %s217
      %s220 = sphi 0, %s219
      %s234 = sphi 0, %s220
      %s238 = sphi 0, %s238
      %s240 = sphi 0, %s238
      %s241 = sphi 0, %s240
      %s255 = sphi 0, %s241
      %s261 = sphi 0, %s263
      %s264 = sphi 0, %s261
      %s265 = sphi 0, %s264
      %s281 = sphi 0, %s265
      %s287 = sphi 0, %s289
      %s290 = sphi 0, %s287
      %s291 = sphi 0, %s290
      %s307 = sphi 0, %s291
      %s313 = sphi 0, %s315
      %s316 = sphi 0, %s313
      %s317 = sphi 0, %s316
      %s333 = sphi 0, %s317
      %s341 = sphi 0, %s343
      %s344 = sphi 0, %s341
      %s345 = sphi 0, %s344
      %s361 = sphi 0, %s345
    $region4: #{_lambda_.1} parent=1 // loop_header_branch
      %27 = sbr.rel (%p25) target = $region8
    $region5: #{_lambda_.1} parent=1 // loop_body
      %s29 = ssub.s32 %s24, 1
      %s30 = ssub.s32 %s24, 2
      %s37 = sadd.s32 1, %s32
      %p38 = scmp.ge.s32.totalorder %s37, 2
      %s39 = scalar_select %p38, 0, %s37
      %s40 = sadd.s32 1, %s31
      %s41 = scalar_select %p38, %s40, %s31
      %p42 = scmp.ge.s32.totalorder %s41, 2
      %s43 = scalar_select %p42, 0, %s41
      %s44 = ssub.s32 %s31, %s43
      %p45 = scmp.eq.s32.totalorder %s44, 0
      %s47 = sadd.s32 %s46, 1
      %s48 = scalar_select %p45, %s46, %s47
      %p51 = pneg %p45
      %p52 = scmp.eq.s32.totalorder %s24, 3
      %p53 = por %p51, %p52
      %p54 = scmp.ne.s32.totalorder %s46, %s49
      %p55 = scmp.eq.s32.totalorder %s24, 0
      %p56 = por %p54, %p55
      %p57 = scmp.ne.s32.totalorder %s46, %s49
      %p58 = scmp.eq.s32.totalorder %s29, 3
      %p59 = por %p57, %p58
      %p60 = scmp.ne.s32.totalorder %s49, %s50
      %p61 = scmp.eq.s32.totalorder %s29, 0
      %p62 = por %p60, %p61
      %p63 = scmp.ne.s32.totalorder %s49, %s50
      %p64 = scmp.eq.s32.totalorder %s30, 3
      %p65 = por %p63, %p64
      %p67 = scmp.ne.s32.totalorder %s50, %s66
      %p68 = scmp.eq.s32.totalorder %s30, 0
      %p69 = por %p67, %p68
      %s71 = sadd.s32 %s70, 1
      %p74 = scmp.eq.s32.totalorder %s24, 3
      %p75 = scmp.ne.s32.totalorder %s70, %s72
      %p76 = scmp.eq.s32.totalorder %s24, 0
      %p77 = por %p75, %p76
      %p78 = scmp.ne.s32.totalorder %s70, %s72
      %p79 = scmp.eq.s32.totalorder %s29, 3
      %p80 = por %p78, %p79
      %p81 = scmp.ne.s32.totalorder %s72, %s73
      %p82 = scmp.eq.s32.totalorder %s29, 0
      %p83 = por %p81, %p82
      %p84 = scmp.ne.s32.totalorder %s72, %s73
      %p85 = scmp.eq.s32.totalorder %s30, 3
      %p86 = por %p84, %p85
      %p88 = scmp.ne.s32.totalorder %s73, %s87
      %p89 = scmp.eq.s32.totalorder %s30, 0
      %p90 = por %p88, %p89
      %s92 = sadd.s32 %s91, 1
      %p95 = scmp.eq.s32.totalorder %s24, 3
      %p96 = scmp.ne.s32.totalorder %s91, %s93
      %p97 = scmp.eq.s32.totalorder %s24, 0
      %p98 = por %p96, %p97
      %p99 = scmp.ne.s32.totalorder %s91, %s93
      %p100 = scmp.eq.s32.totalorder %s29, 3
      %p101 = por %p99, %p100
      %p102 = scmp.ne.s32.totalorder %s93, %s94
      %p103 = scmp.eq.s32.totalorder %s29, 0
      %p104 = por %p102, %p103
      %p105 = scmp.ne.s32.totalorder %s93, %s94
      %p106 = scmp.eq.s32.totalorder %s30, 3
      %p107 = por %p105, %p106
      %p109 = scmp.ne.s32.totalorder %s94, %s108
      %p110 = scmp.eq.s32.totalorder %s30, 0
      %p111 = por %p109, %p110
      %s113 = sadd.s32 %s112, 1
      %p116 = scmp.eq.s32.totalorder %s24, 3
      %p117 = scmp.ne.s32.totalorder %s112, %s114
      %p118 = scmp.eq.s32.totalorder %s24, 0
      %p119 = por %p117, %p118
      %p120 = scmp.ne.s32.totalorder %s112, %s114
      %p121 = scmp.eq.s32.totalorder %s29, 3
      %p122 = por %p120, %p121
      %p123 = scmp.ne.s32.totalorder %s114, %s115
      %p124 = scmp.eq.s32.totalorder %s29, 0
      %p125 = por %p123, %p124
      %p126 = scmp.ne.s32.totalorder %s114, %s115
      %p127 = scmp.eq.s32.totalorder %s30, 3
      %p128 = por %p126, %p127
      %p130 = scmp.ne.s32.totalorder %s115, %s129
      %p131 = scmp.eq.s32.totalorder %s30, 0
      %p132 = por %p130, %p131
      %s134 = sadd.s32 %s133, 1
      %p137 = scmp.eq.s32.totalorder %s24, 3
      %p138 = scmp.ne.s32.totalorder %s133, %s135
      %p139 = scmp.eq.s32.totalorder %s24, 0
      %p140 = por %p138, %p139
      %p141 = scmp.ne.s32.totalorder %s133, %s135
      %p142 = scmp.eq.s32.totalorder %s29, 3
      %p143 = por %p141, %p142
      %p144 = scmp.ne.s32.totalorder %s135, %s136
      %p145 = scmp.eq.s32.totalorder %s29, 0
      %p146 = por %p144, %p145
      %p147 = scmp.ne.s32.totalorder %s135, %s136
      %p148 = scmp.eq.s32.totalorder %s30, 3
      %p149 = por %p147, %p148
      %p151 = scmp.ne.s32.totalorder %s136, %s150
      %p152 = scmp.eq.s32.totalorder %s30, 0
      %p153 = por %p151, %p152
      %s155 = sadd.s32 %s154, 1
      %p158 = scmp.eq.s32.totalorder %s24, 3
      %p159 = scmp.ne.s32.totalorder %s154, %s156
      %p160 = scmp.eq.s32.totalorder %s24, 0
      %p161 = por %p159, %p160
      %p162 = scmp.ne.s32.totalorder %s154, %s156
      %p163 = scmp.eq.s32.totalorder %s29, 3
      %p164 = por %p162, %p163
      %p165 = scmp.ne.s32.totalorder %s156, %s157
      %p166 = scmp.eq.s32.totalorder %s29, 0
      %p167 = por %p165, %p166
      %p168 = scmp.ne.s32.totalorder %s156, %s157
      %p169 = scmp.eq.s32.totalorder %s30, 3
      %p170 = por %p168, %p169
      %p172 = scmp.ne.s32.totalorder %s157, %s171
      %p173 = scmp.eq.s32.totalorder %s30, 0
      %p174 = por %p172, %p173
      %s176 = sadd.s32 %s175, 1
      %p179 = scmp.eq.s32.totalorder %s24, 3
      %p180 = scmp.ne.s32.totalorder %s175, %s177
      %p181 = scmp.eq.s32.totalorder %s24, 0
      %p182 = por %p180, %p181
      %p183 = scmp.ne.s32.totalorder %s175, %s177
      %p184 = scmp.eq.s32.totalorder %s29, 3
      %p185 = por %p183, %p184
      %p186 = scmp.ne.s32.totalorder %s177, %s178
      %p187 = scmp.eq.s32.totalorder %s29, 0
      %p188 = por %p186, %p187
      %p189 = scmp.ne.s32.totalorder %s177, %s178
      %p190 = scmp.eq.s32.totalorder %s30, 3
      %p191 = por %p189, %p190
      %p193 = scmp.ne.s32.totalorder %s178, %s192
      %p194 = scmp.eq.s32.totalorder %s30, 0
      %p195 = por %p193, %p194
      %s197 = sadd.s32 %s196, 1
      %p200 = scmp.eq.s32.totalorder %s24, 3
      %p201 = scmp.ne.s32.totalorder %s196, %s198
      %p202 = scmp.eq.s32.totalorder %s24, 0
      %p203 = por %p201, %p202
      %p204 = scmp.ne.s32.totalorder %s196, %s198
      %p205 = scmp.eq.s32.totalorder %s29, 3
      %p206 = por %p204, %p205
      %p207 = scmp.ne.s32.totalorder %s198, %s199
      %p208 = scmp.eq.s32.totalorder %s29, 0
      %p209 = por %p207, %p208
      %p210 = scmp.ne.s32.totalorder %s198, %s199
      %p211 = scmp.eq.s32.totalorder %s30, 3
      %p212 = por %p210, %p211
      %p214 = scmp.ne.s32.totalorder %s199, %s213
      %p215 = scmp.eq.s32.totalorder %s30, 0
      %p216 = por %p214, %p215
      %s218 = sadd.s32 %s217, 1
      %p221 = scmp.eq.s32.totalorder %s24, 3
      %p222 = scmp.ne.s32.totalorder %s217, %s219
      %p223 = scmp.eq.s32.totalorder %s24, 0
      %p224 = por %p222, %p223
      %p225 = scmp.ne.s32.totalorder %s217, %s219
      %p226 = scmp.eq.s32.totalorder %s29, 3
      %p227 = por %p225, %p226
      %p228 = scmp.ne.s32.totalorder %s219, %s220
      %p229 = scmp.eq.s32.totalorder %s29, 0
      %p230 = por %p228, %p229
      %p231 = scmp.ne.s32.totalorder %s219, %s220
      %p232 = scmp.eq.s32.totalorder %s30, 3
      %p233 = por %p231, %p232
      %p235 = scmp.ne.s32.totalorder %s220, %s234
      %p236 = scmp.eq.s32.totalorder %s30, 0
      %p237 = por %p235, %p236
      %s239 = sadd.s32 %s238, 1
      %p242 = scmp.eq.s32.totalorder %s24, 3
      %p243 = scmp.ne.s32.totalorder %s238, %s240
      %p244 = scmp.eq.s32.totalorder %s24, 0
      %p245 = por %p243, %p244
      %p246 = scmp.ne.s32.totalorder %s238, %s240
      %p247 = scmp.eq.s32.totalorder %s29, 3
      %p248 = por %p246, %p247
      %p249 = scmp.ne.s32.totalorder %s240, %s241
      %p250 = scmp.eq.s32.totalorder %s29, 0
      %p251 = por %p249, %p250
      %p252 = scmp.ne.s32.totalorder %s240, %s241
      %p253 = scmp.eq.s32.totalorder %s30, 3
      %p254 = por %p252, %p253
      %p256 = scmp.ne.s32.totalorder %s241, %s255
      %p257 = scmp.eq.s32.totalorder %s30, 0
      %p258 = por %p256, %p257
      %s259 = ssub.s32 %s32, %s39
      %p260 = scmp.eq.s32.totalorder %s259, 0
      %s262 = sadd.s32 %s261, 1
      %s263 = scalar_select %p260, %s261, %s262
      %p266 = pneg %p260
      %p267 = scmp.eq.s32.totalorder %s24, 3
      %p268 = por %p266, %p267
      %p269 = scmp.ne.s32.totalorder %s261, %s264
      %p270 = scmp.eq.s32.totalorder %s24, 0
      %p271 = por %p269, %p270
      %p272 = scmp.ne.s32.totalorder %s261, %s264
      %p273 = scmp.eq.s32.totalorder %s29, 3
      %p274 = por %p272, %p273
      %p275 = scmp.ne.s32.totalorder %s264, %s265
      %p276 = scmp.eq.s32.totalorder %s29, 0
      %p277 = por %p275, %p276
      %p278 = scmp.ne.s32.totalorder %s264, %s265
      %p279 = scmp.eq.s32.totalorder %s30, 3
      %p280 = por %p278, %p279
      %p282 = scmp.ne.s32.totalorder %s265, %s281
      %p283 = scmp.eq.s32.totalorder %s30, 0
      %p284 = por %p282, %p283
      %s285 = ssub.s32 %s32, %s39
      %p286 = scmp.eq.s32.totalorder %s285, 0
      %s288 = sadd.s32 %s287, 1
      %s289 = scalar_select %p286, %s287, %s288
      %p292 = pneg %p286
      %p293 = scmp.eq.s32.totalorder %s24, 3
      %p294 = por %p292, %p293
      %p295 = scmp.ne.s32.totalorder %s287, %s290
      %p296 = scmp.eq.s32.totalorder %s24, 0
      %p297 = por %p295, %p296
      %p298 = scmp.ne.s32.totalorder %s287, %s290
      %p299 = scmp.eq.s32.totalorder %s29, 3
      %p300 = por %p298, %p299
      %p301 = scmp.ne.s32.totalorder %s290, %s291
      %p302 = scmp.eq.s32.totalorder %s29, 0
      %p303 = por %p301, %p302
      %p304 = scmp.ne.s32.totalorder %s290, %s291
      %p305 = scmp.eq.s32.totalorder %s30, 3
      %p306 = por %p304, %p305
      %p308 = scmp.ne.s32.totalorder %s291, %s307
      %p309 = scmp.eq.s32.totalorder %s30, 0
      %p310 = por %p308, %p309
      %s311 = ssub.s32 %s32, %s39
      %p312 = scmp.eq.s32.totalorder %s311, 0
      %s314 = sadd.s32 %s313, 1
      %s315 = scalar_select %p312, %s313, %s314
      %p318 = pneg %p312
      %p319 = scmp.eq.s32.totalorder %s24, 3
      %p320 = por %p318, %p319
      %p321 = scmp.ne.s32.totalorder %s313, %s316
      %p322 = scmp.eq.s32.totalorder %s24, 0
      %p323 = por %p321, %p322
      %p324 = scmp.ne.s32.totalorder %s313, %s316
      %p325 = scmp.eq.s32.totalorder %s29, 3
      %p326 = por %p324, %p325
      %p327 = scmp.ne.s32.totalorder %s316, %s317
      %p328 = scmp.eq.s32.totalorder %s29, 0
      %p329 = por %p327, %p328
      %p330 = scmp.ne.s32.totalorder %s316, %s317
      %p331 = scmp.eq.s32.totalorder %s30, 3
      %p332 = por %p330, %p331
      %p334 = scmp.ne.s32.totalorder %s317, %s333
      %p335 = scmp.eq.s32.totalorder %s30, 0
      %p336 = por %p334, %p335
      %s337 = ssub.s32 %s31, %s43
      %s338 = ssub.s32 %s32, %s39
      %s339 = sor.u32 %s337, %s338
      %p340 = scmp.eq.s32.totalorder %s339, 0
      %s342 = sadd.s32 %s341, 1
      %s343 = scalar_select %p340, %s341, %s342
      %p346 = pneg %p340
      %p347 = scmp.eq.s32.totalorder %s24, 3
      %p348 = por %p346, %p347
      %p349 = scmp.ne.s32.totalorder %s341, %s344
      %p350 = scmp.eq.s32.totalorder %s24, 0
      %p351 = por %p349, %p350
      %p352 = scmp.ne.s32.totalorder %s341, %s344
      %p353 = scmp.eq.s32.totalorder %s29, 3
      %p354 = por %p352, %p353
      %p355 = scmp.ne.s32.totalorder %s344, %s345
      %p356 = scmp.eq.s32.totalorder %s29, 0
      %p357 = por %p355, %p356
      %p358 = scmp.ne.s32.totalorder %s344, %s345
      %p359 = scmp.eq.s32.totalorder %s30, 3
      %p360 = por %p358, %p359
      %p362 = scmp.ne.s32.totalorder %s345, %s361
      %p363 = scmp.eq.s32.totalorder %s30, 0
      %p364 = por %p362, %p363
      %p365 = scmp.le.s32.totalorder 1, %s24
      %p366 = scmp.lt.s32.totalorder %s24, 5
      %p367 = pnand %p365, %p366
      %p368 = pneg %p367
      // Predicated region
      $region9: #{_lambda_.1} parent=5 // pred_check
        _
      $region10: #{_lambda_.1} parent=5 // pred_check_branch
        %370 = sbr.rel (%p367) target = $region12
      $region11: #{_lambda_.1} parent=5 // pred_region
        %s371 = ssub.s32 %s24, 1
        // Predicated region
        $region13: #{_lambda_.1} parent=11 // pred_check
          %p372 = pneg %p83
        $region14: #{_lambda_.1} parent=11 // pred_check_branch
          %374 = sbr.rel (%p372) target = $region16
        $region15: #{_lambda_.1} parent=11 // pred_region
          %s376 = ssub.s32 16384, 16384
          %377 = vsyncadd [#allocation4], %s376
          %s378 = sshll.u32 [#allocation3], 4
          %s379 = int_to_ptr.vmem [resolvable:$true] %s378
          %384 = dma.hbm_to_vmem [thread:$0]  %s1, 16384, %s379, [#allocation4], 1024, 1024, 64
        $region16: #{_lambda_.1} parent=11 // pred_fallthru
          _
        // Predicated region
        $region17: #{_lambda_.1} parent=11 // pred_check
          %p385 = pneg %p104
        $region18: #{_lambda_.1} parent=11 // pred_check_branch
          %387 = sbr.rel (%p385) target = $region20
        $region19: #{_lambda_.1} parent=11 // pred_region
          _
        $region20: #{_lambda_.1} parent=11 // pred_fallthru
          _
        // Predicated region
        $region21: #{_lambda_.1} parent=11 // pred_check
          %p388 = pneg %p125
        $region22: #{_lambda_.1} parent=11 // pred_check_branch
          %390 = sbr.rel (%p388) target = $region24
        $region23: #{_lambda_.1} parent=11 // pred_region
          _
        $region24: #{_lambda_.1} parent=11 // pred_fallthru
          _
        // Predicated region
        $region25: #{_lambda_.1} parent=11 // pred_check
          %p391 = pneg %p146
        $region26: #{_lambda_.1} parent=11 // pred_check_branch
          %393 = sbr.rel (%p391) target = $region28
        $region27: #{_lambda_.1} parent=11 // pred_region
          %s395 = ssub.s32 32768, 32768
          %396 = vsyncadd [#allocation6], %s395
          %s397 = sshll.u32 [#allocation5], 4
          %s398 = int_to_ptr.vmem [resolvable:$true] %s397
          %403 = dma.hbm_to_vmem [thread:$0]  %s4, 32768, %s398, [#allocation6], 1024, 1024, 64
        $region28: #{_lambda_.1} parent=11 // pred_fallthru
          _
        // Predicated region
        $region29: #{_lambda_.1} parent=11 // pred_check
          %p404 = pneg %p167
        $region30: #{_lambda_.1} parent=11 // pred_check_branch
          %406 = sbr.rel (%p404) target = $region32
        $region31: #{_lambda_.1} parent=11 // pred_region
          _
        $region32: #{_lambda_.1} parent=11 // pred_fallthru
          _
        // Predicated region
        $region33: #{_lambda_.1} parent=11 // pred_check
          %p407 = pneg %p188
        $region34: #{_lambda_.1} parent=11 // pred_check_branch
          %409 = sbr.rel (%p407) target = $region36
        $region35: #{_lambda_.1} parent=11 // pred_region
          _
        $region36: #{_lambda_.1} parent=11 // pred_fallthru
          _
        // Predicated region
        $region37: #{_lambda_.1} parent=11 // pred_check
          %p410 = pneg %p209
        $region38: #{_lambda_.1} parent=11 // pred_check_branch
          %412 = sbr.rel (%p410) target = $region40
        $region39: #{_lambda_.1} parent=11 // pred_region
          %s414 = ssub.s32 32768, 32768
          %415 = vsyncadd [#allocation6], %s414
          %s416 = sshll.u32 [#allocation7], 4
          %s417 = int_to_ptr.vmem [resolvable:$true] %s416
          %422 = dma.hbm_to_vmem [thread:$0]  %s7, 32768, %s417, [#allocation6], 1024, 1024, 64
        $region40: #{_lambda_.1} parent=11 // pred_fallthru
          _
        // Predicated region
        $region41: #{_lambda_.1} parent=11 // pred_check
          %p423 = pneg %p230
        $region42: #{_lambda_.1} parent=11 // pred_check_branch
          %425 = sbr.rel (%p423) target = $region44
        $region43: #{_lambda_.1} parent=11 // pred_region
          _
        $region44: #{_lambda_.1} parent=11 // pred_fallthru
          _
        // Predicated region
        $region45: #{_lambda_.1} parent=11 // pred_check
          %p426 = pneg %p251
        $region46: #{_lambda_.1} parent=11 // pred_check_branch
          %428 = sbr.rel (%p426) target = $region48
        $region47: #{_lambda_.1} parent=11 // pred_region
          _
        $region48: #{_lambda_.1} parent=11 // pred_fallthru
          _
      $region12: #{_lambda_.1} parent=5 // pred_fallthru
        _
      %p429 = scmp.lt.s32.totalorder %s24, 4
      // Predicated region
      $region49: #{_lambda_.1} parent=5 // pred_check
        %p430 = pneg %p429
      $region50: #{_lambda_.1} parent=5 // pred_check_branch
        %432 = sbr.rel (%p430) target = $region52
      $region51: #{_lambda_.1} parent=5 // pred_region
        // Predicated region
        $region53: #{_lambda_.1} parent=51 // pred_check
          %p433 = pneg %p56
        $region54: #{_lambda_.1} parent=51 // pred_check_branch
          %435 = sbr.rel (%p433) target = $region56
        $region55: #{_lambda_.1} parent=51 // pred_region
          %s436 = smul.u32 2, %s31
          %p437 = scmp.lt.s32.totalorder %s436, 3
          %s438 = scalar_select %p437, %s436, 3
          %s439 = smul.addr %s438, 4
          %s440 = smul.addr %s439, 4
          %s441 = scalar_lea.vmem %s0, %s440
          %s442 = smul.u32 2, %s31
        $region56: #{_lambda_.1} parent=51 // pred_fallthru
          _
        // Predicated region
        $region57: #{_lambda_.1} parent=51 // pred_check
          %p443 = pneg %p271
        $region58: #{_lambda_.1} parent=51 // pred_check_branch
          %445 = sbr.rel (%p443) target = $region60
        $region59: #{_lambda_.1} parent=51 // pred_region
          %s446 = sand.u32 %s261, 1
          %s447 = scalar_lea.sflag [#allocation9], %s446
          %s448 = sand.u32 %s261, 1
          %s449 = smul.addr %s448, 256
          %s450 = scalar_lea.vmem [#allocation8], %s449
          %s452 = ssub.s32 4096, 4096
          %453 = vsyncadd %s447, %s452
          %s454 = smul.addr %s32, 128
          %s455 = scalar_lea.hbm %s10, %s454
          %s456 = sshll.u32 %s450, 4
          %s457 = int_to_ptr.vmem [resolvable:$true] %s456
          %462 = dma.hbm_to_vmem [thread:$0]  %s455, 4096, %s457, %s447, 256, 128, 8
        $region60: #{_lambda_.1} parent=51 // pred_fallthru
          _
        // Predicated region
        $region61: #{_lambda_.1} parent=51 // pred_check
          %p463 = pneg %p297
        $region62: #{_lambda_.1} parent=51 // pred_check_branch
          %465 = sbr.rel (%p463) target = $region64
        $region63: #{_lambda_.1} parent=51 // pred_region
          %p466 = scmp.lt.s32.totalorder %s32, 1
          %s467 = scalar_select %p466, %s32, 1
          %s468 = scalar_lea.vmem %s11, %s467
        $region64: #{_lambda_.1} parent=51 // pred_fallthru
          _
        // Predicated region
        $region65: #{_lambda_.1} parent=51 // pred_check
          %p469 = pneg %p323
        $region66: #{_lambda_.1} parent=51 // pred_check_branch
          %471 = sbr.rel (%p469) target = $region68
        $region67: #{_lambda_.1} parent=51 // pred_region
          %p472 = scmp.lt.s32.totalorder %s32, 1
          %s473 = scalar_select %p472, %s32, 1
          %s474 = scalar_lea.vmem %s12, %s473
        $region68: #{_lambda_.1} parent=51 // pred_fallthru
          _
      $region52: #{_lambda_.1} parent=5 // pred_fallthru
        _
      %p475 = scmp.le.s32.totalorder 1, %s24
      %p476 = scmp.lt.s32.totalorder %s24, 5
      %p477 = pnand %p475, %p476
      %p478 = pneg %p477
      // Predicated region
      $region69: #{_lambda_.1} parent=5 // pred_check
        _
      $region70: #{_lambda_.1} parent=5 // pred_check_branch
        %480 = sbr.rel (%p477) target = $region72
      $region71: #{_lambda_.1} parent=5 // pred_region
        %s481 = ssub.s32 %s24, 1
        // Predicated region
        $region73: #{_lambda_.1} parent=71 // pred_check
          %p482 = pneg %p83
        $region74: #{_lambda_.1} parent=71 // pred_check_branch
          %484 = sbr.rel (%p482) target = $region76
        $region75: #{_lambda_.1} parent=71 // pred_region
          %485 = dma.done [#allocation4], 16384
        $region76: #{_lambda_.1} parent=71 // pred_fallthru
          _
        // Predicated region
        $region77: #{_lambda_.1} parent=71 // pred_check
          %p486 = pneg %p146
        $region78: #{_lambda_.1} parent=71 // pred_check_branch
          %488 = sbr.rel (%p486) target = $region80
        $region79: #{_lambda_.1} parent=71 // pred_region
          %489 = dma.done [#allocation6], 32768
        $region80: #{_lambda_.1} parent=71 // pred_fallthru
          _
        // Predicated region
        $region81: #{_lambda_.1} parent=71 // pred_check
          %p490 = pneg %p209
        $region82: #{_lambda_.1} parent=71 // pred_check_branch
          %492 = sbr.rel (%p490) target = $region84
        $region83: #{_lambda_.1} parent=71 // pred_region
          %493 = dma.done [#allocation6], 32768
        $region84: #{_lambda_.1} parent=71 // pred_fallthru
          _
        %s494 = sand.u32 %s264, 1
        %s495 = scalar_lea.sflag [#allocation9], %s494
        %s496 = sand.u32 %s264, 1
        %s497 = smul.addr %s496, 256
        %s498 = scalar_lea.vmem [#allocation8], %s497
        // Predicated region
        $region85: #{_lambda_.1} parent=71 // pred_check
          %p499 = pneg %p277
        $region86: #{_lambda_.1} parent=71 // pred_check_branch
          %501 = sbr.rel (%p499) target = $region88
        $region87: #{_lambda_.1} parent=71 // pred_region
          %502 = dma.done %s495, 4096
        $region88: #{_lambda_.1} parent=71 // pred_fallthru
          _
        %s503 = smul.u32 2, %s33
        %p504 = scmp.lt.s32.totalorder %s503, 3
        %s505 = scalar_select %p504, %s503, 3
        %s506 = smul.addr %s505, 4
        %s507 = smul.addr %s506, 4
        %s508 = scalar_lea.vmem %s0, %s507
        %p509 = pneg %p62
        %p510 = pneg %p59
        %p511 = pneg %p83
        %p512 = pneg %p80
        %p513 = pneg %p104
        %p514 = pneg %p101
        %p515 = pneg %p125
        %p516 = pneg %p122
        %p517 = pneg %p146
        %p518 = pneg %p143
        %p519 = pneg %p167
        %p520 = pneg %p164
        %p521 = pneg %p188
        %p522 = pneg %p185
        %p523 = pneg %p209
        %p524 = pneg %p206
        %p525 = pneg %p230
        %p526 = pneg %p227
        %p527 = pneg %p251
        %p528 = pneg %p248
        %s529 = sand.u32 %s264, 1
        %s530 = scalar_lea.sflag [#allocation9], %s529
        %s531 = sand.u32 %s264, 1
        %s532 = smul.addr %s531, 256
        %s533 = scalar_lea.vmem [#allocation8], %s532
        %p534 = pneg %p277
        %p535 = pneg %p274
        %p536 = scmp.lt.s32.totalorder %s34, 1
        %s537 = scalar_select %p536, %s34, 1
        %s538 = scalar_lea.vmem %s11, %s537
        %p539 = pneg %p303
        %p540 = pneg %p300
        %p541 = scmp.lt.s32.totalorder %s34, 1
        %s542 = scalar_select %p541, %s34, 1
        %s543 = scalar_lea.vmem %s12, %s542
        %p544 = pneg %p329
        %p545 = pneg %p326
        %p546 = pneg %p357
        %p547 = pneg %p354
        %s548 = sand.u32 %s344, 1
        %s549 = sand.u32 %s344, 1
        %s550 = smul.addr %s549, 16
        %s551 = scalar_lea.vmem [#allocation10], %s550
        %s552 = smul.u32 2, %s33
        %p553 = scmp.lt.s32.totalorder %s552, 3
        %s554 = scalar_select %p553, %s552, 3
        %s555 = smul.addr %s554, 4
        %s556 = smul.addr %s555, 4
        %s557 = scalar_lea.vmem %s0, %s556
        %s558 = smul.u32 2, %s33
        %p559 = scmp.lt.s32.totalorder %s34, 1
        %s560 = scalar_select %p559, %s34, 1
        %s561 = scalar_lea.vmem %s11, %s560
        %p562 = scmp.lt.s32.totalorder %s34, 1
        %s563 = scalar_select %p562, %s34, 1
        %s564 = scalar_lea.vmem %s12, %s563
        %s565 = smul.u32 2, %s33
        %p567 = scmp.eq.s32.totalorder %s34, 0
        // Predicated region
        $region89: #{_lambda_.1} parent=71 // pred_check
          %p568 = pneg %p567
        $region90: #{_lambda_.1} parent=71 // pred_check_branch
          %570 = sbr.rel (%p568) target = $region92
        $region91: #{_lambda_.1} parent=71 // pred_region
          %v571 = vld [vmem:[%s557] sm:$0xff]
          %v572 = vld [vmem:[%s557 + $0x8] sm:$0xff]
          %v573 = vld [vmem:[%s557 + $0x10] sm:$0xff]
          %v574 = vld [vmem:[%s557 + $0x18] sm:$0xff]
          %v575 = vld [vmem:[#allocation3] sm:$0xff]
          %v576 = vld [vmem:[#allocation3 + $0x8] sm:$0xff]
          %v577 = vld [vmem:[#allocation3 + $0x10] sm:$0xff]
          %v578 = vld [vmem:[#allocation3 + $0x18] sm:$0xff]
          %v579 = vld [vmem:[#allocation3 + $0x20] sm:$0xff]
          %v580 = vld [vmem:[#allocation3 + $0x28] sm:$0xff]
          %v581 = vld [vmem:[#allocation3 + $0x30] sm:$0xff]
          %v582 = vld [vmem:[#allocation3 + $0x38] sm:$0xff]
          %v583 = vld [vmem:[#allocation3 + $0x40] sm:$0xff]
          %v584 = vld [vmem:[#allocation3 + $0x48] sm:$0xff]
          %v585 = vld [vmem:[#allocation3 + $0x50] sm:$0xff]
          %v586 = vld [vmem:[#allocation3 + $0x58] sm:$0xff]
          %v587 = vld [vmem:[#allocation3 + $0x60] sm:$0xff]
          %v588 = vld [vmem:[#allocation3 + $0x68] sm:$0xff]
          %v589 = vld [vmem:[#allocation3 + $0x70] sm:$0xff]
          %v590 = vld [vmem:[#allocation3 + $0x78] sm:$0xff]
          %v591 = vld [vmem:[#allocation3 + $0x80] sm:$0xff]
          %v592 = vld [vmem:[#allocation3 + $0x88] sm:$0xff]
          %v593 = vld [vmem:[#allocation3 + $0x90] sm:$0xff]
          %v594 = vld [vmem:[#allocation3 + $0x98] sm:$0xff]
          %v595 = vld [vmem:[#allocation3 + $0xa0] sm:$0xff]
          %v596 = vld [vmem:[#allocation3 + $0xa8] sm:$0xff]
          %v597 = vld [vmem:[#allocation3 + $0xb0] sm:$0xff]
          %v598 = vld [vmem:[#allocation3 + $0xb8] sm:$0xff]
          %v599 = vld [vmem:[#allocation3 + $0xc0] sm:$0xff]
          %v600 = vld [vmem:[#allocation3 + $0xc8] sm:$0xff]
          %v601 = vld [vmem:[#allocation3 + $0xd0] sm:$0xff]
          %v602 = vld [vmem:[#allocation3 + $0xd8] sm:$0xff]
          %v603 = vld [vmem:[#allocation3 + $0xe0] sm:$0xff]
          %v604 = vld [vmem:[#allocation3 + $0xe8] sm:$0xff]
          %v605 = vld [vmem:[#allocation3 + $0xf0] sm:$0xff]
          %v606 = vld [vmem:[#allocation3 + $0xf8] sm:$0xff]
          %v607 = vld [vmem:[#allocation3 + $0x100] sm:$0xff]
          %v608 = vld [vmem:[#allocation3 + $0x108] sm:$0xff]
          %v609 = vld [vmem:[#allocation3 + $0x110] sm:$0xff]
          %v610 = vld [vmem:[#allocation3 + $0x118] sm:$0xff]
          %v611 = vld [vmem:[#allocation3 + $0x120] sm:$0xff]
          %v612 = vld [vmem:[#allocation3 + $0x128] sm:$0xff]
          %v613 = vld [vmem:[#allocation3 + $0x130] sm:$0xff]
          %v614 = vld [vmem:[#allocation3 + $0x138] sm:$0xff]
          %v615 = vld [vmem:[#allocation3 + $0x140] sm:$0xff]
          %v616 = vld [vmem:[#allocation3 + $0x148] sm:$0xff]
          %v617 = vld [vmem:[#allocation3 + $0x150] sm:$0xff]
          %v618 = vld [vmem:[#allocation3 + $0x158] sm:$0xff]
          %v619 = vld [vmem:[#allocation3 + $0x160] sm:$0xff]
          %v620 = vld [vmem:[#allocation3 + $0x168] sm:$0xff]
          %v621 = vld [vmem:[#allocation3 + $0x170] sm:$0xff]
          %v622 = vld [vmem:[#allocation3 + $0x178] sm:$0xff]
          %v623 = vld [vmem:[#allocation3 + $0x180] sm:$0xff]
          %v624 = vld [vmem:[#allocation3 + $0x188] sm:$0xff]
          %v625 = vld [vmem:[#allocation3 + $0x190] sm:$0xff]
          %v626 = vld [vmem:[#allocation3 + $0x198] sm:$0xff]
          %v627 = vld [vmem:[#allocation3 + $0x1a0] sm:$0xff]
          %v628 = vld [vmem:[#allocation3 + $0x1a8] sm:$0xff]
          %v629 = vld [vmem:[#allocation3 + $0x1b0] sm:$0xff]
          %v630 = vld [vmem:[#allocation3 + $0x1b8] sm:$0xff]
          %v631 = vld [vmem:[#allocation3 + $0x1c0] sm:$0xff]
          %v632 = vld [vmem:[#allocation3 + $0x1c8] sm:$0xff]
          %v633 = vld [vmem:[#allocation3 + $0x1d0] sm:$0xff]
          %v634 = vld [vmem:[#allocation3 + $0x1d8] sm:$0xff]
          %v635 = vld [vmem:[#allocation3 + $0x1e0] sm:$0xff]
          %v636 = vld [vmem:[#allocation3 + $0x1e8] sm:$0xff]
          %v637 = vld [vmem:[#allocation3 + $0x1f0] sm:$0xff]
          %v638 = vld [vmem:[#allocation3 + $0x1f8] sm:$0xff]
          %v639 = vld [vmem:[#allocation3 + $0x200] sm:$0xff]
          %v640 = vld [vmem:[#allocation3 + $0x208] sm:$0xff]
          %v641 = vld [vmem:[#allocation3 + $0x210] sm:$0xff]
          %v642 = vld [vmem:[#allocation3 + $0x218] sm:$0xff]
          %v643 = vld [vmem:[#allocation3 + $0x220] sm:$0xff]
          %v644 = vld [vmem:[#allocation3 + $0x228] sm:$0xff]
          %v645 = vld [vmem:[#allocation3 + $0x230] sm:$0xff]
          %v646 = vld [vmem:[#allocation3 + $0x238] sm:$0xff]
          %v647 = vld [vmem:[#allocation3 + $0x240] sm:$0xff]
          %v648 = vld [vmem:[#allocation3 + $0x248] sm:$0xff]
          %v649 = vld [vmem:[#allocation3 + $0x250] sm:$0xff]
          %v650 = vld [vmem:[#allocation3 + $0x258] sm:$0xff]
          %v651 = vld [vmem:[#allocation3 + $0x260] sm:$0xff]
          %v652 = vld [vmem:[#allocation3 + $0x268] sm:$0xff]
          %v653 = vld [vmem:[#allocation3 + $0x270] sm:$0xff]
          %v654 = vld [vmem:[#allocation3 + $0x278] sm:$0xff]
          %v655 = vld [vmem:[#allocation3 + $0x280] sm:$0xff]
          %v656 = vld [vmem:[#allocation3 + $0x288] sm:$0xff]
          %v657 = vld [vmem:[#allocation3 + $0x290] sm:$0xff]
          %v658 = vld [vmem:[#allocation3 + $0x298] sm:$0xff]
          %v659 = vld [vmem:[#allocation3 + $0x2a0] sm:$0xff]
          %v660 = vld [vmem:[#allocation3 + $0x2a8] sm:$0xff]
          %v661 = vld [vmem:[#allocation3 + $0x2b0] sm:$0xff]
          %v662 = vld [vmem:[#allocation3 + $0x2b8] sm:$0xff]
          %v663 = vld [vmem:[#allocation3 + $0x2c0] sm:$0xff]
          %v664 = vld [vmem:[#allocation3 + $0x2c8] sm:$0xff]
          %v665 = vld [vmem:[#allocation3 + $0x2d0] sm:$0xff]
          %v666 = vld [vmem:[#allocation3 + $0x2d8] sm:$0xff]
          %v667 = vld [vmem:[#allocation3 + $0x2e0] sm:$0xff]
          %v668 = vld [vmem:[#allocation3 + $0x2e8] sm:$0xff]
          %v669 = vld [vmem:[#allocation3 + $0x2f0] sm:$0xff]
          %v670 = vld [vmem:[#allocation3 + $0x2f8] sm:$0xff]
          %v671 = vld [vmem:[#allocation3 + $0x300] sm:$0xff]
          %v672 = vld [vmem:[#allocation3 + $0x308] sm:$0xff]
          %v673 = vld [vmem:[#allocation3 + $0x310] sm:$0xff]
          %v674 = vld [vmem:[#allocation3 + $0x318] sm:$0xff]
          %v675 = vld [vmem:[#allocation3 + $0x320] sm:$0xff]
          %v676 = vld [vmem:[#allocation3 + $0x328] sm:$0xff]
          %v677 = vld [vmem:[#allocation3 + $0x330] sm:$0xff]
          %v678 = vld [vmem:[#allocation3 + $0x338] sm:$0xff]
          %v679 = vld [vmem:[#allocation3 + $0x340] sm:$0xff]
          %v680 = vld [vmem:[#allocation3 + $0x348] sm:$0xff]
          %v681 = vld [vmem:[#allocation3 + $0x350] sm:$0xff]
          %v682 = vld [vmem:[#allocation3 + $0x358] sm:$0xff]
          %v683 = vld [vmem:[#allocation3 + $0x360] sm:$0xff]
          %v684 = vld [vmem:[#allocation3 + $0x368] sm:$0xff]
          %v685 = vld [vmem:[#allocation3 + $0x370] sm:$0xff]
          %v686 = vld [vmem:[#allocation3 + $0x378] sm:$0xff]
          %v687 = vld [vmem:[#allocation3 + $0x380] sm:$0xff]
          %v688 = vld [vmem:[#allocation3 + $0x388] sm:$0xff]
          %v689 = vld [vmem:[#allocation3 + $0x390] sm:$0xff]
          %v690 = vld [vmem:[#allocation3 + $0x398] sm:$0xff]
          %v691 = vld [vmem:[#allocation3 + $0x3a0] sm:$0xff]
          %v692 = vld [vmem:[#allocation3 + $0x3a8] sm:$0xff]
          %v693 = vld [vmem:[#allocation3 + $0x3b0] sm:$0xff]
          %v694 = vld [vmem:[#allocation3 + $0x3b8] sm:$0xff]
          %v695 = vld [vmem:[#allocation3 + $0x3c0] sm:$0xff]
          %v696 = vld [vmem:[#allocation3 + $0x3c8] sm:$0xff]
          %v697 = vld [vmem:[#allocation3 + $0x3d0] sm:$0xff]
          %v698 = vld [vmem:[#allocation3 + $0x3d8] sm:$0xff]
          %v699 = vld [vmem:[#allocation3 + $0x3e0] sm:$0xff]
          %v700 = vld [vmem:[#allocation3 + $0x3e8] sm:$0xff]
          %v701 = vld [vmem:[#allocation3 + $0x3f0] sm:$0xff]
          %v702 = vld [vmem:[#allocation3 + $0x3f8] sm:$0xff]
          %v703 = vunpack.c.l.s8.bf16 %v575
          %v704 = vunpack.c.l.s8.bf16 %v576
          %v705 = vunpack.c.l.s8.bf16 %v577
          %v706 = vunpack.c.l.s8.bf16 %v578
          %v707 = vunpack.c.l.s8.bf16 %v579
          %v708 = vunpack.c.l.s8.bf16 %v580
          %v709 = vunpack.c.l.s8.bf16 %v581
          %v710 = vunpack.c.l.s8.bf16 %v582
          %v711 = vunpack.c.h.s8.bf16 %v575
          %v712 = vunpack.c.h.s8.bf16 %v576
          %v713 = vunpack.c.h.s8.bf16 %v577
          %v714 = vunpack.c.h.s8.bf16 %v578
          %v715 = vunpack.c.h.s8.bf16 %v579
          %v716 = vunpack.c.h.s8.bf16 %v580
          %v717 = vunpack.c.h.s8.bf16 %v581
          %v718 = vunpack.c.h.s8.bf16 %v582
          %v719 = vunpack.c.l.s8.bf16 %v583
          %v720 = vunpack.c.l.s8.bf16 %v584
          %v721 = vunpack.c.l.s8.bf16 %v585
          %v722 = vunpack.c.l.s8.bf16 %v586
          %v723 = vunpack.c.l.s8.bf16 %v587
          %v724 = vunpack.c.l.s8.bf16 %v588
          %v725 = vunpack.c.l.s8.bf16 %v589
          %v726 = vunpack.c.l.s8.bf16 %v590
          %v727 = vunpack.c.h.s8.bf16 %v583
          %v728 = vunpack.c.h.s8.bf16 %v584
          %v729 = vunpack.c.h.s8.bf16 %v585
          %v730 = vunpack.c.h.s8.bf16 %v586
          %v731 = vunpack.c.h.s8.bf16 %v587
          %v732 = vunpack.c.h.s8.bf16 %v588
          %v733 = vunpack.c.h.s8.bf16 %v589
          %v734 = vunpack.c.h.s8.bf16 %v590
          %v735 = vunpack.c.l.s8.bf16 %v591
          %v736 = vunpack.c.l.s8.bf16 %v592
          %v737 = vunpack.c.l.s8.bf16 %v593
          %v738 = vunpack.c.l.s8.bf16 %v594
          %v739 = vunpack.c.l.s8.bf16 %v595
          %v740 = vunpack.c.l.s8.bf16 %v596
          %v741 = vunpack.c.l.s8.bf16 %v597
          %v742 = vunpack.c.l.s8.bf16 %v598
          %v743 = vunpack.c.h.s8.bf16 %v591
          %v744 = vunpack.c.h.s8.bf16 %v592
          %v745 = vunpack.c.h.s8.bf16 %v593
          %v746 = vunpack.c.h.s8.bf16 %v594
          %v747 = vunpack.c.h.s8.bf16 %v595
          %v748 = vunpack.c.h.s8.bf16 %v596
          %v749 = vunpack.c.h.s8.bf16 %v597
          %v750 = vunpack.c.h.s8.bf16 %v598
          %v751 = vunpack.c.l.s8.bf16 %v599
          %v752 = vunpack.c.l.s8.bf16 %v600
          %v753 = vunpack.c.l.s8.bf16 %v601
          %v754 = vunpack.c.l.s8.bf16 %v602
          %v755 = vunpack.c.l.s8.bf16 %v603
          %v756 = vunpack.c.l.s8.bf16 %v604
          %v757 = vunpack.c.l.s8.bf16 %v605
          %v758 = vunpack.c.l.s8.bf16 %v606
          %v759 = vunpack.c.h.s8.bf16 %v599
          %v760 = vunpack.c.h.s8.bf16 %v600
          %v761 = vunpack.c.h.s8.bf16 %v601
          %v762 = vunpack.c.h.s8.bf16 %v602
          %v763 = vunpack.c.h.s8.bf16 %v603
          %v764 = vunpack.c.h.s8.bf16 %v604
          %v765 = vunpack.c.h.s8.bf16 %v605
          %v766 = vunpack.c.h.s8.bf16 %v606
          %v767 = vunpack.c.l.s8.bf16 %v607
          %v768 = vunpack.c.l.s8.bf16 %v608
          %v769 = vunpack.c.l.s8.bf16 %v609
          %v770 = vunpack.c.l.s8.bf16 %v610
          %v771 = vunpack.c.l.s8.bf16 %v611
          %v772 = vunpack.c.l.s8.bf16 %v612
          %v773 = vunpack.c.l.s8.bf16 %v613
          %v774 = vunpack.c.l.s8.bf16 %v614
          %v775 = vunpack.c.h.s8.bf16 %v607
          %v776 = vunpack.c.h.s8.bf16 %v608
          %v777 = vunpack.c.h.s8.bf16 %v609
          %v778 = vunpack.c.h.s8.bf16 %v610
          %v779 = vunpack.c.h.s8.bf16 %v611
          %v780 = vunpack.c.h.s8.bf16 %v612
          %v781 = vunpack.c.h.s8.bf16 %v613
          %v782 = vunpack.c.h.s8.bf16 %v614
          %v783 = vunpack.c.l.s8.bf16 %v615
          %v784 = vunpack.c.l.s8.bf16 %v616
          %v785 = vunpack.c.l.s8.bf16 %v617
          %v786 = vunpack.c.l.s8.bf16 %v618
          %v787 = vunpack.c.l.s8.bf16 %v619
          %v788 = vunpack.c.l.s8.bf16 %v620
          %v789 = vunpack.c.l.s8.bf16 %v621
          %v790 = vunpack.c.l.s8.bf16 %v622
          %v791 = vunpack.c.h.s8.bf16 %v615
          %v792 = vunpack.c.h.s8.bf16 %v616
          %v793 = vunpack.c.h.s8.bf16 %v617
          %v794 = vunpack.c.h.s8.bf16 %v618
          %v795 = vunpack.c.h.s8.bf16 %v619
          %v796 = vunpack.c.h.s8.bf16 %v620
          %v797 = vunpack.c.h.s8.bf16 %v621
          %v798 = vunpack.c.h.s8.bf16 %v622
          %v799 = vunpack.c.l.s8.bf16 %v623
          %v800 = vunpack.c.l.s8.bf16 %v624
          %v801 = vunpack.c.l.s8.bf16 %v625
          %v802 = vunpack.c.l.s8.bf16 %v626
          %v803 = vunpack.c.l.s8.bf16 %v627
          %v804 = vunpack.c.l.s8.bf16 %v628
          %v805 = vunpack.c.l.s8.bf16 %v629
          %v806 = vunpack.c.l.s8.bf16 %v630
          %v807 = vunpack.c.h.s8.bf16 %v623
          %v808 = vunpack.c.h.s8.bf16 %v624
          %v809 = vunpack.c.h.s8.bf16 %v625
          %v810 = vunpack.c.h.s8.bf16 %v626
          %v811 = vunpack.c.h.s8.bf16 %v627
          %v812 = vunpack.c.h.s8.bf16 %v628
          %v813 = vunpack.c.h.s8.bf16 %v629
          %v814 = vunpack.c.h.s8.bf16 %v630
          %v815 = vunpack.c.l.s8.bf16 %v631
          %v816 = vunpack.c.l.s8.bf16 %v632
          %v817 = vunpack.c.l.s8.bf16 %v633
          %v818 = vunpack.c.l.s8.bf16 %v634
          %v819 = vunpack.c.l.s8.bf16 %v635
          %v820 = vunpack.c.l.s8.bf16 %v636
          %v821 = vunpack.c.l.s8.bf16 %v637
          %v822 = vunpack.c.l.s8.bf16 %v638
          %v823 = vunpack.c.h.s8.bf16 %v631
          %v824 = vunpack.c.h.s8.bf16 %v632
          %v825 = vunpack.c.h.s8.bf16 %v633
          %v826 = vunpack.c.h.s8.bf16 %v634
          %v827 = vunpack.c.h.s8.bf16 %v635
          %v828 = vunpack.c.h.s8.bf16 %v636
          %v829 = vunpack.c.h.s8.bf16 %v637
          %v830 = vunpack.c.h.s8.bf16 %v638
          %v831 = vunpack.c.l.s8.bf16 %v639
          %v832 = vunpack.c.l.s8.bf16 %v640
          %v833 = vunpack.c.l.s8.bf16 %v641
          %v834 = vunpack.c.l.s8.bf16 %v642
          %v835 = vunpack.c.l.s8.bf16 %v643
          %v836 = vunpack.c.l.s8.bf16 %v644
          %v837 = vunpack.c.l.s8.bf16 %v645
          %v838 = vunpack.c.l.s8.bf16 %v646
          %v839 = vunpack.c.h.s8.bf16 %v639
          %v840 = vunpack.c.h.s8.bf16 %v640
          %v841 = vunpack.c.h.s8.bf16 %v641
          %v842 = vunpack.c.h.s8.bf16 %v642
          %v843 = vunpack.c.h.s8.bf16 %v643
          %v844 = vunpack.c.h.s8.bf16 %v644
          %v845 = vunpack.c.h.s8.bf16 %v645
          %v846 = vunpack.c.h.s8.bf16 %v646
          %v847 = vunpack.c.l.s8.bf16 %v647
          %v848 = vunpack.c.l.s8.bf16 %v648
          %v849 = vunpack.c.l.s8.bf16 %v649
          %v850 = vunpack.c.l.s8.bf16 %v650
          %v851 = vunpack.c.l.s8.bf16 %v651
          %v852 = vunpack.c.l.s8.bf16 %v652
          %v853 = vunpack.c.l.s8.bf16 %v653
          %v854 = vunpack.c.l.s8.bf16 %v654
          %v855 = vunpack.c.h.s8.bf16 %v647
          %v856 = vunpack.c.h.s8.bf16 %v648
          %v857 = vunpack.c.h.s8.bf16 %v649
          %v858 = vunpack.c.h.s8.bf16 %v650
          %v859 = vunpack.c.h.s8.bf16 %v651
          %v860 = vunpack.c.h.s8.bf16 %v652
          %v861 = vunpack.c.h.s8.bf16 %v653
          %v862 = vunpack.c.h.s8.bf16 %v654
          %v863 = vunpack.c.l.s8.bf16 %v655
          %v864 = vunpack.c.l.s8.bf16 %v656
          %v865 = vunpack.c.l.s8.bf16 %v657
          %v866 = vunpack.c.l.s8.bf16 %v658
          %v867 = vunpack.c.l.s8.bf16 %v659
          %v868 = vunpack.c.l.s8.bf16 %v660
          %v869 = vunpack.c.l.s8.bf16 %v661
          %v870 = vunpack.c.l.s8.bf16 %v662
          %v871 = vunpack.c.h.s8.bf16 %v655
          %v872 = vunpack.c.h.s8.bf16 %v656
          %v873 = vunpack.c.h.s8.bf16 %v657
          %v874 = vunpack.c.h.s8.bf16 %v658
          %v875 = vunpack.c.h.s8.bf16 %v659
          %v876 = vunpack.c.h.s8.bf16 %v660
          %v877 = vunpack.c.h.s8.bf16 %v661
          %v878 = vunpack.c.h.s8.bf16 %v662
          %v879 = vunpack.c.l.s8.bf16 %v663
          %v880 = vunpack.c.l.s8.bf16 %v664
          %v881 = vunpack.c.l.s8.bf16 %v665
          %v882 = vunpack.c.l.s8.bf16 %v666
          %v883 = vunpack.c.l.s8.bf16 %v667
          %v884 = vunpack.c.l.s8.bf16 %v668
          %v885 = vunpack.c.l.s8.bf16 %v669
          %v886 = vunpack.c.l.s8.bf16 %v670
          %v887 = vunpack.c.h.s8.bf16 %v663
          %v888 = vunpack.c.h.s8.bf16 %v664
          %v889 = vunpack.c.h.s8.bf16 %v665
          %v890 = vunpack.c.h.s8.bf16 %v666
          %v891 = vunpack.c.h.s8.bf16 %v667
          %v892 = vunpack.c.h.s8.bf16 %v668
          %v893 = vunpack.c.h.s8.bf16 %v669
          %v894 = vunpack.c.h.s8.bf16 %v670
          %v895 = vunpack.c.l.s8.bf16 %v671
          %v896 = vunpack.c.l.s8.bf16 %v672
          %v897 = vunpack.c.l.s8.bf16 %v673
          %v898 = vunpack.c.l.s8.bf16 %v674
          %v899 = vunpack.c.l.s8.bf16 %v675
          %v900 = vunpack.c.l.s8.bf16 %v676
          %v901 = vunpack.c.l.s8.bf16 %v677
          %v902 = vunpack.c.l.s8.bf16 %v678
          %v903 = vunpack.c.h.s8.bf16 %v671
          %v904 = vunpack.c.h.s8.bf16 %v672
          %v905 = vunpack.c.h.s8.bf16 %v673
          %v906 = vunpack.c.h.s8.bf16 %v674
          %v907 = vunpack.c.h.s8.bf16 %v675
          %v908 = vunpack.c.h.s8.bf16 %v676
          %v909 = vunpack.c.h.s8.bf16 %v677
          %v910 = vunpack.c.h.s8.bf16 %v678
          %v911 = vunpack.c.l.s8.bf16 %v679
          %v912 = vunpack.c.l.s8.bf16 %v680
          %v913 = vunpack.c.l.s8.bf16 %v681
          %v914 = vunpack.c.l.s8.bf16 %v682
          %v915 = vunpack.c.l.s8.bf16 %v683
          %v916 = vunpack.c.l.s8.bf16 %v684
          %v917 = vunpack.c.l.s8.bf16 %v685
          %v918 = vunpack.c.l.s8.bf16 %v686
          %v919 = vunpack.c.h.s8.bf16 %v679
          %v920 = vunpack.c.h.s8.bf16 %v680
          %v921 = vunpack.c.h.s8.bf16 %v681
          %v922 = vunpack.c.h.s8.bf16 %v682
          %v923 = vunpack.c.h.s8.bf16 %v683
          %v924 = vunpack.c.h.s8.bf16 %v684
          %v925 = vunpack.c.h.s8.bf16 %v685
          %v926 = vunpack.c.h.s8.bf16 %v686
          %v927 = vunpack.c.l.s8.bf16 %v687
          %v928 = vunpack.c.l.s8.bf16 %v688
          %v929 = vunpack.c.l.s8.bf16 %v689
          %v930 = vunpack.c.l.s8.bf16 %v690
          %v931 = vunpack.c.l.s8.bf16 %v691
          %v932 = vunpack.c.l.s8.bf16 %v692
          %v933 = vunpack.c.l.s8.bf16 %v693
          %v934 = vunpack.c.l.s8.bf16 %v694
          %v935 = vunpack.c.h.s8.bf16 %v687
          %v936 = vunpack.c.h.s8.bf16 %v688
          %v937 = vunpack.c.h.s8.bf16 %v689
          %v938 = vunpack.c.h.s8.bf16 %v690
          %v939 = vunpack.c.h.s8.bf16 %v691
          %v940 = vunpack.c.h.s8.bf16 %v692
          %v941 = vunpack.c.h.s8.bf16 %v693
          %v942 = vunpack.c.h.s8.bf16 %v694
          %v943 = vunpack.c.l.s8.bf16 %v695
          %v944 = vunpack.c.l.s8.bf16 %v696
          %v945 = vunpack.c.l.s8.bf16 %v697
          %v946 = vunpack.c.l.s8.bf16 %v698
          %v947 = vunpack.c.l.s8.bf16 %v699
          %v948 = vunpack.c.l.s8.bf16 %v700
          %v949 = vunpack.c.l.s8.bf16 %v701
          %v950 = vunpack.c.l.s8.bf16 %v702
          %v951 = vunpack.c.h.s8.bf16 %v695
          %v952 = vunpack.c.h.s8.bf16 %v696
          %v953 = vunpack.c.h.s8.bf16 %v697
          %v954 = vunpack.c.h.s8.bf16 %v698
          %v955 = vunpack.c.h.s8.bf16 %v699
          %v956 = vunpack.c.h.s8.bf16 %v700
          %v957 = vunpack.c.h.s8.bf16 %v701
          %v958 = vunpack.c.h.s8.bf16 %v702
          %v963 = vunpack.c.l.b16 %v571
          %v964 = vunpack.c.h.b16 %v571
          %v965 = vunpack.c.l.b16 %v572
          %v966 = vunpack.c.h.b16 %v572
          %v967 = vunpack.c.l.b16 %v573
          %v968 = vunpack.c.h.b16 %v573
          %v969 = vunpack.c.l.b16 %v574
          %v970 = vunpack.c.h.b16 %v574
          %v971 = vpack.c.b16 %v967, %v963
          %v972 = vpack.c.b16 %v968, %v964
          %v973 = vpack.c.b16 %v969, %v965
          %v974 = vpack.c.b16 %v970, %v966
          %979 = vmatprep.subr.bf16.mxu0 %v704
          %980 = vmatpush1.bf16.msra.mxu0 %v703
          %981 = vmatprep.subr.bf16.mxu0 %v712
          %982 = vmatpush1.bf16.msra.mxu0 %v711
          %983 = vmatprep.subr.bf16.mxu0 %v720
          %984 = vmatpush1.bf16.msra.mxu0 %v719
          %985 = vmatprep.subr.bf16.mxu0 %v728
          %986 = vmatpush1.bf16.msra.mxu0 %v727
          %987 = vmatprep.subr.bf16.mxu0 %v736
          %988 = vmatpush1.bf16.msra.mxu0 %v735
          %989 = vmatprep.subr.bf16.mxu0 %v744
          %990 = vmatpush1.bf16.msra.mxu0 %v743
          %991 = vmatprep.subr.bf16.mxu0 %v752
          %992 = vmatpush1.bf16.msra.mxu0 %v751
          %993 = vmatprep.subr.bf16.mxu0 %v760
          %994 = vmatpush1.bf16.msra.mxu0 %v759
          %995 = vmatprep.subr.bf16.mxu0 %v768
          %996 = vmatpush1.bf16.msra.mxu0 %v767
          %997 = vmatprep.subr.bf16.mxu0 %v776
          %998 = vmatpush1.bf16.msra.mxu0 %v775
          %999 = vmatprep.subr.bf16.mxu0 %v784
          %1000 = vmatpush1.bf16.msra.mxu0 %v783
          %1001 = vmatprep.subr.bf16.mxu0 %v792
          %1002 = vmatpush1.bf16.msra.mxu0 %v791
          %1003 = vmatprep.subr.bf16.mxu0 %v800
          %1004 = vmatpush1.bf16.msra.mxu0 %v799
          %1005 = vmatprep.subr.bf16.mxu0 %v808
          %1006 = vmatpush1.bf16.msra.mxu0 %v807
          %1007 = vmatprep.subr.bf16.mxu0 %v816
          %1008 = vmatpush1.bf16.msra.mxu0 %v815
          %1009 = vmatprep.subr.bf16.mxu0 %v824
          %1010 = vmatpush1.bf16.msra.mxu0 %v823
          %1011 = vmatprep.mubr.bf16.mxu0 %v972
          %1012 = vmatmul.mubr.bf16.gmra.mrb[0].mxu0 %v971
          %v1013 = vpop.f32.mrb[0].mxu0
          %v1014 = vadd.f32 0.0, %v1013
          %v1015 = vpop.f32.mrb[0].mxu0
          %v1016 = vadd.f32 0.0, %v1015
          %v1017 = vpop.f32.mrb[0].mxu0
          %v1018 = vadd.f32 0.0, %v1017
          %v1019 = vpop.f32.mrb[0].mxu0
          %v1020 = vadd.f32 0.0, %v1019
          %1021 = vdwg.mxu0
          %1022 = vmatprep.subr.bf16.mxu0 %v832
          %1023 = vmatpush1.bf16.msra.mxu0 %v831
          %1024 = vmatprep.subr.bf16.mxu0 %v840
          %1025 = vmatpush1.bf16.msra.mxu0 %v839
          %1026 = vmatprep.subr.bf16.mxu0 %v848
          %1027 = vmatpush1.bf16.msra.mxu0 %v847
          %1028 = vmatprep.subr.bf16.mxu0 %v856
          %1029 = vmatpush1.bf16.msra.mxu0 %v855
          %1030 = vmatprep.subr.bf16.mxu0 %v864
          %1031 = vmatpush1.bf16.msra.mxu0 %v863
          %1032 = vmatprep.subr.bf16.mxu0 %v872
          %1033 = vmatpush1.bf16.msra.mxu0 %v871
          %1034 = vmatprep.subr.bf16.mxu0 %v880
          %1035 = vmatpush1.bf16.msra.mxu0 %v879
          %1036 = vmatprep.subr.bf16.mxu0 %v888
          %1037 = vmatpush1.bf16.msra.mxu0 %v887
          %1038 = vmatprep.subr.bf16.mxu0 %v896
          %1039 = vmatpush1.bf16.msra.mxu0 %v895
          %1040 = vmatprep.subr.bf16.mxu0 %v904
          %1041 = vmatpush1.bf16.msra.mxu0 %v903
          %1042 = vmatprep.subr.bf16.mxu0 %v912
          %1043 = vmatpush1.bf16.msra.mxu0 %v911
          %1044 = vmatprep.subr.bf16.mxu0 %v920
          %1045 = vmatpush1.bf16.msra.mxu0 %v919
          %1046 = vmatprep.subr.bf16.mxu0 %v928
          %1047 = vmatpush1.bf16.msra.mxu0 %v927
          %1048 = vmatprep.subr.bf16.mxu0 %v936
          %1049 = vmatpush1.bf16.msra.mxu0 %v935
          %1050 = vmatprep.subr.bf16.mxu0 %v944
          %1051 = vmatpush1.bf16.msra.mxu0 %v943
          %1052 = vmatprep.subr.bf16.mxu0 %v952
          %1053 = vmatpush1.bf16.msra.mxu0 %v951
          %1054 = vmatprep.mubr.bf16.mxu0 %v974
          %1055 = vmatmul.mubr.bf16.gmra.mrb[0].mxu0 %v973
          %v1056 = vpop.f32.mrb[0].mxu0
          %v1057 = vadd.f32 %v1014, %v1056
          %v1058 = vpop.f32.mrb[0].mxu0
          %v1059 = vadd.f32 %v1016, %v1058
          %v1060 = vpop.f32.mrb[0].mxu0
          %v1061 = vadd.f32 %v1018, %v1060
          %v1062 = vpop.f32.mrb[0].mxu0
          %v1063 = vadd.f32 %v1020, %v1062
          %1064 = vdwg.mxu0
          %1065 = vmatprep.subr.bf16.mxu0 %v706
          %1066 = vmatpush1.bf16.msra.mxu0 %v705
          %1067 = vmatprep.subr.bf16.mxu0 %v714
          %1068 = vmatpush1.bf16.msra.mxu0 %v713
          %1069 = vmatprep.subr.bf16.mxu0 %v722
          %1070 = vmatpush1.bf16.msra.mxu0 %v721
          %1071 = vmatprep.subr.bf16.mxu0 %v730
          %1072 = vmatpush1.bf16.msra.mxu0 %v729
          %1073 = vmatprep.subr.bf16.mxu0 %v738
          %1074 = vmatpush1.bf16.msra.mxu0 %v737
          %1075 = vmatprep.subr.bf16.mxu0 %v746
          %1076 = vmatpush1.bf16.msra.mxu0 %v745
          %1077 = vmatprep.subr.bf16.mxu0 %v754
          %1078 = vmatpush1.bf16.msra.mxu0 %v753
          %1079 = vmatprep.subr.bf16.mxu0 %v762
          %1080 = vmatpush1.bf16.msra.mxu0 %v761
          %1081 = vmatprep.subr.bf16.mxu0 %v770
          %1082 = vmatpush1.bf16.msra.mxu0 %v769
          %1083 = vmatprep.subr.bf16.mxu0 %v778
          %1084 = vmatpush1.bf16.msra.mxu0 %v777
          %1085 = vmatprep.subr.bf16.mxu0 %v786
          %1086 = vmatpush1.bf16.msra.mxu0 %v785
          %1087 = vmatprep.subr.bf16.mxu0 %v794
          %1088 = vmatpush1.bf16.msra.mxu0 %v793
          %1089 = vmatprep.subr.bf16.mxu0 %v802
          %1090 = vmatpush1.bf16.msra.mxu0 %v801
          %1091 = vmatprep.subr.bf16.mxu0 %v810
          %1092 = vmatpush1.bf16.msra.mxu0 %v809
          %1093 = vmatprep.subr.bf16.mxu0 %v818
          %1094 = vmatpush1.bf16.msra.mxu0 %v817
          %1095 = vmatprep.subr.bf16.mxu0 %v826
          %1096 = vmatpush1.bf16.msra.mxu0 %v825
          %1097 = vmatprep.mubr.bf16.mxu0 %v972
          %1098 = vmatmul.mubr.bf16.gmra.mrb[0].mxu0 %v971
          %v1099 = vpop.f32.mrb[0].mxu0
          %v1100 = vadd.f32 0.0, %v1099
          %v1101 = vpop.f32.mrb[0].mxu0
          %v1102 = vadd.f32 0.0, %v1101
          %v1103 = vpop.f32.mrb[0].mxu0
          %v1104 = vadd.f32 0.0, %v1103
          %v1105 = vpop.f32.mrb[0].mxu0
          %v1106 = vadd.f32 0.0, %v1105
          %1107 = vdwg.mxu0
          %1108 = vmatprep.subr.bf16.mxu0 %v834
          %1109 = vmatpush1.bf16.msra.mxu0 %v833
          %1110 = vmatprep.subr.bf16.mxu0 %v842
          %1111 = vmatpush1.bf16.msra.mxu0 %v841
          %1112 = vmatprep.subr.bf16.mxu0 %v850
          %1113 = vmatpush1.bf16.msra.mxu0 %v849
          %1114 = vmatprep.subr.bf16.mxu0 %v858
          %1115 = vmatpush1.bf16.msra.mxu0 %v857
          %1116 = vmatprep.subr.bf16.mxu0 %v866
          %1117 = vmatpush1.bf16.msra.mxu0 %v865
          %1118 = vmatprep.subr.bf16.mxu0 %v874
          %1119 = vmatpush1.bf16.msra.mxu0 %v873
          %1120 = vmatprep.subr.bf16.mxu0 %v882
          %1121 = vmatpush1.bf16.msra.mxu0 %v881
          %1122 = vmatprep.subr.bf16.mxu0 %v890
          %1123 = vmatpush1.bf16.msra.mxu0 %v889
          %1124 = vmatprep.subr.bf16.mxu0 %v898
          %1125 = vmatpush1.bf16.msra.mxu0 %v897
          %1126 = vmatprep.subr.bf16.mxu0 %v906
          %1127 = vmatpush1.bf16.msra.mxu0 %v905
          %1128 = vmatprep.subr.bf16.mxu0 %v914
          %1129 = vmatpush1.bf16.msra.mxu0 %v913
          %1130 = vmatprep.subr.bf16.mxu0 %v922
          %1131 = vmatpush1.bf16.msra.mxu0 %v921
          %1132 = vmatprep.subr.bf16.mxu0 %v930
          %1133 = vmatpush1.bf16.msra.mxu0 %v929
          %1134 = vmatprep.subr.bf16.mxu0 %v938
          %1135 = vmatpush1.bf16.msra.mxu0 %v937
          %1136 = vmatprep.subr.bf16.mxu0 %v946
          %1137 = vmatpush1.bf16.msra.mxu0 %v945
          %1138 = vmatprep.subr.bf16.mxu0 %v954
          %1139 = vmatpush1.bf16.msra.mxu0 %v953
          %1140 = vmatprep.mubr.bf16.mxu0 %v974
          %1141 = vmatmul.mubr.bf16.gmra.mrb[0].mxu0 %v973
          %v1142 = vpop.f32.mrb[0].mxu0
          %v1143 = vadd.f32 %v1100, %v1142
          %v1144 = vpop.f32.mrb[0].mxu0
          %v1145 = vadd.f32 %v1102, %v1144
          %v1146 = vpop.f32.mrb[0].mxu0
          %v1147 = vadd.f32 %v1104, %v1146
          %v1148 = vpop.f32.mrb[0].mxu0
          %v1149 = vadd.f32 %v1106, %v1148
          %1150 = vdwg.mxu0
          %1151 = vmatprep.subr.bf16.mxu0 %v708
          %1152 = vmatpush1.bf16.msra.mxu0 %v707
          %1153 = vmatprep.subr.bf16.mxu0 %v716
          %1154 = vmatpush1.bf16.msra.mxu0 %v715
          %1155 = vmatprep.subr.bf16.mxu0 %v724
          %1156 = vmatpush1.bf16.msra.mxu0 %v723
          %1157 = vmatprep.subr.bf16.mxu0 %v732
          %1158 = vmatpush1.bf16.msra.mxu0 %v731
          %1159 = vmatprep.subr.bf16.mxu0 %v740
          %1160 = vmatpush1.bf16.msra.mxu0 %v739
          %1161 = vmatprep.subr.bf16.mxu0 %v748
          %1162 = vmatpush1.bf16.msra.mxu0 %v747
          %1163 = vmatprep.subr.bf16.mxu0 %v756
          %1164 = vmatpush1.bf16.msra.mxu0 %v755
          %1165 = vmatprep.subr.bf16.mxu0 %v764
          %1166 = vmatpush1.bf16.msra.mxu0 %v763
          %1167 = vmatprep.subr.bf16.mxu0 %v772
          %1168 = vmatpush1.bf16.msra.mxu0 %v771
          %1169 = vmatprep.subr.bf16.mxu0 %v780
          %1170 = vmatpush1.bf16.msra.mxu0 %v779
          %1171 = vmatprep.subr.bf16.mxu0 %v788
          %1172 = vmatpush1.bf16.msra.mxu0 %v787
          %1173 = vmatprep.subr.bf16.mxu0 %v796
          %1174 = vmatpush1.bf16.msra.mxu0 %v795
          %1175 = vmatprep.subr.bf16.mxu0 %v804
          %1176 = vmatpush1.bf16.msra.mxu0 %v803
          %1177 = vmatprep.subr.bf16.mxu0 %v812
          %1178 = vmatpush1.bf16.msra.mxu0 %v811
          %1179 = vmatprep.subr.bf16.mxu0 %v820
          %1180 = vmatpush1.bf16.msra.mxu0 %v819
          %1181 = vmatprep.subr.bf16.mxu0 %v828
          %1182 = vmatpush1.bf16.msra.mxu0 %v827
          %1183 = vmatprep.mubr.bf16.mxu0 %v972
          %1184 = vmatmul.mubr.bf16.gmra.mrb[0].mxu0 %v971
          %v1185 = vpop.f32.mrb[0].mxu0
          %v1186 = vadd.f32 0.0, %v1185
          %v1187 = vpop.f32.mrb[0].mxu0
          %v1188 = vadd.f32 0.0, %v1187
          %v1189 = vpop.f32.mrb[0].mxu0
          %v1190 = vadd.f32 0.0, %v1189
          %v1191 = vpop.f32.mrb[0].mxu0
          %v1192 = vadd.f32 0.0, %v1191
          %1193 = vdwg.mxu0
          %1194 = vmatprep.subr.bf16.mxu0 %v836
          %1195 = vmatpush1.bf16.msra.mxu0 %v835
          %1196 = vmatprep.subr.bf16.mxu0 %v844
          %1197 = vmatpush1.bf16.msra.mxu0 %v843
          %1198 = vmatprep.subr.bf16.mxu0 %v852
          %1199 = vmatpush1.bf16.msra.mxu0 %v851
          %1200 = vmatprep.subr.bf16.mxu0 %v860
          %1201 = vmatpush1.bf16.msra.mxu0 %v859
          %1202 = vmatprep.subr.bf16.mxu0 %v868
          %1203 = vmatpush1.bf16.msra.mxu0 %v867
          %1204 = vmatprep.subr.bf16.mxu0 %v876
          %1205 = vmatpush1.bf16.msra.mxu0 %v875
          %1206 = vmatprep.subr.bf16.mxu0 %v884
          %1207 = vmatpush1.bf16.msra.mxu0 %v883
          %1208 = vmatprep.subr.bf16.mxu0 %v892
          %1209 = vmatpush1.bf16.msra.mxu0 %v891
          %1210 = vmatprep.subr.bf16.mxu0 %v900
          %1211 = vmatpush1.bf16.msra.mxu0 %v899
          %1212 = vmatprep.subr.bf16.mxu0 %v908
          %1213 = vmatpush1.bf16.msra.mxu0 %v907
          %1214 = vmatprep.subr.bf16.mxu0 %v916
          %1215 = vmatpush1.bf16.msra.mxu0 %v915
          %1216 = vmatprep.subr.bf16.mxu0 %v924
          %1217 = vmatpush1.bf16.msra.mxu0 %v923
          %1218 = vmatprep.subr.bf16.mxu0 %v932
          %1219 = vmatpush1.bf16.msra.mxu0 %v931
          %1220 = vmatprep.subr.bf16.mxu0 %v940
          %1221 = vmatpush1.bf16.msra.mxu0 %v939
          %1222 = vmatprep.subr.bf16.mxu0 %v948
          %1223 = vmatpush1.bf16.msra.mxu0 %v947
          %1224 = vmatprep.subr.bf16.mxu0 %v956
          %1225 = vmatpush1.bf16.msra.mxu0 %v955
          %1226 = vmatprep.mubr.bf16.mxu0 %v974
          %1227 = vmatmul.mubr.bf16.gmra.mrb[0].mxu0 %v973
          %v1228 = vpop.f32.mrb[0].mxu0
          %v1229 = vadd.f32 %v1186, %v1228
          %v1230 = vpop.f32.mrb[0].mxu0
          %v1231 = vadd.f32 %v1188, %v1230
          %v1232 = vpop.f32.mrb[0].mxu0
          %v1233 = vadd.f32 %v1190, %v1232
          %v1234 = vpop.f32.mrb[0].mxu0
          %v1235 = vadd.f32 %v1192, %v1234
          %1236 = vdwg.mxu0
          %1237 = vmatprep.subr.bf16.mxu0 %v710
          %1238 = vmatpush1.bf16.msra.mxu0 %v709
          %1239 = vmatprep.subr.bf16.mxu0 %v718
          %1240 = vmatpush1.bf16.msra.mxu0 %v717
          %1241 = vmatprep.subr.bf16.mxu0 %v726
          %1242 = vmatpush1.bf16.msra.mxu0 %v725
          %1243 = vmatprep.subr.bf16.mxu0 %v734
          %1244 = vmatpush1.bf16.msra.mxu0 %v733
          %1245 = vmatprep.subr.bf16.mxu0 %v742
          %1246 = vmatpush1.bf16.msra.mxu0 %v741
          %1247 = vmatprep.subr.bf16.mxu0 %v750
          %1248 = vmatpush1.bf16.msra.mxu0 %v749
          %1249 = vmatprep.subr.bf16.mxu0 %v758
          %1250 = vmatpush1.bf16.msra.mxu0 %v757
          %1251 = vmatprep.subr.bf16.mxu0 %v766
          %1252 = vmatpush1.bf16.msra.mxu0 %v765
          %1253 = vmatprep.subr.bf16.mxu0 %v774
          %1254 = vmatpush1.bf16.msra.mxu0 %v773
          %1255 = vmatprep.subr.bf16.mxu0 %v782
          %1256 = vmatpush1.bf16.msra.mxu0 %v781
          %1257 = vmatprep.subr.bf16.mxu0 %v790
          %1258 = vmatpush1.bf16.msra.mxu0 %v789
          %1259 = vmatprep.subr.bf16.mxu0 %v798
          %1260 = vmatpush1.bf16.msra.mxu0 %v797
          %1261 = vmatprep.subr.bf16.mxu0 %v806
          %1262 = vmatpush1.bf16.msra.mxu0 %v805
          %1263 = vmatprep.subr.bf16.mxu0 %v814
          %1264 = vmatpush1.bf16.msra.mxu0 %v813
          %1265 = vmatprep.subr.bf16.mxu0 %v822
          %1266 = vmatpush1.bf16.msra.mxu0 %v821
          %1267 = vmatprep.subr.bf16.mxu0 %v830
          %1268 = vmatpush1.bf16.msra.mxu0 %v829
          %1269 = vmatprep.mubr.bf16.mxu0 %v972
          %1270 = vmatmul.mubr.bf16.gmra.mrb[0].mxu0 %v971
          %v1271 = vpop.f32.mrb[0].mxu0
          %v1272 = vadd.f32 0.0, %v1271
          %v1273 = vpop.f32.mrb[0].mxu0
          %v1274 = vadd.f32 0.0, %v1273
          %v1275 = vpop.f32.mrb[0].mxu0
          %v1276 = vadd.f32 0.0, %v1275
          %v1277 = vpop.f32.mrb[0].mxu0
          %v1278 = vadd.f32 0.0, %v1277
          %1279 = vdwg.mxu0
          %1280 = vmatprep.subr.bf16.mxu0 %v838
          %1281 = vmatpush1.bf16.msra.mxu0 %v837
          %1282 = vmatprep.subr.bf16.mxu0 %v846
          %1283 = vmatpush1.bf16.msra.mxu0 %v845
          %1284 = vmatprep.subr.bf16.mxu0 %v854
          %1285 = vmatpush1.bf16.msra.mxu0 %v853
          %1286 = vmatprep.subr.bf16.mxu0 %v862
          %1287 = vmatpush1.bf16.msra.mxu0 %v861
          %1288 = vmatprep.subr.bf16.mxu0 %v870
          %1289 = vmatpush1.bf16.msra.mxu0 %v869
          %1290 = vmatprep.subr.bf16.mxu0 %v878
          %1291 = vmatpush1.bf16.msra.mxu0 %v877
          %1292 = vmatprep.subr.bf16.mxu0 %v886
          %1293 = vmatpush1.bf16.msra.mxu0 %v885
          %1294 = vmatprep.subr.bf16.mxu0 %v894
          %1295 = vmatpush1.bf16.msra.mxu0 %v893
          %1296 = vmatprep.subr.bf16.mxu0 %v902
          %1297 = vmatpush1.bf16.msra.mxu0 %v901
          %1298 = vmatprep.subr.bf16.mxu0 %v910
          %1299 = vmatpush1.bf16.msra.mxu0 %v909
          %1300 = vmatprep.subr.bf16.mxu0 %v918
          %1301 = vmatpush1.bf16.msra.mxu0 %v917
          %1302 = vmatprep.subr.bf16.mxu0 %v926
          %1303 = vmatpush1.bf16.msra.mxu0 %v925
          %1304 = vmatprep.subr.bf16.mxu0 %v934
          %1305 = vmatpush1.bf16.msra.mxu0 %v933
          %1306 = vmatprep.subr.bf16.mxu0 %v942
          %1307 = vmatpush1.bf16.msra.mxu0 %v941
          %1308 = vmatprep.subr.bf16.mxu0 %v950
          %1309 = vmatpush1.bf16.msra.mxu0 %v949
          %1310 = vmatprep.subr.bf16.mxu0 %v958
          %1311 = vmatpush1.bf16.msra.mxu0 %v957
          %1312 = vmatprep.mubr.bf16.mxu0 %v974
          %1313 = vmatmul.mubr.bf16.gmra.mrb[0].mxu0 %v973
          %v1314 = vpop.f32.mrb[0].mxu0
          %v1315 = vadd.f32 %v1272, %v1314
          %v1316 = vpop.f32.mrb[0].mxu0
          %v1317 = vadd.f32 %v1274, %v1316
          %v1318 = vpop.f32.mrb[0].mxu0
          %v1319 = vadd.f32 %v1276, %v1318
          %v1320 = vpop.f32.mrb[0].mxu0
          %v1321 = vadd.f32 %v1278, %v1320
          %1322 = vdwg.mxu0
          %v1323 = vld [vmem:[%s2] sm:$0xff]
          %v1325 = vlaneseq
          %v1326 = vshrl.u32 %v1325, 7
          %v1327 = vsub.s32 0, %v1326
          %v1328 = vrot.slane %v1323, %v1327
          %v1329 = vlaneseq
          %v1330 = vshrl.u32 %v1329, 7
          %v1331 = vsub.s32 1, %v1330
          %v1332 = vrot.slane %v1323, %v1331
          %v1333 = vlaneseq
          %v1334 = vshrl.u32 %v1333, 7
          %v1335 = vsub.s32 2, %v1334
          %v1336 = vrot.slane %v1323, %v1335
          %v1337 = vlaneseq
          %v1338 = vshrl.u32 %v1337, 7
          %v1339 = vsub.s32 3, %v1338
          %v1340 = vrot.slane %v1323, %v1339
          %v1341 = vlaneseq
          %v1342 = vshrl.u32 %v1341, 7
          %v1343 = vsub.s32 4, %v1342
          %v1344 = vrot.slane %v1323, %v1343
          %v1345 = vlaneseq
          %v1346 = vshrl.u32 %v1345, 7
          %v1347 = vsub.s32 5, %v1346
          %v1348 = vrot.slane %v1323, %v1347
          %v1349 = vlaneseq
          %v1350 = vshrl.u32 %v1349, 7
          %v1351 = vsub.s32 6, %v1350
          %v1352 = vrot.slane %v1323, %v1351
          %v1353 = vlaneseq
          %v1354 = vshrl.u32 %v1353, 7
          %v1355 = vsub.s32 7, %v1354
          %v1356 = vrot.slane %v1323, %v1355
          %v1365 = vmul.f32 %v1057, %v1328
          %v1366 = vmul.f32 %v1059, %v1332
          %v1367 = vmul.f32 %v1143, %v1336
          %v1368 = vmul.f32 %v1145, %v1340
          %v1369 = vmul.f32 %v1229, %v1344
          %v1370 = vmul.f32 %v1231, %v1348
          %v1371 = vmul.f32 %v1315, %v1352
          %v1372 = vmul.f32 %v1317, %v1356
          %v1373 = vmul.f32 %v1061, %v1328
          %v1374 = vmul.f32 %v1063, %v1332
          %v1375 = vmul.f32 %v1147, %v1336
          %v1376 = vmul.f32 %v1149, %v1340
          %v1377 = vmul.f32 %v1233, %v1344
          %v1378 = vmul.f32 %v1235, %v1348
          %v1379 = vmul.f32 %v1319, %v1352
          %v1380 = vmul.f32 %v1321, %v1356
          %v1381 = vld [vmem:[%s3] sm:$0xff]
          %v1383 = vlaneseq
          %v1384 = vshrl.u32 %v1383, 7
          %v1385 = vsub.s32 0, %v1384
          %v1386 = vrot.slane %v1381, %v1385
          %v1387 = vlaneseq
          %v1388 = vshrl.u32 %v1387, 7
          %v1389 = vsub.s32 1, %v1388
          %v1390 = vrot.slane %v1381, %v1389
          %v1391 = vlaneseq
          %v1392 = vshrl.u32 %v1391, 7
          %v1393 = vsub.s32 2, %v1392
          %v1394 = vrot.slane %v1381, %v1393
          %v1395 = vlaneseq
          %v1396 = vshrl.u32 %v1395, 7
          %v1397 = vsub.s32 3, %v1396
          %v1398 = vrot.slane %v1381, %v1397
          %v1399 = vlaneseq
          %v1400 = vshrl.u32 %v1399, 7
          %v1401 = vsub.s32 4, %v1400
          %v1402 = vrot.slane %v1381, %v1401
          %v1403 = vlaneseq
          %v1404 = vshrl.u32 %v1403, 7
          %v1405 = vsub.s32 5, %v1404
          %v1406 = vrot.slane %v1381, %v1405
          %v1407 = vlaneseq
          %v1408 = vshrl.u32 %v1407, 7
          %v1409 = vsub.s32 6, %v1408
          %v1410 = vrot.slane %v1381, %v1409
          %v1411 = vlaneseq
          %v1412 = vshrl.u32 %v1411, 7
          %v1413 = vsub.s32 7, %v1412
          %v1414 = vrot.slane %v1381, %v1413
          %v1423 = vadd.f32 %v1365, %v1386
          %v1424 = vadd.f32 %v1366, %v1390
          %v1425 = vadd.f32 %v1367, %v1394
          %v1426 = vadd.f32 %v1368, %v1398
          %v1427 = vadd.f32 %v1369, %v1402
          %v1428 = vadd.f32 %v1370, %v1406
          %v1429 = vadd.f32 %v1371, %v1410
          %v1430 = vadd.f32 %v1372, %v1414
          %v1431 = vadd.f32 %v1373, %v1386
          %v1432 = vadd.f32 %v1374, %v1390
          %v1433 = vadd.f32 %v1375, %v1394
          %v1434 = vadd.f32 %v1376, %v1398
          %v1435 = vadd.f32 %v1377, %v1402
          %v1436 = vadd.f32 %v1378, %v1406
          %v1437 = vadd.f32 %v1379, %v1410
          %v1438 = vadd.f32 %v1380, %v1414
          %v1439 = vmax.f32 %v1423, 0.0
          %v1440 = vmax.f32 %v1424, 0.0
          %v1441 = vmax.f32 %v1425, 0.0
          %v1442 = vmax.f32 %v1426, 0.0
          %v1443 = vmax.f32 %v1427, 0.0
          %v1444 = vmax.f32 %v1428, 0.0
          %v1445 = vmax.f32 %v1429, 0.0
          %v1446 = vmax.f32 %v1430, 0.0
          %v1447 = vmax.f32 %v1431, 0.0
          %v1448 = vmax.f32 %v1432, 0.0
          %v1449 = vmax.f32 %v1433, 0.0
          %v1450 = vmax.f32 %v1434, 0.0
          %v1451 = vmax.f32 %v1435, 0.0
          %v1452 = vmax.f32 %v1436, 0.0
          %v1453 = vmax.f32 %v1437, 0.0
          %v1454 = vmax.f32 %v1438, 0.0
          %v1455 = vpack.c.bf16 %v1447, %v1439
          %v1456 = vpack.c.bf16 %v1448, %v1440
          %v1457 = vpack.c.bf16 %v1449, %v1441
          %v1458 = vpack.c.bf16 %v1450, %v1442
          %v1459 = vpack.c.bf16 %v1451, %v1443
          %v1460 = vpack.c.bf16 %v1452, %v1444
          %v1461 = vpack.c.bf16 %v1453, %v1445
          %v1462 = vpack.c.bf16 %v1454, %v1446
          %v1463 = vld [vmem:[#allocation5] sm:$0xff]
          %v1464 = vld [vmem:[#allocation5 + $0x8] sm:$0xff]
          %v1465 = vld [vmem:[#allocation5 + $0x10] sm:$0xff]
          %v1466 = vld [vmem:[#allocation5 + $0x18] sm:$0xff]
          %v1467 = vld [vmem:[#allocation5 + $0x20] sm:$0xff]
          %v1468 = vld [vmem:[#allocation5 + $0x28] sm:$0xff]
          %v1469 = vld [vmem:[#allocation5 + $0x30] sm:$0xff]
          %v1470 = vld [vmem:[#allocation5 + $0x38] sm:$0xff]
          %v1471 = vld [vmem:[#allocation5 + $0x40] sm:$0xff]
          %v1472 = vld [vmem:[#allocation5 + $0x48] sm:$0xff]
          %v1473 = vld [vmem:[#allocation5 + $0x50] sm:$0xff]
          %v1474 = vld [vmem:[#allocation5 + $0x58] sm:$0xff]
          %v1475 = vld [vmem:[#allocation5 + $0x60] sm:$0xff]
          %v1476 = vld [vmem:[#allocation5 + $0x68] sm:$0xff]
          %v1477 = vld [vmem:[#allocation5 + $0x70] sm:$0xff]
          %v1478 = vld [vmem:[#allocation5 + $0x78] sm:$0xff]
          %v1479 = vld [vmem:[#allocation5 + $0x80] sm:$0xff]
          %v1480 = vld [vmem:[#allocation5 + $0x88] sm:$0xff]
          %v1481 = vld [vmem:[#allocation5 + $0x90] sm:$0xff]
          %v1482 = vld [vmem:[#allocation5 + $0x98] sm:$0xff]
          %v1483 = vld [vmem:[#allocation5 + $0xa0] sm:$0xff]
          %v1484 = vld [vmem:[#allocation5 + $0xa8] sm:$0xff]
          %v1485 = vld [vmem:[#allocation5 + $0xb0] sm:$0xff]
          %v1486 = vld [vmem:[#allocation5 + $0xb8] sm:$0xff]
          %v1487 = vld [vmem:[#allocation5 + $0xc0] sm:$0xff]
          %v1488 = vld [vmem:[#allocation5 + $0xc8] sm:$0xff]
          %v1489 = vld [vmem:[#allocation5 + $0xd0] sm:$0xff]
          %v1490 = vld [vmem:[#allocation5 + $0xd8] sm:$0xff]
          %v1491 = vld [vmem:[#allocation5 + $0xe0] sm:$0xff]
          %v1492 = vld [vmem:[#allocation5 + $0xe8] sm:$0xff]
          %v1493 = vld [vmem:[#allocation5 + $0xf0] sm:$0xff]
          %v1494 = vld [vmem:[#allocation5 + $0xf8] sm:$0xff]
          %v1495 = vld [vmem:[#allocation5 + $0x100] sm:$0xff]
          %v1496 = vld [vmem:[#allocation5 + $0x108] sm:$0xff]
          %v1497 = vld [vmem:[#allocation5 + $0x110] sm:$0xff]
          %v1498 = vld [vmem:[#allocation5 + $0x118] sm:$0xff]
          %v1499 = vld [vmem:[#allocation5 + $0x120] sm:$0xff]
          %v1500 = vld [vmem:[#allocation5 + $0x128] sm:$0xff]
          %v1501 = vld [vmem:[#allocation5 + $0x130] sm:$0xff]
          %v1502 = vld [vmem:[#allocation5 + $0x138] sm:$0xff]
          %v1503 = vld [vmem:[#allocation5 + $0x140] sm:$0xff]
          %v1504 = vld [vmem:[#allocation5 + $0x148] sm:$0xff]
          %v1505 = vld [vmem:[#allocation5 + $0x150] sm:$0xff]
          %v1506 = vld [vmem:[#allocation5 + $0x158] sm:$0xff]
          %v1507 = vld [vmem:[#allocation5 + $0x160] sm:$0xff]
          %v1508 = vld [vmem:[#allocation5 + $0x168] sm:$0xff]
          %v1509 = vld [vmem:[#allocation5 + $0x170] sm:$0xff]
          %v1510 = vld [vmem:[#allocation5 + $0x178] sm:$0xff]
          %v1511 = vld [vmem:[#allocation5 + $0x180] sm:$0xff]
          %v1512 = vld [vmem:[#allocation5 + $0x188] sm:$0xff]
          %v1513 = vld [vmem:[#allocation5 + $0x190] sm:$0xff]
          %v1514 = vld [vmem:[#allocation5 + $0x198] sm:$0xff]
          %v1515 = vld [vmem:[#allocation5 + $0x1a0] sm:$0xff]
          %v1516 = vld [vmem:[#allocation5 + $0x1a8] sm:$0xff]
          %v1517 = vld [vmem:[#allocation5 + $0x1b0] sm:$0xff]
          %v1518 = vld [vmem:[#allocation5 + $0x1b8] sm:$0xff]
          %v1519 = vld [vmem:[#allocation5 + $0x1c0] sm:$0xff]
          %v1520 = vld [vmem:[#allocation5 + $0x1c8] sm:$0xff]
          %v1521 = vld [vmem:[#allocation5 + $0x1d0] sm:$0xff]
          %v1522 = vld [vmem:[#allocation5 + $0x1d8] sm:$0xff]
          %v1523 = vld [vmem:[#allocation5 + $0x1e0] sm:$0xff]
          %v1524 = vld [vmem:[#allocation5 + $0x1e8] sm:$0xff]
          %v1525 = vld [vmem:[#allocation5 + $0x1f0] sm:$0xff]
          %v1526 = vld [vmem:[#allocation5 + $0x1f8] sm:$0xff]
          %v1527 = vld [vmem:[#allocation5 + $0x200] sm:$0xff]
          %v1528 = vld [vmem:[#allocation5 + $0x208] sm:$0xff]
          %v1529 = vld [vmem:[#allocation5 + $0x210] sm:$0xff]
          %v1530 = vld [vmem:[#allocation5 + $0x218] sm:$0xff]
          %v1531 = vld [vmem:[#allocation5 + $0x220] sm:$0xff]
          %v1532 = vld [vmem:[#allocation5 + $0x228] sm:$0xff]
          %v1533 = vld [vmem:[#allocation5 + $0x230] sm:$0xff]
          %v1534 = vld [vmem:[#allocation5 + $0x238] sm:$0xff]
          %v1535 = vld [vmem:[#allocation5 + $0x240] sm:$0xff]
          %v1536 = vld [vmem:[#allocation5 + $0x248] sm:$0xff]
          %v1537 = vld [vmem:[#allocation5 + $0x250] sm:$0xff]
          %v1538 = vld [vmem:[#allocation5 + $0x258] sm:$0xff]
          %v1539 = vld [vmem:[#allocation5 + $0x260] sm:$0xff]
          %v1540 = vld [vmem:[#allocation5 + $0x268] sm:$0xff]
          %v1541 = vld [vmem:[#allocation5 + $0x270] sm:$0xff]
          %v1542 = vld [vmem:[#allocation5 + $0x278] sm:$0xff]
          %v1543 = vld [vmem:[#allocation5 + $0x280] sm:$0xff]
          %v1544 = vld [vmem:[#allocation5 + $0x288] sm:$0xff]
          %v1545 = vld [vmem:[#allocation5 + $0x290] sm:$0xff]
          %v1546 = vld [vmem:[#allocation5 + $0x298] sm:$0xff]
          %v1547 = vld [vmem:[#allocation5 + $0x2a0] sm:$0xff]
          %v1548 = vld [vmem:[#allocation5 + $0x2a8] sm:$0xff]
          %v1549 = vld [vmem:[#allocation5 + $0x2b0] sm:$0xff]
          %v1550 = vld [vmem:[#allocation5 + $0x2b8] sm:$0xff]
          %v1551 = vld [vmem:[#allocation5 + $0x2c0] sm:$0xff]
          %v1552 = vld [vmem:[#allocation5 + $0x2c8] sm:$0xff]
          %v1553 = vld [vmem:[#allocation5 + $0x2d0] sm:$0xff]
          %v1554 = vld [vmem:[#allocation5 + $0x2d8] sm:$0xff]
          %v1555 = vld [vmem:[#allocation5 + $0x2e0] sm:$0xff]
          %v1556 = vld [vmem:[#allocation5 + $0x2e8] sm:$0xff]
          %v1557 = vld [vmem:[#allocation5 + $0x2f0] sm:$0xff]
          %v1558 = vld [vmem:[#allocation5 + $0x2f8] sm:$0xff]
          %v1559 = vld [vmem:[#allocation5 + $0x300] sm:$0xff]
          %v1560 = vld [vmem:[#allocation5 + $0x308] sm:$0xff]
          %v1561 = vld [vmem:[#allocation5 + $0x310] sm:$0xff]
          %v1562 = vld [vmem:[#allocation5 + $0x318] sm:$0xff]
          %v1563 = vld [vmem:[#allocation5 + $0x320] sm:$0xff]
          %v1564 = vld [vmem:[#allocation5 + $0x328] sm:$0xff]
          %v1565 = vld [vmem:[#allocation5 + $0x330] sm:$0xff]
          %v1566 = vld [vmem:[#allocation5 + $0x338] sm:$0xff]
          %v1567 = vld [vmem:[#allocation5 + $0x340] sm:$0xff]
          %v1568 = vld [vmem:[#allocation5 + $0x348] sm:$0xff]
          %v1569 = vld [vmem:[#allocation5 + $0x350] sm:$0xff]
          %v1570 = vld [vmem:[#allocation5 + $0x358] sm:$0xff]
          %v1571 = vld [vmem:[#allocation5 + $0x360] sm:$0xff]
          %v1572 = vld [vmem:[#allocation5 + $0x368] sm:$0xff]
          %v1573 = vld [vmem:[#allocation5 + $0x370] sm:$0xff]
          %v1574 = vld [vmem:[#allocation5 + $0x378] sm:$0xff]
          %v1575 = vld [vmem:[#allocation5 + $0x380] sm:$0xff]
          %v1576 = vld [vmem:[#allocation5 + $0x388] sm:$0xff]
          %v1577 = vld [vmem:[#allocation5 + $0x390] sm:$0xff]
          %v1578 = vld [vmem:[#allocation5 + $0x398] sm:$0xff]
          %v1579 = vld [vmem:[#allocation5 + $0x3a0] sm:$0xff]
          %v1580 = vld [vmem:[#allocation5 + $0x3a8] sm:$0xff]
          %v1581 = vld [vmem:[#allocation5 + $0x3b0] sm:$0xff]
          %v1582 = vld [vmem:[#allocation5 + $0x3b8] sm:$0xff]
          %v1583 = vld [vmem:[#allocation5 + $0x3c0] sm:$0xff]
          %v1584 = vld [vmem:[#allocation5 + $0x3c8] sm:$0xff]
          %v1585 = vld [vmem:[#allocation5 + $0x3d0] sm:$0xff]
          %v1586 = vld [vmem:[#allocation5 + $0x3d8] sm:$0xff]
          %v1587 = vld [vmem:[#allocation5 + $0x3e0] sm:$0xff]
          %v1588 = vld [vmem:[#allocation5 + $0x3e8] sm:$0xff]
          %v1589 = vld [vmem:[#allocation5 + $0x3f0] sm:$0xff]
          %v1590 = vld [vmem:[#allocation5 + $0x3f8] sm:$0xff]
          %v1591 = vld [vmem:[#allocation5 + $0x400] sm:$0xff]
          %v1592 = vld [vmem:[#allocation5 + $0x408] sm:$0xff]
          %v1593 = vld [vmem:[#allocation5 + $0x410] sm:$0xff]
          %v1594 = vld [vmem:[#allocation5 + $0x418] sm:$0xff]
          %v1595 = vld [vmem:[#allocation5 + $0x420] sm:$0xff]
          %v1596 = vld [vmem:[#allocation5 + $0x428] sm:$0xff]
          %v1597 = vld [vmem:[#allocation5 + $0x430] sm:$0xff]
          %v1598 = vld [vmem:[#allocation5 + $0x438] sm:$0xff]
          %v1599 = vld [vmem:[#allocation5 + $0x440] sm:$0xff]
          %v1600 = vld [vmem:[#allocation5 + $0x448] sm:$0xff]
          %v1601 = vld [vmem:[#allocation5 + $0x450] sm:$0xff]
          %v1602 = vld [vmem:[#allocation5 + $0x458] sm:$0xff]
          %v1603 = vld [vmem:[#allocation5 + $0x460] sm:$0xff]
          %v1604 = vld [vmem:[#allocation5 + $0x468] sm:$0xff]
          %v1605 = vld [vmem:[#allocation5 + $0x470] sm:$0xff]
          %v1606 = vld [vmem:[#allocation5 + $0x478] sm:$0xff]
          %v1607 = vld [vmem:[#allocation5 + $0x480] sm:$0xff]
          %v1608 = vld [vmem:[#allocation5 + $0x488] sm:$0xff]
          %v1609 = vld [vmem:[#allocation5 + $0x490] sm:$0xff]
          %v1610 = vld [vmem:[#allocation5 + $0x498] sm:$0xff]
          %v1611 = vld [vmem:[#allocation5 + $0x4a0] sm:$0xff]
          %v1612 = vld [vmem:[#allocation5 + $0x4a8] sm:$0xff]
          %v1613 = vld [vmem:[#allocation5 + $0x4b0] sm:$0xff]
          %v1614 = vld [vmem:[#allocation5 + $0x4b8] sm:$0xff]
          %v1615 = vld [vmem:[#allocation5 + $0x4c0] sm:$0xff]
          %v1616 = vld [vmem:[#allocation5 + $0x4c8] sm:$0xff]
          %v1617 = vld [vmem:[#allocation5 + $0x4d0] sm:$0xff]
          %v1618 = vld [vmem:[#allocation5 + $0x4d8] sm:$0xff]
          %v1619 = vld [vmem:[#allocation5 + $0x4e0] sm:$0xff]
          %v1620 = vld [vmem:[#allocation5 + $0x4e8] sm:$0xff]
          %v1621 = vld [vmem:[#allocation5 + $0x4f0] sm:$0xff]
          %v1622 = vld [vmem:[#allocation5 + $0x4f8] sm:$0xff]
          %v1623 = vld [vmem:[#allocation5 + $0x500] sm:$0xff]
          %v1624 = vld [vmem:[#allocation5 + $0x508] sm:$0xff]
          %v1625 = vld [vmem:[#allocation5 + $0x510] sm:$0xff]
          %v1626 = vld [vmem:[#allocation5 + $0x518] sm:$0xff]
          %v1627 = vld [vmem:[#allocation5 + $0x520] sm:$0xff]
          %v1628 = vld [vmem:[#allocation5 + $0x528] sm:$0xff]
          %v1629 = vld [vmem:[#allocation5 + $0x530] sm:$0xff]
          %v1630 = vld [vmem:[#allocation5 + $0x538] sm:$0xff]
          %v1631 = vld [vmem:[#allocation5 + $0x540] sm:$0xff]
          %v1632 = vld [vmem:[#allocation5 + $0x548] sm:$0xff]
          %v1633 = vld [vmem:[#allocation5 + $0x550] sm:$0xff]
          %v1634 = vld [vmem:[#allocation5 + $0x558] sm:$0xff]
          %v1635 = vld [vmem:[#allocation5 + $0x560] sm:$0xff]
          %v1636 = vld [vmem:[#allocation5 + $0x568] sm:$0xff]
          %v1637 = vld [vmem:[#allocation5 + $0x570] sm:$0xff]
          %v1638 = vld [vmem:[#allocation5 + $0x578] sm:$0xff]
          %v1639 = vld [vmem:[#allocation5 + $0x580] sm:$0xff]
          %v1640 = vld [vmem:[#allocation5 + $0x588] sm:$0xff]
          %v1641 = vld [vmem:[#allocation5 + $0x590] sm:$0xff]
          %v1642 = vld [vmem:[#allocation5 + $0x598] sm:$0xff]
          %v1643 = vld [vmem:[#allocation5 + $0x5a0] sm:$0xff]
          %v1644 = vld [vmem:[#allocation5 + $0x5a8] sm:$0xff]
          %v1645 = vld [vmem:[#allocation5 + $0x5b0] sm:$0xff]
          %v1646 = vld [vmem:[#allocation5 + $0x5b8] sm:$0xff]
          %v1647 = vld [vmem:[#allocation5 + $0x5c0] sm:$0xff]
          %v1648 = vld [vmem:[#allocation5 + $0x5c8] sm:$0xff]
          %v1649 = vld [vmem:[#allocation5 + $0x5d0] sm:$0xff]
          %v1650 = vld [vmem:[#allocation5 + $0x5d8] sm:$0xff]
          %v1651 = vld [vmem:[#allocation5 + $0x5e0] sm:$0xff]
          %v1652 = vld [vmem:[#allocation5 + $0x5e8] sm:$0xff]
          %v1653 = vld [vmem:[#allocation5 + $0x5f0] sm:$0xff]
          %v1654 = vld [vmem:[#allocation5 + $0x5f8] sm:$0xff]
          %v1655 = vld [vmem:[#allocation5 + $0x600] sm:$0xff]
          %v1656 = vld [vmem:[#allocation5 + $0x608] sm:$0xff]
          %v1657 = vld [vmem:[#allocation5 + $0x610] sm:$0xff]
          %v1658 = vld [vmem:[#allocation5 + $0x618] sm:$0xff]
          %v1659 = vld [vmem:[#allocation5 + $0x620] sm:$0xff]
          %v1660 = vld [vmem:[#allocation5 + $0x628] sm:$0xff]
          %v1661 = vld [vmem:[#allocation5 + $0x630] sm:$0xff]
          %v1662 = vld [vmem:[#allocation5 + $0x638] sm:$0xff]
          %v1663 = vld [vmem:[#allocation5 + $0x640] sm:$0xff]
          %v1664 = vld [vmem:[#allocation5 + $0x648] sm:$0xff]
          %v1665 = vld [vmem:[#allocation5 + $0x650] sm:$0xff]
          %v1666 = vld [vmem:[#allocation5 + $0x658] sm:$0xff]
          %v1667 = vld [vmem:[#allocation5 + $0x660] sm:$0xff]
          %v1668 = vld [vmem:[#allocation5 + $0x668] sm:$0xff]
          %v1669 = vld [vmem:[#allocation5 + $0x670] sm:$0xff]
          %v1670 = vld [vmem:[#allocation5 + $0x678] sm:$0xff]
          %v1671 = vld [vmem:[#allocation5 + $0x680] sm:$0xff]
          %v1672 = vld [vmem:[#allocation5 + $0x688] sm:$0xff]
          %v1673 = vld [vmem:[#allocation5 + $0x690] sm:$0xff]
          %v1674 = vld [vmem:[#allocation5 + $0x698] sm:$0xff]
          %v1675 = vld [vmem:[#allocation5 + $0x6a0] sm:$0xff]
          %v1676 = vld [vmem:[#allocation5 + $0x6a8] sm:$0xff]
          %v1677 = vld [vmem:[#allocation5 + $0x6b0] sm:$0xff]
          %v1678 = vld [vmem:[#allocation5 + $0x6b8] sm:$0xff]
          %v1679 = vld [vmem:[#allocation5 + $0x6c0] sm:$0xff]
          %v1680 = vld [vmem:[#allocation5 + $0x6c8] sm:$0xff]
          %v1681 = vld [vmem:[#allocation5 + $0x6d0] sm:$0xff]
          %v1682 = vld [vmem:[#allocation5 + $0x6d8] sm:$0xff]
          %v1683 = vld [vmem:[#allocation5 + $0x6e0] sm:$0xff]
          %v1684 = vld [vmem:[#allocation5 + $0x6e8] sm:$0xff]
          %v1685 = vld [vmem:[#allocation5 + $0x6f0] sm:$0xff]
          %v1686 = vld [vmem:[#allocation5 + $0x6f8] sm:$0xff]
          %v1687 = vld [vmem:[#allocation5 + $0x700] sm:$0xff]
          %v1688 = vld [vmem:[#allocation5 + $0x708] sm:$0xff]
          %v1689 = vld [vmem:[#allocation5 + $0x710] sm:$0xff]
          %v1690 = vld [vmem:[#allocation5 + $0x718] sm:$0xff]
          %v1691 = vld [vmem:[#allocation5 + $0x720] sm:$0xff]
          %v1692 = vld [vmem:[#allocation5 + $0x728] sm:$0xff]
          %v1693 = vld [vmem:[#allocation5 + $0x730] sm:$0xff]
          %v1694 = vld [vmem:[#allocation5 + $0x738] sm:$0xff]
          %v1695 = vld [vmem:[#allocation5 + $0x740] sm:$0xff]
          %v1696 = vld [vmem:[#allocation5 + $0x748] sm:$0xff]
          %v1697 = vld [vmem:[#allocation5 + $0x750] sm:$0xff]
          %v1698 = vld [vmem:[#allocation5 + $0x758] sm:$0xff]
          %v1699 = vld [vmem:[#allocation5 + $0x760] sm:$0xff]
          %v1700 = vld [vmem:[#allocation5 + $0x768] sm:$0xff]
          %v1701 = vld [vmem:[#allocation5 + $0x770] sm:$0xff]
          %v1702 = vld [vmem:[#allocation5 + $0x778] sm:$0xff]
          %v1703 = vld [vmem:[#allocation5 + $0x780] sm:$0xff]
          %v1704 = vld [vmem:[#allocation5 + $0x788] sm:$0xff]
          %v1705 = vld [vmem:[#allocation5 + $0x790] sm:$0xff]
          %v1706 = vld [vmem:[#allocation5 + $0x798] sm:$0xff]
          %v1707 = vld [vmem:[#allocation5 + $0x7a0] sm:$0xff]
          %v1708 = vld [vmem:[#allocation5 + $0x7a8] sm:$0xff]
          %v1709 = vld [vmem:[#allocation5 + $0x7b0] sm:$0xff]
          %v1710 = vld [vmem:[#allocation5 + $0x7b8] sm:$0xff]
          %v1711 = vld [vmem:[#allocation5 + $0x7c0] sm:$0xff]
          %v1712 = vld [vmem:[#allocation5 + $0x7c8] sm:$0xff]
          %v1713 = vld [vmem:[#allocation5 + $0x7d0] sm:$0xff]
          %v1714 = vld [vmem:[#allocation5 + $0x7d8] sm:$0xff]
          %v1715 = vld [vmem:[#allocation5 + $0x7e0] sm:$0xff]
          %v1716 = vld [vmem:[#allocation5 + $0x7e8] sm:$0xff]
          %v1717 = vld [vmem:[#allocation5 + $0x7f0] sm:$0xff]
          %v1718 = vld [vmem:[#allocation5 + $0x7f8] sm:$0xff]
          %v1719 = vunpack.c.l.s8.bf16 %v1463
          %v1720 = vunpack.c.l.s8.bf16 %v1464
          %v1721 = vunpack.c.l.s8.bf16 %v1465
          %v1722 = vunpack.c.l.s8.bf16 %v1466
          %v1723 = vunpack.c.l.s8.bf16 %v1467
          %v1724 = vunpack.c.l.s8.bf16 %v1468
          %v1725 = vunpack.c.l.s8.bf16 %v1469
          %v1726 = vunpack.c.l.s8.bf16 %v1470
          %v1727 = vunpack.c.h.s8.bf16 %v1463
          %v1728 = vunpack.c.h.s8.bf16 %v1464
          %v1729 = vunpack.c.h.s8.bf16 %v1465
          %v1730 = vunpack.c.h.s8.bf16 %v1466
          %v1731 = vunpack.c.h.s8.bf16 %v1467
          %v1732 = vunpack.c.h.s8.bf16 %v1468
          %v1733 = vunpack.c.h.s8.bf16 %v1469
          %v1734 = vunpack.c.h.s8.bf16 %v1470
          %v1735 = vunpack.c.l.s8.bf16 %v1471
          %v1736 = vunpack.c.l.s8.bf16 %v1472
          %v1737 = vunpack.c.l.s8.bf16 %v1473
          %v1738 = vunpack.c.l.s8.bf16 %v1474
          %v1739 = vunpack.c.l.s8.bf16 %v1475
          %v1740 = vunpack.c.l.s8.bf16 %v1476
          %v1741 = vunpack.c.l.s8.bf16 %v1477
          %v1742 = vunpack.c.l.s8.bf16 %v1478
          %v1743 = vunpack.c.h.s8.bf16 %v1471
          %v1744 = vunpack.c.h.s8.bf16 %v1472
          %v1745 = vunpack.c.h.s8.bf16 %v1473
          %v1746 = vunpack.c.h.s8.bf16 %v1474
          %v1747 = vunpack.c.h.s8.bf16 %v1475
          %v1748 = vunpack.c.h.s8.bf16 %v1476
          %v1749 = vunpack.c.h.s8.bf16 %v1477
          %v1750 = vunpack.c.h.s8.bf16 %v1478
          %v1751 = vunpack.c.l.s8.bf16 %v1479
          %v1752 = vunpack.c.l.s8.bf16 %v1480
          %v1753 = vunpack.c.l.s8.bf16 %v1481
          %v1754 = vunpack.c.l.s8.bf16 %v1482
          %v1755 = vunpack.c.l.s8.bf16 %v1483
          %v1756 = vunpack.c.l.s8.bf16 %v1484
          %v1757 = vunpack.c.l.s8.bf16 %v1485
          %v1758 = vunpack.c.l.s8.bf16 %v1486
          %v1759 = vunpack.c.h.s8.bf16 %v1479
          %v1760 = vunpack.c.h.s8.bf16 %v1480
          %v1761 = vunpack.c.h.s8.bf16 %v1481
          %v1762 = vunpack.c.h.s8.bf16 %v1482
          %v1763 = vunpack.c.h.s8.bf16 %v1483
          %v1764 = vunpack.c.h.s8.bf16 %v1484
          %v1765 = vunpack.c.h.s8.bf16 %v1485
          %v1766 = vunpack.c.h.s8.bf16 %v1486
          %v1767 = vunpack.c.l.s8.bf16 %v1487
          %v1768 = vunpack.c.l.s8.bf16 %v1488
          %v1769 = vunpack.c.l.s8.bf16 %v1489
          %v1770 = vunpack.c.l.s8.bf16 %v1490
          %v1771 = vunpack.c.l.s8.bf16 %v1491
          %v1772 = vunpack.c.l.s8.bf16 %v1492
          %v1773 = vunpack.c.l.s8.bf16 %v1493
          %v1774 = vunpack.c.l.s8.bf16 %v1494
          %v1775 = vunpack.c.h.s8.bf16 %v1487
          %v1776 = vunpack.c.h.s8.bf16 %v1488
          %v1777 = vunpack.c.h.s8.bf16 %v1489
          %v1778 = vunpack.c.h.s8.bf16 %v1490
          %v1779 = vunpack.c.h.s8.bf16 %v1491
          %v1780 = vunpack.c.h.s8.bf16 %v1492
          %v1781 = vunpack.c.h.s8.bf16 %v1493
          %v1782 = vunpack.c.h.s8.bf16 %v1494
          %v1783 = vunpack.c.l.s8.bf16 %v1495
          %v1784 = vunpack.c.l.s8.bf16 %v1496
          %v1785 = vunpack.c.l.s8.bf16 %v1497
          %v1786 = vunpack.c.l.s8.bf16 %v1498
          %v1787 = vunpack.c.l.s8.bf16 %v1499
          %v1788 = vunpack.c.l.s8.bf16 %v1500
          %v1789 = vunpack.c.l.s8.bf16 %v1501
          %v1790 = vunpack.c.l.s8.bf16 %v1502
          %v1791 = vunpack.c.h.s8.bf16 %v1495
          %v1792 = vunpack.c.h.s8.bf16 %v1496
          %v1793 = vunpack.c.h.s8.bf16 %v1497
          %v1794 = vunpack.c.h.s8.bf16 %v1498
          %v1795 = vunpack.c.h.s8.bf16 %v1499
          %v1796 = vunpack.c.h.s8.bf16 %v1500
          %v1797 = vunpack.c.h.s8.bf16 %v1501
          %v1798 = vunpack.c.h.s8.bf16 %v1502
          %v1799 = vunpack.c.l.s8.bf16 %v1503
          %v1800 = vunpack.c.l.s8.bf16 %v1504
          %v1801 = vunpack.c.l.s8.bf16 %v1505
          %v1802 = vunpack.c.l.s8.bf16 %v1506
          %v1803 = vunpack.c.l.s8.bf16 %v1507
          %v1804 = vunpack.c.l.s8.bf16 %v1508
          %v1805 = vunpack.c.l.s8.bf16 %v1509
          %v1806 = vunpack.c.l.s8.bf16 %v1510
          %v1807 = vunpack.c.h.s8.bf16 %v1503
          %v1808 = vunpack.c.h.s8.bf16 %v1504
          %v1809 = vunpack.c.h.s8.bf16 %v1505
          %v1810 = vunpack.c.h.s8.bf16 %v1506
          %v1811 = vunpack.c.h.s8.bf16 %v1507
          %v1812 = vunpack.c.h.s8.bf16 %v1508
          %v1813 = vunpack.c.h.s8.bf16 %v1509
          %v1814 = vunpack.c.h.s8.bf16 %v1510
          %v1815 = vunpack.c.l.s8.bf16 %v1511
          %v1816 = vunpack.c.l.s8.bf16 %v1512
          %v1817 = vunpack.c.l.s8.bf16 %v1513
          %v1818 = vunpack.c.l.s8.bf16 %v1514
          %v1819 = vunpack.c.l.s8.bf16 %v1515
          %v1820 = vunpack.c.l.s8.bf16 %v1516
          %v1821 = vunpack.c.l.s8.bf16 %v1517
          %v1822 = vunpack.c.l.s8.bf16 %v1518
          %v1823 = vunpack.c.h.s8.bf16 %v1511
          %v1824 = vunpack.c.h.s8.bf16 %v1512
          %v1825 = vunpack.c.h.s8.bf16 %v1513
          %v1826 = vunpack.c.h.s8.bf16 %v1514
          %v1827 = vunpack.c.h.s8.bf16 %v1515
          %v1828 = vunpack.c.h.s8.bf16 %v1516
          %v1829 = vunpack.c.h.s8.bf16 %v1517
          %v1830 = vunpack.c.h.s8.bf16 %v1518
          %v1831 = vunpack.c.l.s8.bf16 %v1519
          %v1832 = vunpack.c.l.s8.bf16 %v1520
          %v1833 = vunpack.c.l.s8.bf16 %v1521
          %v1834 = vunpack.c.l.s8.bf16 %v1522
          %v1835 = vunpack.c.l.s8.bf16 %v1523
          %v1836 = vunpack.c.l.s8.bf16 %v1524
          %v1837 = vunpack.c.l.s8.bf16 %v1525
          %v1838 = vunpack.c.l.s8.bf16 %v1526
          %v1839 = vunpack.c.h.s8.bf16 %v1519
          %v1840 = vunpack.c.h.s8.bf16 %v1520
          %v1841 = vunpack.c.h.s8.bf16 %v1521
          %v1842 = vunpack.c.h.s8.bf16 %v1522
          %v1843 = vunpack.c.h.s8.bf16 %v1523
          %v1844 = vunpack.c.h.s8.bf16 %v1524
          %v1845 = vunpack.c.h.s8.bf16 %v1525
          %v1846 = vunpack.c.h.s8.bf16 %v1526
          %v1847 = vunpack.c.l.s8.bf16 %v1527
          %v1848 = vunpack.c.l.s8.bf16 %v1528
          %v1849 = vunpack.c.l.s8.bf16 %v1529
          %v1850 = vunpack.c.l.s8.bf16 %v1530
          %v1851 = vunpack.c.l.s8.bf16 %v1531
          %v1852 = vunpack.c.l.s8.bf16 %v1532
          %v1853 = vunpack.c.l.s8.bf16 %v1533
          %v1854 = vunpack.c.l.s8.bf16 %v1534
          %v1855 = vunpack.c.h.s8.bf16 %v1527
          %v1856 = vunpack.c.h.s8.bf16 %v1528
          %v1857 = vunpack.c.h.s8.bf16 %v1529
          %v1858 = vunpack.c.h.s8.bf16 %v1530
          %v1859 = vunpack.c.h.s8.bf16 %v1531
          %v1860 = vunpack.c.h.s8.bf16 %v1532
          %v1861 = vunpack.c.h.s8.bf16 %v1533
          %v1862 = vunpack.c.h.s8.bf16 %v1534
          %v1863 = vunpack.c.l.s8.bf16 %v1535
          %v1864 = vunpack.c.l.s8.bf16 %v1536
          %v1865 = vunpack.c.l.s8.bf16 %v1537
          %v1866 = vunpack.c.l.s8.bf16 %v1538
          %v1867 = vunpack.c.l.s8.bf16 %v1539
          %v1868 = vunpack.c.l.s8.bf16 %v1540
          %v1869 = vunpack.c.l.s8.bf16 %v1541
          %v1870 = vunpack.c.l.s8.bf16 %v1542
          %v1871 = vunpack.c.h.s8.bf16 %v1535
          %v1872 = vunpack.c.h.s8.bf16 %v1536
          %v1873 = vunpack.c.h.s8.bf16 %v1537
          %v1874 = vunpack.c.h.s8.bf16 %v1538
          %v1875 = vunpack.c.h.s8.bf16 %v1539
          %v1876 = vunpack.c.h.s8.bf16 %v1540
          %v1877 = vunpack.c.h.s8.bf16 %v1541
          %v1878 = vunpack.c.h.s8.bf16 %v1542
          %v1879 = vunpack.c.l.s8.bf16 %v1543
          %v1880 = vunpack.c.l.s8.bf16 %v1544
          %v1881 = vunpack.c.l.s8.bf16 %v1545
          %v1882 = vunpack.c.l.s8.bf16 %v1546
          %v1883 = vunpack.c.l.s8.bf16 %v1547
          %v1884 = vunpack.c.l.s8.bf16 %v1548
          %v1885 = vunpack.c.l.s8.bf16 %v1549
          %v1886 = vunpack.c.l.s8.bf16 %v1550
          %v1887 = vunpack.c.h.s8.bf16 %v1543
          %v1888 = vunpack.c.h.s8.bf16 %v1544
          %v1889 = vunpack.c.h.s8.bf16 %v1545
          %v1890 = vunpack.c.h.s8.bf16 %v1546
          %v1891 = vunpack.c.h.s8.bf16 %v1547
          %v1892 = vunpack.c.h.s8.bf16 %v1548
          %v1893 = vunpack.c.h.s8.bf16 %v1549
          %v1894 = vunpack.c.h.s8.bf16 %v1550
          %v1895 = vunpack.c.l.s8.bf16 %v1551
          %v1896 = vunpack.c.l.s8.bf16 %v1552
          %v1897 = vunpack.c.l.s8.bf16 %v1553
          %v1898 = vunpack.c.l.s8.bf16 %v1554
          %v1899 = vunpack.c.l.s8.bf16 %v1555
          %v1900 = vunpack.c.l.s8.bf16 %v1556
          %v1901 = vunpack.c.l.s8.bf16 %v1557
          %v1902 = vunpack.c.l.s8.bf16 %v1558
          %v1903 = vunpack.c.h.s8.bf16 %v1551
          %v1904 = vunpack.c.h.s8.bf16 %v1552
          %v1905 = vunpack.c.h.s8.bf16 %v1553
          %v1906 = vunpack.c.h.s8.bf16 %v1554
          %v1907 = vunpack.c.h.s8.bf16 %v1555
          %v1908 = vunpack.c.h.s8.bf16 %v1556
          %v1909 = vunpack.c.h.s8.bf16 %v1557
          %v1910 = vunpack.c.h.s8.bf16 %v1558
          %v1911 = vunpack.c.l.s8.bf16 %v1559
          %v1912 = vunpack.c.l.s8.bf16 %v1560
          %v1913 = vunpack.c.l.s8.bf16 %v1561
          %v1914 = vunpack.c.l.s8.bf16 %v1562
          %v1915 = vunpack.c.l.s8.bf16 %v1563
          %v1916 = vunpack.c.l.s8.bf16 %v1564
          %v1917 = vunpack.c.l.s8.bf16 %v1565
          %v1918 = vunpack.c.l.s8.bf16 %v1566
          %v1919 = vunpack.c.h.s8.bf16 %v1559
          %v1920 = vunpack.c.h.s8.bf16 %v1560
          %v1921 = vunpack.c.h.s8.bf16 %v1561
          %v1922 = vunpack.c.h.s8.bf16 %v1562
          %v1923 = vunpack.c.h.s8.bf16 %v1563
          %v1924 = vunpack.c.h.s8.bf16 %v1564
          %v1925 = vunpack.c.h.s8.bf16 %v1565
          %v1926 = vunpack.c.h.s8.bf16 %v1566
          %v1927 = vunpack.c.l.s8.bf16 %v1567
          %v1928 = vunpack.c.l.s8.bf16 %v1568
          %v1929 = vunpack.c.l.s8.bf16 %v1569
          %v1930 = vunpack.c.l.s8.bf16 %v1570
          %v1931 = vunpack.c.l.s8.bf16 %v1571
          %v1932 = vunpack.c.l.s8.bf16 %v1572
          %v1933 = vunpack.c.l.s8.bf16 %v1573
          %v1934 = vunpack.c.l.s8.bf16 %v1574
          %v1935 = vunpack.c.h.s8.bf16 %v1567
          %v1936 = vunpack.c.h.s8.bf16 %v1568
          %v1937 = vunpack.c.h.s8.bf16 %v1569
          %v1938 = vunpack.c.h.s8.bf16 %v1570
          %v1939 = vunpack.c.h.s8.bf16 %v1571
          %v1940 = vunpack.c.h.s8.bf16 %v1572
          %v1941 = vunpack.c.h.s8.bf16 %v1573
          %v1942 = vunpack.c.h.s8.bf16 %v1574
          %v1943 = vunpack.c.l.s8.bf16 %v1575
          %v1944 = vunpack.c.l.s8.bf16 %v1576
          %v1945 = vunpack.c.l.s8.bf16 %v1577
          %v1946 = vunpack.c.l.s8.bf16 %v1578
          %v1947 = vunpack.c.l.s8.bf16 %v1579
          %v1948 = vunpack.c.l.s8.bf16 %v1580
          %v1949 = vunpack.c.l.s8.bf16 %v1581
          %v1950 = vunpack.c.l.s8.bf16 %v1582
          %v1951 = vunpack.c.h.s8.bf16 %v1575
          %v1952 = vunpack.c.h.s8.bf16 %v1576
          %v1953 = vunpack.c.h.s8.bf16 %v1577
          %v1954 = vunpack.c.h.s8.bf16 %v1578
          %v1955 = vunpack.c.h.s8.bf16 %v1579
          %v1956 = vunpack.c.h.s8.bf16 %v1580
          %v1957 = vunpack.c.h.s8.bf16 %v1581
          %v1958 = vunpack.c.h.s8.bf16 %v1582
          %v1959 = vunpack.c.l.s8.bf16 %v1583
          %v1960 = vunpack.c.l.s8.bf16 %v1584
          %v1961 = vunpack.c.l.s8.bf16 %v1585
          %v1962 = vunpack.c.l.s8.bf16 %v1586
          %v1963 = vunpack.c.l.s8.bf16 %v1587
          %v1964 = vunpack.c.l.s8.bf16 %v1588
          %v1965 = vunpack.c.l.s8.bf16 %v1589
          %v1966 = vunpack.c.l.s8.bf16 %v1590
          %v1967 = vunpack.c.h.s8.bf16 %v1583
          %v1968 = vunpack.c.h.s8.bf16 %v1584
          %v1969 = vunpack.c.h.s8.bf16 %v1585
          %v1970 = vunpack.c.h.s8.bf16 %v1586
          %v1971 = vunpack.c.h.s8.bf16 %v1587
          %v1972 = vunpack.c.h.s8.bf16 %v1588
          %v1973 = vunpack.c.h.s8.bf16 %v1589
          %v1974 = vunpack.c.h.s8.bf16 %v1590
          %v1975 = vunpack.c.l.s8.bf16 %v1591
          %v1976 = vunpack.c.l.s8.bf16 %v1592
          %v1977 = vunpack.c.l.s8.bf16 %v1593
          %v1978 = vunpack.c.l.s8.bf16 %v1594
          %v1979 = vunpack.c.l.s8.bf16 %v1595
          %v1980 = vunpack.c.l.s8.bf16 %v1596
          %v1981 = vunpack.c.l.s8.bf16 %v1597
          %v1982 = vunpack.c.l.s8.bf16 %v1598
          %v1983 = vunpack.c.h.s8.bf16 %v1591
          %v1984 = vunpack.c.h.s8.bf16 %v1592
          %v1985 = vunpack.c.h.s8.bf16 %v1593
          %v1986 = vunpack.c.h.s8.bf16 %v1594
          %v1987 = vunpack.c.h.s8.bf16 %v1595
          %v1988 = vunpack.c.h.s8.bf16 %v1596
          %v1989 = vunpack.c.h.s8.bf16 %v1597
          %v1990 = vunpack.c.h.s8.bf16 %v1598
          %v1991 = vunpack.c.l.s8.bf16 %v1599
          %v1992 = vunpack.c.l.s8.bf16 %v1600
          %v1993 = vunpack.c.l.s8.bf16 %v1601
          %v1994 = vunpack.c.l.s8.bf16 %v1602
          %v1995 = vunpack.c.l.s8.bf16 %v1603
          %v1996 = vunpack.c.l.s8.bf16 %v1604
          %v1997 = vunpack.c.l.s8.bf16 %v1605
          %v1998 = vunpack.c.l.s8.bf16 %v1606
          %v1999 = vunpack.c.h.s8.bf16 %v1599
          %v2000 = vunpack.c.h.s8.bf16 %v1600
          %v2001 = vunpack.c.h.s8.bf16 %v1601
          %v2002 = vunpack.c.h.s8.bf16 %v1602
          %v2003 = vunpack.c.h.s8.bf16 %v1603
          %v2004 = vunpack.c.h.s8.bf16 %v1604
          %v2005 = vunpack.c.h.s8.bf16 %v1605
          %v2006 = vunpack.c.h.s8.bf16 %v1606
          %v2007 = vunpack.c.l.s8.bf16 %v1607
          %v2008 = vunpack.c.l.s8.bf16 %v1608
          %v2009 = vunpack.c.l.s8.bf16 %v1609
          %v2010 = vunpack.c.l.s8.bf16 %v1610
          %v2011 = vunpack.c.l.s8.bf16 %v1611
          %v2012 = vunpack.c.l.s8.bf16 %v1612
          %v2013 = vunpack.c.l.s8.bf16 %v1613
          %v2014 = vunpack.c.l.s8.bf16 %v1614
          %v2015 = vunpack.c.h.s8.bf16 %v1607
          %v2016 = vunpack.c.h.s8.bf16 %v1608
          %v2017 = vunpack.c.h.s8.bf16 %v1609
          %v2018 = vunpack.c.h.s8.bf16 %v1610
          %v2019 = vunpack.c.h.s8.bf16 %v1611
          %v2020 = vunpack.c.h.s8.bf16 %v1612
          %v2021 = vunpack.c.h.s8.bf16 %v1613
          %v2022 = vunpack.c.h.s8.bf16 %v1614
          %v2023 = vunpack.c.l.s8.bf16 %v1615
          %v2024 = vunpack.c.l.s8.bf16 %v1616
          %v2025 = vunpack.c.l.s8.bf16 %v1617
          %v2026 = vunpack.c.l.s8.bf16 %v1618
          %v2027 = vunpack.c.l.s8.bf16 %v1619
          %v2028 = vunpack.c.l.s8.bf16 %v1620
          %v2029 = vunpack.c.l.s8.bf16 %v1621
          %v2030 = vunpack.c.l.s8.bf16 %v1622
          %v2031 = vunpack.c.h.s8.bf16 %v1615
          %v2032 = vunpack.c.h.s8.bf16 %v1616
          %v2033 = vunpack.c.h.s8.bf16 %v1617
          %v2034 = vunpack.c.h.s8.bf16 %v1618
          %v2035 = vunpack.c.h.s8.bf16 %v1619
          %v2036 = vunpack.c.h.s8.bf16 %v1620
          %v2037 = vunpack.c.h.s8.bf16 %v1621
          %v2038 = vunpack.c.h.s8.bf16 %v1622
          %v2039 = vunpack.c.l.s8.bf16 %v1623
          %v2040 = vunpack.c.l.s8.bf16 %v1624
          %v2041 = vunpack.c.l.s8.bf16 %v1625
          %v2042 = vunpack.c.l.s8.bf16 %v1626
          %v2043 = vunpack.c.l.s8.bf16 %v1627
          %v2044 = vunpack.c.l.s8.bf16 %v1628
          %v2045 = vunpack.c.l.s8.bf16 %v1629
          %v2046 = vunpack.c.l.s8.bf16 %v1630
          %v2047 = vunpack.c.h.s8.bf16 %v1623
          %v2048 = vunpack.c.h.s8.bf16 %v1624
          %v2049 = vunpack.c.h.s8.bf16 %v1625
          %v2050 = vunpack.c.h.s8.bf16 %v1626
          %v2051 = vunpack.c.h.s8.bf16 %v1627
          %v2052 = vunpack.c.h.s8.bf16 %v1628
          %v2053 = vunpack.c.h.s8.bf16 %v1629
          %v2054 = vunpack.c.h.s8.bf16 %v1630
          %v2055 = vunpack.c.l.s8.bf16 %v1631
          %v2056 = vunpack.c.l.s8.bf16 %v1632
          %v2057 = vunpack.c.l.s8.bf16 %v1633
          %v2058 = vunpack.c.l.s8.bf16 %v1634
          %v2059 = vunpack.c.l.s8.bf16 %v1635
          %v2060 = vunpack.c.l.s8.bf16 %v1636
          %v2061 = vunpack.c.l.s8.bf16 %v1637
          %v2062 = vunpack.c.l.s8.bf16 %v1638
          %v2063 = vunpack.c.h.s8.bf16 %v1631
          %v2064 = vunpack.c.h.s8.bf16 %v1632
          %v2065 = vunpack.c.h.s8.bf16 %v1633
          %v2066 = vunpack.c.h.s8.bf16 %v1634
          %v2067 = vunpack.c.h.s8.bf16 %v1635
          %v2068 = vunpack.c.h.s8.bf16 %v1636
          %v2069 = vunpack.c.h.s8.bf16 %v1637
          %v2070 = vunpack.c.h.s8.bf16 %v1638
          %v2071 = vunpack.c.l.s8.bf16 %v1639
          %v2072 = vunpack.c.l.s8.bf16 %v1640
          %v2073 = vunpack.c.l.s8.bf16 %v1641
          %v2074 = vunpack.c.l.s8.bf16 %v1642
          %v2075 = vunpack.c.l.s8.bf16 %v1643
          %v2076 = vunpack.c.l.s8.bf16 %v1644
          %v2077 = vunpack.c.l.s8.bf16 %v1645
          %v2078 = vunpack.c.l.s8.bf16 %v1646
          %v2079 = vunpack.c.h.s8.bf16 %v1639
          %v2080 = vunpack.c.h.s8.bf16 %v1640
          %v2081 = vunpack.c.h.s8.bf16 %v1641
          %v2082 = vunpack.c.h.s8.bf16 %v1642
          %v2083 = vunpack.c.h.s8.bf16 %v1643
          %v2084 = vunpack.c.h.s8.bf16 %v1644
          %v2085 = vunpack.c.h.s8.bf16 %v1645
          %v2086 = vunpack.c.h.s8.bf16 %v1646
          %v2087 = vunpack.c.l.s8.bf16 %v1647
          %v2088 = vunpack.c.l.s8.bf16 %v1648
          %v2089 = vunpack.c.l.s8.bf16 %v1649
          %v2090 = vunpack.c.l.s8.bf16 %v1650
          %v2091 = vunpack.c.l.s8.bf16 %v1651
          %v2092 = vunpack.c.l.s8.bf16 %v1652
          %v2093 = vunpack.c.l.s8.bf16 %v1653
          %v2094 = vunpack.c.l.s8.bf16 %v1654
          %v2095 = vunpack.c.h.s8.bf16 %v1647
          %v2096 = vunpack.c.h.s8.bf16 %v1648
          %v2097 = vunpack.c.h.s8.bf16 %v1649
          %v2098 = vunpack.c.h.s8.bf16 %v1650
          %v2099 = vunpack.c.h.s8.bf16 %v1651
          %v2100 = vunpack.c.h.s8.bf16 %v1652
          %v2101 = vunpack.c.h.s8.bf16 %v1653
          %v2102 = vunpack.c.h.s8.bf16 %v1654
          %v2103 = vunpack.c.l.s8.bf16 %v1655
          %v2104 = vunpack.c.l.s8.bf16 %v1656
          %v2105 = vunpack.c.l.s8.bf16 %v1657
          %v2106 = vunpack.c.l.s8.bf16 %v1658
          %v2107 = vunpack.c.l.s8.bf16 %v1659
          %v2108 = vunpack.c.l.s8.bf16 %v1660
          %v2109 = vunpack.c.l.s8.bf16 %v1661
          %v2110 = vunpack.c.l.s8.bf16 %v1662
          %v2111 = vunpack.c.h.s8.bf16 %v1655
          %v2112 = vunpack.c.h.s8.bf16 %v1656
          %v2113 = vunpack.c.h.s8.bf16 %v1657
          %v2114 = vunpack.c.h.s8.bf16 %v1658
          %v2115 = vunpack.c.h.s8.bf16 %v1659
          %v2116 = vunpack.c.h.s8.bf16 %v1660
          %v2117 = vunpack.c.h.s8.bf16 %v1661
          %v2118 = vunpack.c.h.s8.bf16 %v1662
          %v2119 = vunpack.c.l.s8.bf16 %v1663
          %v2120 = vunpack.c.l.s8.bf16 %v1664
          %v2121 = vunpack.c.l.s8.bf16 %v1665
          %v2122 = vunpack.c.l.s8.bf16 %v1666
          %v2123 = vunpack.c.l.s8.bf16 %v1667
          %v2124 = vunpack.c.l.s8.bf16 %v1668
          %v2125 = vunpack.c.l.s8.bf16 %v1669
          %v2126 = vunpack.c.l.s8.bf16 %v1670
          %v2127 = vunpack.c.h.s8.bf16 %v1663
          %v2128 = vunpack.c.h.s8.bf16 %v1664
          %v2129 = vunpack.c.h.s8.bf16 %v1665
          %v2130 = vunpack.c.h.s8.bf16 %v1666
          %v2131 = vunpack.c.h.s8.bf16 %v1667
          %v2132 = vunpack.c.h.s8.bf16 %v1668
          %v2133 = vunpack.c.h.s8.bf16 %v1669
          %v2134 = vunpack.c.h.s8.bf16 %v1670
          %v2135 = vunpack.c.l.s8.bf16 %v1671
          %v2136 = vunpack.c.l.s8.bf16 %v1672
          %v2137 = vunpack.c.l.s8.bf16 %v1673
          %v2138 = vunpack.c.l.s8.bf16 %v1674
          %v2139 = vunpack.c.l.s8.bf16 %v1675
          %v2140 = vunpack.c.l.s8.bf16 %v1676
          %v2141 = vunpack.c.l.s8.bf16 %v1677
          %v2142 = vunpack.c.l.s8.bf16 %v1678
          %v2143 = vunpack.c.h.s8.bf16 %v1671
          %v2144 = vunpack.c.h.s8.bf16 %v1672
          %v2145 = vunpack.c.h.s8.bf16 %v1673
          %v2146 = vunpack.c.h.s8.bf16 %v1674
          %v2147 = vunpack.c.h.s8.bf16 %v1675
          %v2148 = vunpack.c.h.s8.bf16 %v1676
          %v2149 = vunpack.c.h.s8.bf16 %v1677
          %v2150 = vunpack.c.h.s8.bf16 %v1678
          %v2151 = vunpack.c.l.s8.bf16 %v1679
          %v2152 = vunpack.c.l.s8.bf16 %v1680
          %v2153 = vunpack.c.l.s8.bf16 %v1681
          %v2154 = vunpack.c.l.s8.bf16 %v1682
          %v2155 = vunpack.c.l.s8.bf16 %v1683
          %v2156 = vunpack.c.l.s8.bf16 %v1684
          %v2157 = vunpack.c.l.s8.bf16 %v1685
          %v2158 = vunpack.c.l.s8.bf16 %v1686
          %v2159 = vunpack.c.h.s8.bf16 %v1679
          %v2160 = vunpack.c.h.s8.bf16 %v1680
          %v2161 = vunpack.c.h.s8.bf16 %v1681
          %v2162 = vunpack.c.h.s8.bf16 %v1682
          %v2163 = vunpack.c.h.s8.bf16 %v1683
          %v2164 = vunpack.c.h.s8.bf16 %v1684
          %v2165 = vunpack.c.h.s8.bf16 %v1685
          %v2166 = vunpack.c.h.s8.bf16 %v1686
          %v2167 = vunpack.c.l.s8.bf16 %v1687
          %v2168 = vunpack.c.l.s8.bf16 %v1688
          %v2169 = vunpack.c.l.s8.bf16 %v1689
          %v2170 = vunpack.c.l.s8.bf16 %v1690
          %v2171 = vunpack.c.l.s8.bf16 %v1691
          %v2172 = vunpack.c.l.s8.bf16 %v1692
          %v2173 = vunpack.c.l.s8.bf16 %v1693
          %v2174 = vunpack.c.l.s8.bf16 %v1694
          %v2175 = vunpack.c.h.s8.bf16 %v1687
          %v2176 = vunpack.c.h.s8.bf16 %v1688
          %v2177 = vunpack.c.h.s8.bf16 %v1689
          %v2178 = vunpack.c.h.s8.bf16 %v1690
          %v2179 = vunpack.c.h.s8.bf16 %v1691
          %v2180 = vunpack.c.h.s8.bf16 %v1692
          %v2181 = vunpack.c.h.s8.bf16 %v1693
          %v2182 = vunpack.c.h.s8.bf16 %v1694
          %v2183 = vunpack.c.l.s8.bf16 %v1695
          %v2184 = vunpack.c.l.s8.bf16 %v1696
          %v2185 = vunpack.c.l.s8.bf16 %v1697
          %v2186 = vunpack.c.l.s8.bf16 %v1698
          %v2187 = vunpack.c.l.s8.bf16 %v1699
          %v2188 = vunpack.c.l.s8.bf16 %v1700
          %v2189 = vunpack.c.l.s8.bf16 %v1701
          %v2190 = vunpack.c.l.s8.bf16 %v1702
          %v2191 = vunpack.c.h.s8.bf16 %v1695
          %v2192 = vunpack.c.h.s8.bf16 %v1696
          %v2193 = vunpack.c.h.s8.bf16 %v1697
          %v2194 = vunpack.c.h.s8.bf16 %v1698
          %v2195 = vunpack.c.h.s8.bf16 %v1699
          %v2196 = vunpack.c.h.s8.bf16 %v1700
          %v2197 = vunpack.c.h.s8.bf16 %v1701
          %v2198 = vunpack.c.h.s8.bf16 %v1702
          %v2199 = vunpack.c.l.s8.bf16 %v1703
          %v2200 = vunpack.c.l.s8.bf16 %v1704
          %v2201 = vunpack.c.l.s8.bf16 %v1705
          %v2202 = vunpack.c.l.s8.bf16 %v1706
          %v2203 = vunpack.c.l.s8.bf16 %v1707
          %v2204 = vunpack.c.l.s8.bf16 %v1708
          %v2205 = vunpack.c.l.s8.bf16 %v1709
          %v2206 = vunpack.c.l.s8.bf16 %v1710
          %v2207 = vunpack.c.h.s8.bf16 %v1703
          %v2208 = vunpack.c.h.s8.bf16 %v1704
          %v2209 = vunpack.c.h.s8.bf16 %v1705
          %v2210 = vunpack.c.h.s8.bf16 %v1706
          %v2211 = vunpack.c.h.s8.bf16 %v1707
          %v2212 = vunpack.c.h.s8.bf16 %v1708
          %v2213 = vunpack.c.h.s8.bf16 %v1709
          %v2214 = vunpack.c.h.s8.bf16 %v1710
          %v2215 = vunpack.c.l.s8.bf16 %v1711
          %v2216 = vunpack.c.l.s8.bf16 %v1712
          %v2217 = vunpack.c.l.s8.bf16 %v1713
          %v2218 = vunpack.c.l.s8.bf16 %v1714
          %v2219 = vunpack.c.l.s8.bf16 %v1715
          %v2220 = vunpack.c.l.s8.bf16 %v1716
          %v2221 = vunpack.c.l.s8.bf16 %v1717
          %v2222 = vunpack.c.l.s8.bf16 %v1718
          %v2223 = vunpack.c.h.s8.bf16 %v1711
          %v2224 = vunpack.c.h.s8.bf16 %v1712
          %v2225 = vunpack.c.h.s8.bf16 %v1713
          %v2226 = vunpack.c.h.s8.bf16 %v1714
          %v2227 = vunpack.c.h.s8.bf16 %v1715
          %v2228 = vunpack.c.h.s8.bf16 %v1716
          %v2229 = vunpack.c.h.s8.bf16 %v1717
          %v2230 = vunpack.c.h.s8.bf16 %v1718
          %2231 = vmatprep.subr.bf16.mxu0 %v1720
          %2232 = vmatpush1.bf16.msra.mxu0 %v1719
          %2233 = vmatprep.subr.bf16.mxu0 %v1728
          %2234 = vmatpush1.bf16.msra.mxu0 %v1727
          %2235 = vmatprep.subr.bf16.mxu0 %v1736
          %2236 = vmatpush1.bf16.msra.mxu0 %v1735
          %2237 = vmatprep.subr.bf16.mxu0 %v1744
          %2238 = vmatpush1.bf16.msra.mxu0 %v1743
          %2239 = vmatprep.subr.bf16.mxu0 %v1752
          %2240 = vmatpush1.bf16.msra.mxu0 %v1751
          %2241 = vmatprep.subr.bf16.mxu0 %v1760
          %2242 = vmatpush1.bf16.msra.mxu0 %v1759
          %2243 = vmatprep.subr.bf16.mxu0 %v1768
          %2244 = vmatpush1.bf16.msra.mxu0 %v1767
          %2245 = vmatprep.subr.bf16.mxu0 %v1776
          %2246 = vmatpush1.bf16.msra.mxu0 %v1775
          %2247 = vmatprep.subr.bf16.mxu0 %v1784
          %2248 = vmatpush1.bf16.msra.mxu0 %v1783
          %2249 = vmatprep.subr.bf16.mxu0 %v1792
          %2250 = vmatpush1.bf16.msra.mxu0 %v1791
          %2251 = vmatprep.subr.bf16.mxu0 %v1800
          %2252 = vmatpush1.bf16.msra.mxu0 %v1799
          %2253 = vmatprep.subr.bf16.mxu0 %v1808
          %2254 = vmatpush1.bf16.msra.mxu0 %v1807
          %2255 = vmatprep.subr.bf16.mxu0 %v1816
          %2256 = vmatpush1.bf16.msra.mxu0 %v1815
          %2257 = vmatprep.subr.bf16.mxu0 %v1824
          %2258 = vmatpush1.bf16.msra.mxu0 %v1823
          %2259 = vmatprep.subr.bf16.mxu0 %v1832
          %2260 = vmatpush1.bf16.msra.mxu0 %v1831
          %2261 = vmatprep.subr.bf16.mxu0 %v1840
          %2262 = vmatpush1.bf16.msra.mxu0 %v1839
          %2263 = vmatprep.mubr.bf16.mxu0 %v1456
          %2264 = vmatmul.mubr.bf16.gmra.mrb[0].mxu0 %v1455
          %v2265 = vpop.f32.mrb[0].mxu0
          %v2266 = vadd.f32 0.0, %v2265
          %v2267 = vpop.f32.mrb[0].mxu0
          %v2268 = vadd.f32 0.0, %v2267
          %v2269 = vpop.f32.mrb[0].mxu0
          %v2270 = vadd.f32 0.0, %v2269
          %v2271 = vpop.f32.mrb[0].mxu0
          %v2272 = vadd.f32 0.0, %v2271
          %2273 = vdwg.mxu0
          %2274 = vmatprep.subr.bf16.mxu0 %v1848
          %2275 = vmatpush1.bf16.msra.mxu0 %v1847
          %2276 = vmatprep.subr.bf16.mxu0 %v1856
          %2277 = vmatpush1.bf16.msra.mxu0 %v1855
          %2278 = vmatprep.subr.bf16.mxu0 %v1864
          %2279 = vmatpush1.bf16.msra.mxu0 %v1863
          %2280 = vmatprep.subr.bf16.mxu0 %v1872
          %2281 = vmatpush1.bf16.msra.mxu0 %v1871
          %2282 = vmatprep.subr.bf16.mxu0 %v1880
          %2283 = vmatpush1.bf16.msra.mxu0 %v1879
          %2284 = vmatprep.subr.bf16.mxu0 %v1888
          %2285 = vmatpush1.bf16.msra.mxu0 %v1887
          %2286 = vmatprep.subr.bf16.mxu0 %v1896
          %2287 = vmatpush1.bf16.msra.mxu0 %v1895
          %2288 = vmatprep.subr.bf16.mxu0 %v1904
          %2289 = vmatpush1.bf16.msra.mxu0 %v1903
          %2290 = vmatprep.subr.bf16.mxu0 %v1912
          %2291 = vmatpush1.bf16.msra.mxu0 %v1911
          %2292 = vmatprep.subr.bf16.mxu0 %v1920
          %2293 = vmatpush1.bf16.msra.mxu0 %v1919
          %2294 = vmatprep.subr.bf16.mxu0 %v1928
          %2295 = vmatpush1.bf16.msra.mxu0 %v1927
          %2296 = vmatprep.subr.bf16.mxu0 %v1936
          %2297 = vmatpush1.bf16.msra.mxu0 %v1935
          %2298 = vmatprep.subr.bf16.mxu0 %v1944
          %2299 = vmatpush1.bf16.msra.mxu0 %v1943
          %2300 = vmatprep.subr.bf16.mxu0 %v1952
          %2301 = vmatpush1.bf16.msra.mxu0 %v1951
          %2302 = vmatprep.subr.bf16.mxu0 %v1960
          %2303 = vmatpush1.bf16.msra.mxu0 %v1959
          %2304 = vmatprep.subr.bf16.mxu0 %v1968
          %2305 = vmatpush1.bf16.msra.mxu0 %v1967
          %2306 = vmatprep.mubr.bf16.mxu0 %v1458
          %2307 = vmatmul.mubr.bf16.gmra.mrb[0].mxu0 %v1457
          %v2308 = vpop.f32.mrb[0].mxu0
          %v2309 = vadd.f32 %v2266, %v2308
          %v2310 = vpop.f32.mrb[0].mxu0
          %v2311 = vadd.f32 %v2268, %v2310
          %v2312 = vpop.f32.mrb[0].mxu0
          %v2313 = vadd.f32 %v2270, %v2312
          %v2314 = vpop.f32.mrb[0].mxu0
          %v2315 = vadd.f32 %v2272, %v2314
          %2316 = vdwg.mxu0
          %2317 = vmatprep.subr.bf16.mxu0 %v1976
          %2318 = vmatpush1.bf16.msra.mxu0 %v1975
          %2319 = vmatprep.subr.bf16.mxu0 %v1984
          %2320 = vmatpush1.bf16.msra.mxu0 %v1983
          %2321 = vmatprep.subr.bf16.mxu0 %v1992
          %2322 = vmatpush1.bf16.msra.mxu0 %v1991
          %2323 = vmatprep.subr.bf16.mxu0 %v2000
          %2324 = vmatpush1.bf16.msra.mxu0 %v1999
          %2325 = vmatprep.subr.bf16.mxu0 %v2008
          %2326 = vmatpush1.bf16.msra.mxu0 %v2007
          %2327 = vmatprep.subr.bf16.mxu0 %v2016
          %2328 = vmatpush1.bf16.msra.mxu0 %v2015
          %2329 = vmatprep.subr.bf16.mxu0 %v2024
          %2330 = vmatpush1.bf16.msra.mxu0 %v2023
          %2331 = vmatprep.subr.bf16.mxu0 %v2032
          %2332 = vmatpush1.bf16.msra.mxu0 %v2031
          %2333 = vmatprep.subr.bf16.mxu0 %v2040
          %2334 = vmatpush1.bf16.msra.mxu0 %v2039
          %2335 = vmatprep.subr.bf16.mxu0 %v2048
          %2336 = vmatpush1.bf16.msra.mxu0 %v2047
          %2337 = vmatprep.subr.bf16.mxu0 %v2056
          %2338 = vmatpush1.bf16.msra.mxu0 %v2055
          %2339 = vmatprep.subr.bf16.mxu0 %v2064
          %2340 = vmatpush1.bf16.msra.mxu0 %v2063
          %2341 = vmatprep.subr.bf16.mxu0 %v2072
          %2342 = vmatpush1.bf16.msra.mxu0 %v2071
          %2343 = vmatprep.subr.bf16.mxu0 %v2080
          %2344 = vmatpush1.bf16.msra.mxu0 %v2079
          %2345 = vmatprep.subr.bf16.mxu0 %v2088
          %2346 = vmatpush1.bf16.msra.mxu0 %v2087
          %2347 = vmatprep.subr.bf16.mxu0 %v2096
          %2348 = vmatpush1.bf16.msra.mxu0 %v2095
          %2349 = vmatprep.mubr.bf16.mxu0 %v1460
          %2350 = vmatmul.mubr.bf16.gmra.mrb[0].mxu0 %v1459
          %v2351 = vpop.f32.mrb[0].mxu0
          %v2352 = vadd.f32 %v2309, %v2351
          %v2353 = vpop.f32.mrb[0].mxu0
          %v2354 = vadd.f32 %v2311, %v2353
          %v2355 = vpop.f32.mrb[0].mxu0
          %v2356 = vadd.f32 %v2313, %v2355
          %v2357 = vpop.f32.mrb[0].mxu0
          %v2358 = vadd.f32 %v2315, %v2357
          %2359 = vdwg.mxu0
          %2360 = vmatprep.subr.bf16.mxu0 %v2104
          %2361 = vmatpush1.bf16.msra.mxu0 %v2103
          %2362 = vmatprep.subr.bf16.mxu0 %v2112
          %2363 = vmatpush1.bf16.msra.mxu0 %v2111
          %2364 = vmatprep.subr.bf16.mxu0 %v2120
          %2365 = vmatpush1.bf16.msra.mxu0 %v2119
          %2366 = vmatprep.subr.bf16.mxu0 %v2128
          %2367 = vmatpush1.bf16.msra.mxu0 %v2127
          %2368 = vmatprep.subr.bf16.mxu0 %v2136
          %2369 = vmatpush1.bf16.msra.mxu0 %v2135
          %2370 = vmatprep.subr.bf16.mxu0 %v2144
          %2371 = vmatpush1.bf16.msra.mxu0 %v2143
          %2372 = vmatprep.subr.bf16.mxu0 %v2152
          %2373 = vmatpush1.bf16.msra.mxu0 %v2151
          %2374 = vmatprep.subr.bf16.mxu0 %v2160
          %2375 = vmatpush1.bf16.msra.mxu0 %v2159
          %2376 = vmatprep.subr.bf16.mxu0 %v2168
          %2377 = vmatpush1.bf16.msra.mxu0 %v2167
          %2378 = vmatprep.subr.bf16.mxu0 %v2176
          %2379 = vmatpush1.bf16.msra.mxu0 %v2175
          %2380 = vmatprep.subr.bf16.mxu0 %v2184
          %2381 = vmatpush1.bf16.msra.mxu0 %v2183
          %2382 = vmatprep.subr.bf16.mxu0 %v2192
          %2383 = vmatpush1.bf16.msra.mxu0 %v2191
          %2384 = vmatprep.subr.bf16.mxu0 %v2200
          %2385 = vmatpush1.bf16.msra.mxu0 %v2199
          %2386 = vmatprep.subr.bf16.mxu0 %v2208
          %2387 = vmatpush1.bf16.msra.mxu0 %v2207
          %2388 = vmatprep.subr.bf16.mxu0 %v2216
          %2389 = vmatpush1.bf16.msra.mxu0 %v2215
          %2390 = vmatprep.subr.bf16.mxu0 %v2224
          %2391 = vmatpush1.bf16.msra.mxu0 %v2223
          %2392 = vmatprep.mubr.bf16.mxu0 %v1462
          %2393 = vmatmul.mubr.bf16.gmra.mrb[0].mxu0 %v1461
          %v2394 = vpop.f32.mrb[0].mxu0
          %v2395 = vadd.f32 %v2352, %v2394
          %v2396 = vpop.f32.mrb[0].mxu0
          %v2397 = vadd.f32 %v2354, %v2396
          %v2398 = vpop.f32.mrb[0].mxu0
          %v2399 = vadd.f32 %v2356, %v2398
          %v2400 = vpop.f32.mrb[0].mxu0
          %v2401 = vadd.f32 %v2358, %v2400
          %2402 = vdwg.mxu0
          %2403 = vmatprep.subr.bf16.mxu0 %v1722
          %2404 = vmatpush1.bf16.msra.mxu0 %v1721
          %2405 = vmatprep.subr.bf16.mxu0 %v1730
          %2406 = vmatpush1.bf16.msra.mxu0 %v1729
          %2407 = vmatprep.subr.bf16.mxu0 %v1738
          %2408 = vmatpush1.bf16.msra.mxu0 %v1737
          %2409 = vmatprep.subr.bf16.mxu0 %v1746
          %2410 = vmatpush1.bf16.msra.mxu0 %v1745
          %2411 = vmatprep.subr.bf16.mxu0 %v1754
          %2412 = vmatpush1.bf16.msra.mxu0 %v1753
          %2413 = vmatprep.subr.bf16.mxu0 %v1762
          %2414 = vmatpush1.bf16.msra.mxu0 %v1761
          %2415 = vmatprep.subr.bf16.mxu0 %v1770
          %2416 = vmatpush1.bf16.msra.mxu0 %v1769
          %2417 = vmatprep.subr.bf16.mxu0 %v1778
          %2418 = vmatpush1.bf16.msra.mxu0 %v1777
          %2419 = vmatprep.subr.bf16.mxu0 %v1786
          %2420 = vmatpush1.bf16.msra.mxu0 %v1785
          %2421 = vmatprep.subr.bf16.mxu0 %v1794
          %2422 = vmatpush1.bf16.msra.mxu0 %v1793
          %2423 = vmatprep.subr.bf16.mxu0 %v1802
          %2424 = vmatpush1.bf16.msra.mxu0 %v1801
          %2425 = vmatprep.subr.bf16.mxu0 %v1810
          %2426 = vmatpush1.bf16.msra.mxu0 %v1809
          %2427 = vmatprep.subr.bf16.mxu0 %v1818
          %2428 = vmatpush1.bf16.msra.mxu0 %v1817
          %2429 = vmatprep.subr.bf16.mxu0 %v1826
          %2430 = vmatpush1.bf16.msra.mxu0 %v1825
          %2431 = vmatprep.subr.bf16.mxu0 %v1834
          %2432 = vmatpush1.bf16.msra.mxu0 %v1833
          %2433 = vmatprep.subr.bf16.mxu0 %v1842
          %2434 = vmatpush1.bf16.msra.mxu0 %v1841
          %2435 = vmatprep.mubr.bf16.mxu0 %v1456
          %2436 = vmatmul.mubr.bf16.gmra.mrb[0].mxu0 %v1455
          %v2437 = vpop.f32.mrb[0].mxu0
          %v2438 = vadd.f32 0.0, %v2437
          %v2439 = vpop.f32.mrb[0].mxu0
          %v2440 = vadd.f32 0.0, %v2439
          %v2441 = vpop.f32.mrb[0].mxu0
          %v2442 = vadd.f32 0.0, %v2441
          %v2443 = vpop.f32.mrb[0].mxu0
          %v2444 = vadd.f32 0.0, %v2443
          %2445 = vdwg.mxu0
          %2446 = vmatprep.subr.bf16.mxu0 %v1850
          %2447 = vmatpush1.bf16.msra.mxu0 %v1849
          %2448 = vmatprep.subr.bf16.mxu0 %v1858
          %2449 = vmatpush1.bf16.msra.mxu0 %v1857
          %2450 = vmatprep.subr.bf16.mxu0 %v1866
          %2451 = vmatpush1.bf16.msra.mxu0 %v1865
          %2452 = vmatprep.subr.bf16.mxu0 %v1874
          %2453 = vmatpush1.bf16.msra.mxu0 %v1873
          %2454 = vmatprep.subr.bf16.mxu0 %v1882
          %2455 = vmatpush1.bf16.msra.mxu0 %v1881
          %2456 = vmatprep.subr.bf16.mxu0 %v1890
          %2457 = vmatpush1.bf16.msra.mxu0 %v1889
          %2458 = vmatprep.subr.bf16.mxu0 %v1898
          %2459 = vmatpush1.bf16.msra.mxu0 %v1897
          %2460 = vmatprep.subr.bf16.mxu0 %v1906
          %2461 = vmatpush1.bf16.msra.mxu0 %v1905
          %2462 = vmatprep.subr.bf16.mxu0 %v1914
          %2463 = vmatpush1.bf16.msra.mxu0 %v1913
          %2464 = vmatprep.subr.bf16.mxu0 %v1922
          %2465 = vmatpush1.bf16.msra.mxu0 %v1921
          %2466 = vmatprep.subr.bf16.mxu0 %v1930
          %2467 = vmatpush1.bf16.msra.mxu0 %v1929
          %2468 = vmatprep.subr.bf16.mxu0 %v1938
          %2469 = vmatpush1.bf16.msra.mxu0 %v1937
          %2470 = vmatprep.subr.bf16.mxu0 %v1946
          %2471 = vmatpush1.bf16.msra.mxu0 %v1945
          %2472 = vmatprep.subr.bf16.mxu0 %v1954
          %2473 = vmatpush1.bf16.msra.mxu0 %v1953
          %2474 = vmatprep.subr.bf16.mxu0 %v1962
          %2475 = vmatpush1.bf16.msra.mxu0 %v1961
          %2476 = vmatprep.subr.bf16.mxu0 %v1970
          %2477 = vmatpush1.bf16.msra.mxu0 %v1969
          %2478 = vmatprep.mubr.bf16.mxu0 %v1458
          %2479 = vmatmul.mubr.bf16.gmra.mrb[0].mxu0 %v1457
          %v2480 = vpop.f32.mrb[0].mxu0
          %v2481 = vadd.f32 %v2438, %v2480
          %v2482 = vpop.f32.mrb[0].mxu0
          %v2483 = vadd.f32 %v2440, %v2482
          %v2484 = vpop.f32.mrb[0].mxu0
          %v2485 = vadd.f32 %v2442, %v2484
          %v2486 = vpop.f32.mrb[0].mxu0
          %v2487 = vadd.f32 %v2444, %v2486
          %2488 = vdwg.mxu0
          %2489 = vmatprep.subr.bf16.mxu0 %v1978
          %2490 = vmatpush1.bf16.msra.mxu0 %v1977
          %2491 = vmatprep.subr.bf16.mxu0 %v1986
          %2492 = vmatpush1.bf16.msra.mxu0 %v1985
          %2493 = vmatprep.subr.bf16.mxu0 %v1994
          %2494 = vmatpush1.bf16.msra.mxu0 %v1993
          %2495 = vmatprep.subr.bf16.mxu0 %v2002
          %2496 = vmatpush1.bf16.msra.mxu0 %v2001
          %2497 = vmatprep.subr.bf16.mxu0 %v2010
          %2498 = vmatpush1.bf16.msra.mxu0 %v2009
          %2499 = vmatprep.subr.bf16.mxu0 %v2018
          %2500 = vmatpush1.bf16.msra.mxu0 %v2017
          %2501 = vmatprep.subr.bf16.mxu0 %v2026
          %2502 = vmatpush1.bf16.msra.mxu0 %v2025
          %2503 = vmatprep.subr.bf16.mxu0 %v2034
          %2504 = vmatpush1.bf16.msra.mxu0 %v2033
          %2505 = vmatprep.subr.bf16.mxu0 %v2042
          %2506 = vmatpush1.bf16.msra.mxu0 %v2041
          %2507 = vmatprep.subr.bf16.mxu0 %v2050
          %2508 = vmatpush1.bf16.msra.mxu0 %v2049
          %2509 = vmatprep.subr.bf16.mxu0 %v2058
          %2510 = vmatpush1.bf16.msra.mxu0 %v2057
          %2511 = vmatprep.subr.bf16.mxu0 %v2066
          %2512 = vmatpush1.bf16.msra.mxu0 %v2065
          %2513 = vmatprep.subr.bf16.mxu0 %v2074
          %2514 = vmatpush1.bf16.msra.mxu0 %v2073
          %2515 = vmatprep.subr.bf16.mxu0 %v2082
          %2516 = vmatpush1.bf16.msra.mxu0 %v2081
          %2517 = vmatprep.subr.bf16.mxu0 %v2090
          %2518 = vmatpush1.bf16.msra.mxu0 %v2089
          %2519 = vmatprep.subr.bf16.mxu0 %v2098
          %2520 = vmatpush1.bf16.msra.mxu0 %v2097
          %2521 = vmatprep.mubr.bf16.mxu0 %v1460
          %2522 = vmatmul.mubr.bf16.gmra.mrb[0].mxu0 %v1459
          %v2523 = vpop.f32.mrb[0].mxu0
          %v2524 = vadd.f32 %v2481, %v2523
          %v2525 = vpop.f32.mrb[0].mxu0
          %v2526 = vadd.f32 %v2483, %v2525
          %v2527 = vpop.f32.mrb[0].mxu0
          %v2528 = vadd.f32 %v2485, %v2527
          %v2529 = vpop.f32.mrb[0].mxu0
          %v2530 = vadd.f32 %v2487, %v2529
          %2531 = vdwg.mxu0
          %2532 = vmatprep.subr.bf16.mxu0 %v2106
          %2533 = vmatpush1.bf16.msra.mxu0 %v2105
          %2534 = vmatprep.subr.bf16.mxu0 %v2114
          %2535 = vmatpush1.bf16.msra.mxu0 %v2113
          %2536 = vmatprep.subr.bf16.mxu0 %v2122
          %2537 = vmatpush1.bf16.msra.mxu0 %v2121
          %2538 = vmatprep.subr.bf16.mxu0 %v2130
          %2539 = vmatpush1.bf16.msra.mxu0 %v2129
          %2540 = vmatprep.subr.bf16.mxu0 %v2138
          %2541 = vmatpush1.bf16.msra.mxu0 %v2137
          %2542 = vmatprep.subr.bf16.mxu0 %v2146
          %2543 = vmatpush1.bf16.msra.mxu0 %v2145
          %2544 = vmatprep.subr.bf16.mxu0 %v2154
          %2545 = vmatpush1.bf16.msra.mxu0 %v2153
          %2546 = vmatprep.subr.bf16.mxu0 %v2162
          %2547 = vmatpush1.bf16.msra.mxu0 %v2161
          %2548 = vmatprep.subr.bf16.mxu0 %v2170
          %2549 = vmatpush1.bf16.msra.mxu0 %v2169
          %2550 = vmatprep.subr.bf16.mxu0 %v2178
          %2551 = vmatpush1.bf16.msra.mxu0 %v2177
          %2552 = vmatprep.subr.bf16.mxu0 %v2186
          %2553 = vmatpush1.bf16.msra.mxu0 %v2185
          %2554 = vmatprep.subr.bf16.mxu0 %v2194
          %2555 = vmatpush1.bf16.msra.mxu0 %v2193
          %2556 = vmatprep.subr.bf16.mxu0 %v2202
          %2557 = vmatpush1.bf16.msra.mxu0 %v2201
          %2558 = vmatprep.subr.bf16.mxu0 %v2210
          %2559 = vmatpush1.bf16.msra.mxu0 %v2209
          %2560 = vmatprep.subr.bf16.mxu0 %v2218
          %2561 = vmatpush1.bf16.msra.mxu0 %v2217
          %2562 = vmatprep.subr.bf16.mxu0 %v2226
          %2563 = vmatpush1.bf16.msra.mxu0 %v2225
          %2564 = vmatprep.mubr.bf16.mxu0 %v1462
          %2565 = vmatmul.mubr.bf16.gmra.mrb[0].mxu0 %v1461
          %v2566 = vpop.f32.mrb[0].mxu0
          %v2567 = vadd.f32 %v2524, %v2566
          %v2568 = vpop.f32.mrb[0].mxu0
          %v2569 = vadd.f32 %v2526, %v2568
          %v2570 = vpop.f32.mrb[0].mxu0
          %v2571 = vadd.f32 %v2528, %v2570
          %v2572 = vpop.f32.mrb[0].mxu0
          %v2573 = vadd.f32 %v2530, %v2572
          %2574 = vdwg.mxu0
          %2575 = vmatprep.subr.bf16.mxu0 %v1724
          %2576 = vmatpush1.bf16.msra.mxu0 %v1723
          %2577 = vmatprep.subr.bf16.mxu0 %v1732
          %2578 = vmatpush1.bf16.msra.mxu0 %v1731
          %2579 = vmatprep.subr.bf16.mxu0 %v1740
          %2580 = vmatpush1.bf16.msra.mxu0 %v1739
          %2581 = vmatprep.subr.bf16.mxu0 %v1748
          %2582 = vmatpush1.bf16.msra.mxu0 %v1747
          %2583 = vmatprep.subr.bf16.mxu0 %v1756
          %2584 = vmatpush1.bf16.msra.mxu0 %v1755
          %2585 = vmatprep.subr.bf16.mxu0 %v1764
          %2586 = vmatpush1.bf16.msra.mxu0 %v1763
          %2587 = vmatprep.subr.bf16.mxu0 %v1772
          %2588 = vmatpush1.bf16.msra.mxu0 %v1771
          %2589 = vmatprep.subr.bf16.mxu0 %v1780
          %2590 = vmatpush1.bf16.msra.mxu0 %v1779
          %2591 = vmatprep.subr.bf16.mxu0 %v1788
          %2592 = vmatpush1.bf16.msra.mxu0 %v1787
          %2593 = vmatprep.subr.bf16.mxu0 %v1796
          %2594 = vmatpush1.bf16.msra.mxu0 %v1795
          %2595 = vmatprep.subr.bf16.mxu0 %v1804
          %2596 = vmatpush1.bf16.msra.mxu0 %v1803
          %2597 = vmatprep.subr.bf16.mxu0 %v1812
          %2598 = vmatpush1.bf16.msra.mxu0 %v1811
          %2599 = vmatprep.subr.bf16.mxu0 %v1820
          %2600 = vmatpush1.bf16.msra.mxu0 %v1819
          %2601 = vmatprep.subr.bf16.mxu0 %v1828
          %2602 = vmatpush1.bf16.msra.mxu0 %v1827
          %2603 = vmatprep.subr.bf16.mxu0 %v1836
          %2604 = vmatpush1.bf16.msra.mxu0 %v1835
          %2605 = vmatprep.subr.bf16.mxu0 %v1844
          %2606 = vmatpush1.bf16.msra.mxu0 %v1843
          %2607 = vmatprep.mubr.bf16.mxu0 %v1456
          %2608 = vmatmul.mubr.bf16.gmra.mrb[0].mxu0 %v1455
          %v2609 = vpop.f32.mrb[0].mxu0
          %v2610 = vadd.f32 0.0, %v2609
          %v2611 = vpop.f32.mrb[0].mxu0
          %v2612 = vadd.f32 0.0, %v2611
          %v2613 = vpop.f32.mrb[0].mxu0
          %v2614 = vadd.f32 0.0, %v2613
          %v2615 = vpop.f32.mrb[0].mxu0
          %v2616 = vadd.f32 0.0, %v2615
          %2617 = vdwg.mxu0
          %2618 = vmatprep.subr.bf16.mxu0 %v1852
          %2619 = vmatpush1.bf16.msra.mxu0 %v1851
          %2620 = vmatprep.subr.bf16.mxu0 %v1860
          %2621 = vmatpush1.bf16.msra.mxu0 %v1859
          %2622 = vmatprep.subr.bf16.mxu0 %v1868
          %2623 = vmatpush1.bf16.msra.mxu0 %v1867
          %2624 = vmatprep.subr.bf16.mxu0 %v1876
          %2625 = vmatpush1.bf16.msra.mxu0 %v1875
          %2626 = vmatprep.subr.bf16.mxu0 %v1884
          %2627 = vmatpush1.bf16.msra.mxu0 %v1883
          %2628 = vmatprep.subr.bf16.mxu0 %v1892
          %2629 = vmatpush1.bf16.msra.mxu0 %v1891
          %2630 = vmatprep.subr.bf16.mxu0 %v1900
          %2631 = vmatpush1.bf16.msra.mxu0 %v1899
          %2632 = vmatprep.subr.bf16.mxu0 %v1908
          %2633 = vmatpush1.bf16.msra.mxu0 %v1907
          %2634 = vmatprep.subr.bf16.mxu0 %v1916
          %2635 = vmatpush1.bf16.msra.mxu0 %v1915
          %2636 = vmatprep.subr.bf16.mxu0 %v1924
          %2637 = vmatpush1.bf16.msra.mxu0 %v1923
          %2638 = vmatprep.subr.bf16.mxu0 %v1932
          %2639 = vmatpush1.bf16.msra.mxu0 %v1931
          %2640 = vmatprep.subr.bf16.mxu0 %v1940
          %2641 = vmatpush1.bf16.msra.mxu0 %v1939
          %2642 = vmatprep.subr.bf16.mxu0 %v1948
          %2643 = vmatpush1.bf16.msra.mxu0 %v1947
          %2644 = vmatprep.subr.bf16.mxu0 %v1956
          %2645 = vmatpush1.bf16.msra.mxu0 %v1955
          %2646 = vmatprep.subr.bf16.mxu0 %v1964
          %2647 = vmatpush1.bf16.msra.mxu0 %v1963
          %2648 = vmatprep.subr.bf16.mxu0 %v1972
          %2649 = vmatpush1.bf16.msra.mxu0 %v1971
          %2650 = vmatprep.mubr.bf16.mxu0 %v1458
          %2651 = vmatmul.mubr.bf16.gmra.mrb[0].mxu0 %v1457
          %v2652 = vpop.f32.mrb[0].mxu0
          %v2653 = vadd.f32 %v2610, %v2652
          %v2654 = vpop.f32.mrb[0].mxu0
          %v2655 = vadd.f32 %v2612, %v2654
          %v2656 = vpop.f32.mrb[0].mxu0
          %v2657 = vadd.f32 %v2614, %v2656
          %v2658 = vpop.f32.mrb[0].mxu0
          %v2659 = vadd.f32 %v2616, %v2658
          %2660 = vdwg.mxu0
          %2661 = vmatprep.subr.bf16.mxu0 %v1980
          %2662 = vmatpush1.bf16.msra.mxu0 %v1979
          %2663 = vmatprep.subr.bf16.mxu0 %v1988
          %2664 = vmatpush1.bf16.msra.mxu0 %v1987
          %2665 = vmatprep.subr.bf16.mxu0 %v1996
          %2666 = vmatpush1.bf16.msra.mxu0 %v1995
          %2667 = vmatprep.subr.bf16.mxu0 %v2004
          %2668 = vmatpush1.bf16.msra.mxu0 %v2003
          %2669 = vmatprep.subr.bf16.mxu0 %v2012
          %2670 = vmatpush1.bf16.msra.mxu0 %v2011
          %2671 = vmatprep.subr.bf16.mxu0 %v2020
          %2672 = vmatpush1.bf16.msra.mxu0 %v2019
          %2673 = vmatprep.subr.bf16.mxu0 %v2028
          %2674 = vmatpush1.bf16.msra.mxu0 %v2027
          %2675 = vmatprep.subr.bf16.mxu0 %v2036
          %2676 = vmatpush1.bf16.msra.mxu0 %v2035
          %2677 = vmatprep.subr.bf16.mxu0 %v2044
          %2678 = vmatpush1.bf16.msra.mxu0 %v2043
          %2679 = vmatprep.subr.bf16.mxu0 %v2052
          %2680 = vmatpush1.bf16.msra.mxu0 %v2051
          %2681 = vmatprep.subr.bf16.mxu0 %v2060
          %2682 = vmatpush1.bf16.msra.mxu0 %v2059
          %2683 = vmatprep.subr.bf16.mxu0 %v2068
          %2684 = vmatpush1.bf16.msra.mxu0 %v2067
          %2685 = vmatprep.subr.bf16.mxu0 %v2076
          %2686 = vmatpush1.bf16.msra.mxu0 %v2075
          %2687 = vmatprep.subr.bf16.mxu0 %v2084
          %2688 = vmatpush1.bf16.msra.mxu0 %v2083
          %2689 = vmatprep.subr.bf16.mxu0 %v2092
          %2690 = vmatpush1.bf16.msra.mxu0 %v2091
          %2691 = vmatprep.subr.bf16.mxu0 %v2100
          %2692 = vmatpush1.bf16.msra.mxu0 %v2099
          %2693 = vmatprep.mubr.bf16.mxu0 %v1460
          %2694 = vmatmul.mubr.bf16.gmra.mrb[0].mxu0 %v1459
          %v2695 = vpop.f32.mrb[0].mxu0
          %v2696 = vadd.f32 %v2653, %v2695
          %v2697 = vpop.f32.mrb[0].mxu0
          %v2698 = vadd.f32 %v2655, %v2697
          %v2699 = vpop.f32.mrb[0].mxu0
          %v2700 = vadd.f32 %v2657, %v2699
          %v2701 = vpop.f32.mrb[0].mxu0
          %v2702 = vadd.f32 %v2659, %v2701
          %2703 = vdwg.mxu0
          %2704 = vmatprep.subr.bf16.mxu0 %v2108
          %2705 = vmatpush1.bf16.msra.mxu0 %v2107
          %2706 = vmatprep.subr.bf16.mxu0 %v2116
          %2707 = vmatpush1.bf16.msra.mxu0 %v2115
          %2708 = vmatprep.subr.bf16.mxu0 %v2124
          %2709 = vmatpush1.bf16.msra.mxu0 %v2123
          %2710 = vmatprep.subr.bf16.mxu0 %v2132
          %2711 = vmatpush1.bf16.msra.mxu0 %v2131
          %2712 = vmatprep.subr.bf16.mxu0 %v2140
          %2713 = vmatpush1.bf16.msra.mxu0 %v2139
          %2714 = vmatprep.subr.bf16.mxu0 %v2148
          %2715 = vmatpush1.bf16.msra.mxu0 %v2147
          %2716 = vmatprep.subr.bf16.mxu0 %v2156
          %2717 = vmatpush1.bf16.msra.mxu0 %v2155
          %2718 = vmatprep.subr.bf16.mxu0 %v2164
          %2719 = vmatpush1.bf16.msra.mxu0 %v2163
          %2720 = vmatprep.subr.bf16.mxu0 %v2172
          %2721 = vmatpush1.bf16.msra.mxu0 %v2171
          %2722 = vmatprep.subr.bf16.mxu0 %v2180
          %2723 = vmatpush1.bf16.msra.mxu0 %v2179
          %2724 = vmatprep.subr.bf16.mxu0 %v2188
          %2725 = vmatpush1.bf16.msra.mxu0 %v2187
          %2726 = vmatprep.subr.bf16.mxu0 %v2196
          %2727 = vmatpush1.bf16.msra.mxu0 %v2195
          %2728 = vmatprep.subr.bf16.mxu0 %v2204
          %2729 = vmatpush1.bf16.msra.mxu0 %v2203
          %2730 = vmatprep.subr.bf16.mxu0 %v2212
          %2731 = vmatpush1.bf16.msra.mxu0 %v2211
          %2732 = vmatprep.subr.bf16.mxu0 %v2220
          %2733 = vmatpush1.bf16.msra.mxu0 %v2219
          %2734 = vmatprep.subr.bf16.mxu0 %v2228
          %2735 = vmatpush1.bf16.msra.mxu0 %v2227
          %2736 = vmatprep.mubr.bf16.mxu0 %v1462
          %2737 = vmatmul.mubr.bf16.gmra.mrb[0].mxu0 %v1461
          %v2738 = vpop.f32.mrb[0].mxu0
          %v2739 = vadd.f32 %v2696, %v2738
          %v2740 = vpop.f32.mrb[0].mxu0
          %v2741 = vadd.f32 %v2698, %v2740
          %v2742 = vpop.f32.mrb[0].mxu0
          %v2743 = vadd.f32 %v2700, %v2742
          %v2744 = vpop.f32.mrb[0].mxu0
          %v2745 = vadd.f32 %v2702, %v2744
          %2746 = vdwg.mxu0
          %2747 = vmatprep.subr.bf16.mxu0 %v1726
          %2748 = vmatpush1.bf16.msra.mxu0 %v1725
          %2749 = vmatprep.subr.bf16.mxu0 %v1734
          %2750 = vmatpush1.bf16.msra.mxu0 %v1733
          %2751 = vmatprep.subr.bf16.mxu0 %v1742
          %2752 = vmatpush1.bf16.msra.mxu0 %v1741
          %2753 = vmatprep.subr.bf16.mxu0 %v1750
          %2754 = vmatpush1.bf16.msra.mxu0 %v1749
          %2755 = vmatprep.subr.bf16.mxu0 %v1758
          %2756 = vmatpush1.bf16.msra.mxu0 %v1757
          %2757 = vmatprep.subr.bf16.mxu0 %v1766
          %2758 = vmatpush1.bf16.msra.mxu0 %v1765
          %2759 = vmatprep.subr.bf16.mxu0 %v1774
          %2760 = vmatpush1.bf16.msra.mxu0 %v1773
          %2761 = vmatprep.subr.bf16.mxu0 %v1782
          %2762 = vmatpush1.bf16.msra.mxu0 %v1781
          %2763 = vmatprep.subr.bf16.mxu0 %v1790
          %2764 = vmatpush1.bf16.msra.mxu0 %v1789
          %2765 = vmatprep.subr.bf16.mxu0 %v1798
          %2766 = vmatpush1.bf16.msra.mxu0 %v1797
          %2767 = vmatprep.subr.bf16.mxu0 %v1806
          %2768 = vmatpush1.bf16.msra.mxu0 %v1805
          %2769 = vmatprep.subr.bf16.mxu0 %v1814
          %2770 = vmatpush1.bf16.msra.mxu0 %v1813
          %2771 = vmatprep.subr.bf16.mxu0 %v1822
          %2772 = vmatpush1.bf16.msra.mxu0 %v1821
          %2773 = vmatprep.subr.bf16.mxu0 %v1830
          %2774 = vmatpush1.bf16.msra.mxu0 %v1829
          %2775 = vmatprep.subr.bf16.mxu0 %v1838
          %2776 = vmatpush1.bf16.msra.mxu0 %v1837
          %2777 = vmatprep.subr.bf16.mxu0 %v1846
          %2778 = vmatpush1.bf16.msra.mxu0 %v1845
          %2779 = vmatprep.mubr.bf16.mxu0 %v1456
          %2780 = vmatmul.mubr.bf16.gmra.mrb[0].mxu0 %v1455
          %v2781 = vpop.f32.mrb[0].mxu0
          %v2782 = vadd.f32 0.0, %v2781
          %v2783 = vpop.f32.mrb[0].mxu0
          %v2784 = vadd.f32 0.0, %v2783
          %v2785 = vpop.f32.mrb[0].mxu0
          %v2786 = vadd.f32 0.0, %v2785
          %v2787 = vpop.f32.mrb[0].mxu0
          %v2788 = vadd.f32 0.0, %v2787
          %2789 = vdwg.mxu0
          %2790 = vmatprep.subr.bf16.mxu0 %v1854
          %2791 = vmatpush1.bf16.msra.mxu0 %v1853
          %2792 = vmatprep.subr.bf16.mxu0 %v1862
          %2793 = vmatpush1.bf16.msra.mxu0 %v1861
          %2794 = vmatprep.subr.bf16.mxu0 %v1870
          %2795 = vmatpush1.bf16.msra.mxu0 %v1869
          %2796 = vmatprep.subr.bf16.mxu0 %v1878
          %2797 = vmatpush1.bf16.msra.mxu0 %v1877
          %2798 = vmatprep.subr.bf16.mxu0 %v1886
          %2799 = vmatpush1.bf16.msra.mxu0 %v1885
          %2800 = vmatprep.subr.bf16.mxu0 %v1894
          %2801 = vmatpush1.bf16.msra.mxu0 %v1893
          %2802 = vmatprep.subr.bf16.mxu0 %v1902
          %2803 = vmatpush1.bf16.msra.mxu0 %v1901
          %2804 = vmatprep.subr.bf16.mxu0 %v1910
          %2805 = vmatpush1.bf16.msra.mxu0 %v1909
          %2806 = vmatprep.subr.bf16.mxu0 %v1918
          %2807 = vmatpush1.bf16.msra.mxu0 %v1917
          %2808 = vmatprep.subr.bf16.mxu0 %v1926
          %2809 = vmatpush1.bf16.msra.mxu0 %v1925
          %2810 = vmatprep.subr.bf16.mxu0 %v1934
          %2811 = vmatpush1.bf16.msra.mxu0 %v1933
          %2812 = vmatprep.subr.bf16.mxu0 %v1942
          %2813 = vmatpush1.bf16.msra.mxu0 %v1941
          %2814 = vmatprep.subr.bf16.mxu0 %v1950
          %2815 = vmatpush1.bf16.msra.mxu0 %v1949
          %2816 = vmatprep.subr.bf16.mxu0 %v1958
          %2817 = vmatpush1.bf16.msra.mxu0 %v1957
          %2818 = vmatprep.subr.bf16.mxu0 %v1966
          %2819 = vmatpush1.bf16.msra.mxu0 %v1965
          %2820 = vmatprep.subr.bf16.mxu0 %v1974
          %2821 = vmatpush1.bf16.msra.mxu0 %v1973
          %2822 = vmatprep.mubr.bf16.mxu0 %v1458
          %2823 = vmatmul.mubr.bf16.gmra.mrb[0].mxu0 %v1457
          %v2824 = vpop.f32.mrb[0].mxu0
          %v2825 = vadd.f32 %v2782, %v2824
          %v2826 = vpop.f32.mrb[0].mxu0
          %v2827 = vadd.f32 %v2784, %v2826
          %v2828 = vpop.f32.mrb[0].mxu0
          %v2829 = vadd.f32 %v2786, %v2828
          %v2830 = vpop.f32.mrb[0].mxu0
          %v2831 = vadd.f32 %v2788, %v2830
          %2832 = vdwg.mxu0
          %2833 = vmatprep.subr.bf16.mxu0 %v1982
          %2834 = vmatpush1.bf16.msra.mxu0 %v1981
          %2835 = vmatprep.subr.bf16.mxu0 %v1990
          %2836 = vmatpush1.bf16.msra.mxu0 %v1989
          %2837 = vmatprep.subr.bf16.mxu0 %v1998
          %2838 = vmatpush1.bf16.msra.mxu0 %v1997
          %2839 = vmatprep.subr.bf16.mxu0 %v2006
          %2840 = vmatpush1.bf16.msra.mxu0 %v2005
          %2841 = vmatprep.subr.bf16.mxu0 %v2014
          %2842 = vmatpush1.bf16.msra.mxu0 %v2013
          %2843 = vmatprep.subr.bf16.mxu0 %v2022
          %2844 = vmatpush1.bf16.msra.mxu0 %v2021
          %2845 = vmatprep.subr.bf16.mxu0 %v2030
          %2846 = vmatpush1.bf16.msra.mxu0 %v2029
          %2847 = vmatprep.subr.bf16.mxu0 %v2038
          %2848 = vmatpush1.bf16.msra.mxu0 %v2037
          %2849 = vmatprep.subr.bf16.mxu0 %v2046
          %2850 = vmatpush1.bf16.msra.mxu0 %v2045
          %2851 = vmatprep.subr.bf16.mxu0 %v2054
          %2852 = vmatpush1.bf16.msra.mxu0 %v2053
          %2853 = vmatprep.subr.bf16.mxu0 %v2062
          %2854 = vmatpush1.bf16.msra.mxu0 %v2061
          %2855 = vmatprep.subr.bf16.mxu0 %v2070
          %2856 = vmatpush1.bf16.msra.mxu0 %v2069
          %2857 = vmatprep.subr.bf16.mxu0 %v2078
          %2858 = vmatpush1.bf16.msra.mxu0 %v2077
          %2859 = vmatprep.subr.bf16.mxu0 %v2086
          %2860 = vmatpush1.bf16.msra.mxu0 %v2085
          %2861 = vmatprep.subr.bf16.mxu0 %v2094
          %2862 = vmatpush1.bf16.msra.mxu0 %v2093
          %2863 = vmatprep.subr.bf16.mxu0 %v2102
          %2864 = vmatpush1.bf16.msra.mxu0 %v2101
          %2865 = vmatprep.mubr.bf16.mxu0 %v1460
          %2866 = vmatmul.mubr.bf16.gmra.mrb[0].mxu0 %v1459
          %v2867 = vpop.f32.mrb[0].mxu0
          %v2868 = vadd.f32 %v2825, %v2867
          %v2869 = vpop.f32.mrb[0].mxu0
          %v2870 = vadd.f32 %v2827, %v2869
          %v2871 = vpop.f32.mrb[0].mxu0
          %v2872 = vadd.f32 %v2829, %v2871
          %v2873 = vpop.f32.mrb[0].mxu0
          %v2874 = vadd.f32 %v2831, %v2873
          %2875 = vdwg.mxu0
          %2876 = vmatprep.subr.bf16.mxu0 %v2110
          %2877 = vmatpush1.bf16.msra.mxu0 %v2109
          %2878 = vmatprep.subr.bf16.mxu0 %v2118
          %2879 = vmatpush1.bf16.msra.mxu0 %v2117
          %2880 = vmatprep.subr.bf16.mxu0 %v2126
          %2881 = vmatpush1.bf16.msra.mxu0 %v2125
          %2882 = vmatprep.subr.bf16.mxu0 %v2134
          %2883 = vmatpush1.bf16.msra.mxu0 %v2133
          %2884 = vmatprep.subr.bf16.mxu0 %v2142
          %2885 = vmatpush1.bf16.msra.mxu0 %v2141
          %2886 = vmatprep.subr.bf16.mxu0 %v2150
          %2887 = vmatpush1.bf16.msra.mxu0 %v2149
          %2888 = vmatprep.subr.bf16.mxu0 %v2158
          %2889 = vmatpush1.bf16.msra.mxu0 %v2157
          %2890 = vmatprep.subr.bf16.mxu0 %v2166
          %2891 = vmatpush1.bf16.msra.mxu0 %v2165
          %2892 = vmatprep.subr.bf16.mxu0 %v2174
          %2893 = vmatpush1.bf16.msra.mxu0 %v2173
          %2894 = vmatprep.subr.bf16.mxu0 %v2182
          %2895 = vmatpush1.bf16.msra.mxu0 %v2181
          %2896 = vmatprep.subr.bf16.mxu0 %v2190
          %2897 = vmatpush1.bf16.msra.mxu0 %v2189
          %2898 = vmatprep.subr.bf16.mxu0 %v2198
          %2899 = vmatpush1.bf16.msra.mxu0 %v2197
          %2900 = vmatprep.subr.bf16.mxu0 %v2206
          %2901 = vmatpush1.bf16.msra.mxu0 %v2205
          %2902 = vmatprep.subr.bf16.mxu0 %v2214
          %2903 = vmatpush1.bf16.msra.mxu0 %v2213
          %2904 = vmatprep.subr.bf16.mxu0 %v2222
          %2905 = vmatpush1.bf16.msra.mxu0 %v2221
          %2906 = vmatprep.subr.bf16.mxu0 %v2230
          %2907 = vmatpush1.bf16.msra.mxu0 %v2229
          %2908 = vmatprep.mubr.bf16.mxu0 %v1462
          %2909 = vmatmul.mubr.bf16.gmra.mrb[0].mxu0 %v1461
          %v2910 = vpop.f32.mrb[0].mxu0
          %v2911 = vadd.f32 %v2868, %v2910
          %v2912 = vpop.f32.mrb[0].mxu0
          %v2913 = vadd.f32 %v2870, %v2912
          %v2914 = vpop.f32.mrb[0].mxu0
          %v2915 = vadd.f32 %v2872, %v2914
          %v2916 = vpop.f32.mrb[0].mxu0
          %v2917 = vadd.f32 %v2874, %v2916
          %2918 = vdwg.mxu0
          %v2919 = vld [vmem:[%s5] sm:$0xff]
          %v2921 = vlaneseq
          %v2922 = vshrl.u32 %v2921, 7
          %v2923 = vsub.s32 0, %v2922
          %v2924 = vrot.slane %v2919, %v2923
          %v2925 = vlaneseq
          %v2926 = vshrl.u32 %v2925, 7
          %v2927 = vsub.s32 1, %v2926
          %v2928 = vrot.slane %v2919, %v2927
          %v2929 = vlaneseq
          %v2930 = vshrl.u32 %v2929, 7
          %v2931 = vsub.s32 2, %v2930
          %v2932 = vrot.slane %v2919, %v2931
          %v2933 = vlaneseq
          %v2934 = vshrl.u32 %v2933, 7
          %v2935 = vsub.s32 3, %v2934
          %v2936 = vrot.slane %v2919, %v2935
          %v2937 = vlaneseq
          %v2938 = vshrl.u32 %v2937, 7
          %v2939 = vsub.s32 4, %v2938
          %v2940 = vrot.slane %v2919, %v2939
          %v2941 = vlaneseq
          %v2942 = vshrl.u32 %v2941, 7
          %v2943 = vsub.s32 5, %v2942
          %v2944 = vrot.slane %v2919, %v2943
          %v2945 = vlaneseq
          %v2946 = vshrl.u32 %v2945, 7
          %v2947 = vsub.s32 6, %v2946
          %v2948 = vrot.slane %v2919, %v2947
          %v2949 = vlaneseq
          %v2950 = vshrl.u32 %v2949, 7
          %v2951 = vsub.s32 7, %v2950
          %v2952 = vrot.slane %v2919, %v2951
          %v2961 = vmul.f32 %v2395, %v2924
          %v2962 = vmul.f32 %v2397, %v2928
          %v2963 = vmul.f32 %v2567, %v2932
          %v2964 = vmul.f32 %v2569, %v2936
          %v2965 = vmul.f32 %v2739, %v2940
          %v2966 = vmul.f32 %v2741, %v2944
          %v2967 = vmul.f32 %v2911, %v2948
          %v2968 = vmul.f32 %v2913, %v2952
          %v2969 = vmul.f32 %v2399, %v2924
          %v2970 = vmul.f32 %v2401, %v2928
          %v2971 = vmul.f32 %v2571, %v2932
          %v2972 = vmul.f32 %v2573, %v2936
          %v2973 = vmul.f32 %v2743, %v2940
          %v2974 = vmul.f32 %v2745, %v2944
          %v2975 = vmul.f32 %v2915, %v2948
          %v2976 = vmul.f32 %v2917, %v2952
          %v2977 = vld [vmem:[%s6] sm:$0xff]
          %v2979 = vlaneseq
          %v2980 = vshrl.u32 %v2979, 7
          %v2981 = vsub.s32 0, %v2980
          %v2982 = vrot.slane %v2977, %v2981
          %v2983 = vlaneseq
          %v2984 = vshrl.u32 %v2983, 7
          %v2985 = vsub.s32 1, %v2984
          %v2986 = vrot.slane %v2977, %v2985
          %v2987 = vlaneseq
          %v2988 = vshrl.u32 %v2987, 7
          %v2989 = vsub.s32 2, %v2988
          %v2990 = vrot.slane %v2977, %v2989
          %v2991 = vlaneseq
          %v2992 = vshrl.u32 %v2991, 7
          %v2993 = vsub.s32 3, %v2992
          %v2994 = vrot.slane %v2977, %v2993
          %v2995 = vlaneseq
          %v2996 = vshrl.u32 %v2995, 7
          %v2997 = vsub.s32 4, %v2996
          %v2998 = vrot.slane %v2977, %v2997
          %v2999 = vlaneseq
          %v3000 = vshrl.u32 %v2999, 7
          %v3001 = vsub.s32 5, %v3000
          %v3002 = vrot.slane %v2977, %v3001
          %v3003 = vlaneseq
          %v3004 = vshrl.u32 %v3003, 7
          %v3005 = vsub.s32 6, %v3004
          %v3006 = vrot.slane %v2977, %v3005
          %v3007 = vlaneseq
          %v3008 = vshrl.u32 %v3007, 7
          %v3009 = vsub.s32 7, %v3008
          %v3010 = vrot.slane %v2977, %v3009
          %v3019 = vadd.f32 %v2961, %v2982
          %v3020 = vadd.f32 %v2962, %v2986
          %v3021 = vadd.f32 %v2963, %v2990
          %v3022 = vadd.f32 %v2964, %v2994
          %v3023 = vadd.f32 %v2965, %v2998
          %v3024 = vadd.f32 %v2966, %v3002
          %v3025 = vadd.f32 %v2967, %v3006
          %v3026 = vadd.f32 %v2968, %v3010
          %v3027 = vadd.f32 %v2969, %v2982
          %v3028 = vadd.f32 %v2970, %v2986
          %v3029 = vadd.f32 %v2971, %v2990
          %v3030 = vadd.f32 %v2972, %v2994
          %v3031 = vadd.f32 %v2973, %v2998
          %v3032 = vadd.f32 %v2974, %v3002
          %v3033 = vadd.f32 %v2975, %v3006
          %v3034 = vadd.f32 %v2976, %v3010
          %v3035 = vmax.f32 %v3019, 0.0
          %v3036 = vmax.f32 %v3020, 0.0
          %v3037 = vmax.f32 %v3021, 0.0
          %v3038 = vmax.f32 %v3022, 0.0
          %v3039 = vmax.f32 %v3023, 0.0
          %v3040 = vmax.f32 %v3024, 0.0
          %v3041 = vmax.f32 %v3025, 0.0
          %v3042 = vmax.f32 %v3026, 0.0
          %v3043 = vmax.f32 %v3027, 0.0
          %v3044 = vmax.f32 %v3028, 0.0
          %v3045 = vmax.f32 %v3029, 0.0
          %v3046 = vmax.f32 %v3030, 0.0
          %v3047 = vmax.f32 %v3031, 0.0
          %v3048 = vmax.f32 %v3032, 0.0
          %v3049 = vmax.f32 %v3033, 0.0
          %v3050 = vmax.f32 %v3034, 0.0
          %v3051 = vpack.c.bf16 %v3043, %v3035
          %v3052 = vpack.c.bf16 %v3044, %v3036
          %v3053 = vpack.c.bf16 %v3045, %v3037
          %v3054 = vpack.c.bf16 %v3046, %v3038
          %v3055 = vpack.c.bf16 %v3047, %v3039
          %v3056 = vpack.c.bf16 %v3048, %v3040
          %v3057 = vpack.c.bf16 %v3049, %v3041
          %v3058 = vpack.c.bf16 %v3050, %v3042
          %v3059 = vld [vmem:[#allocation7] sm:$0xff]
          %v3060 = vld [vmem:[#allocation7 + $0x8] sm:$0xff]
          %v3061 = vld [vmem:[#allocation7 + $0x10] sm:$0xff]
          %v3062 = vld [vmem:[#allocation7 + $0x18] sm:$0xff]
          %v3063 = vld [vmem:[#allocation7 + $0x20] sm:$0xff]
          %v3064 = vld [vmem:[#allocation7 + $0x28] sm:$0xff]
          %v3065 = vld [vmem:[#allocation7 + $0x30] sm:$0xff]
          %v3066 = vld [vmem:[#allocation7 + $0x38] sm:$0xff]
          %v3067 = vld [vmem:[#allocation7 + $0x40] sm:$0xff]
          %v3068 = vld [vmem:[#allocation7 + $0x48] sm:$0xff]
          %v3069 = vld [vmem:[#allocation7 + $0x50] sm:$0xff]
          %v3070 = vld [vmem:[#allocation7 + $0x58] sm:$0xff]
          %v3071 = vld [vmem:[#allocation7 + $0x60] sm:$0xff]
          %v3072 = vld [vmem:[#allocation7 + $0x68] sm:$0xff]
          %v3073 = vld [vmem:[#allocation7 + $0x70] sm:$0xff]
          %v3074 = vld [vmem:[#allocation7 + $0x78] sm:$0xff]
          %v3075 = vld [vmem:[#allocation7 + $0x80] sm:$0xff]
          %v3076 = vld [vmem:[#allocation7 + $0x88] sm:$0xff]
          %v3077 = vld [vmem:[#allocation7 + $0x90] sm:$0xff]
          %v3078 = vld [vmem:[#allocation7 + $0x98] sm:$0xff]
          %v3079 = vld [vmem:[#allocation7 + $0xa0] sm:$0xff]
          %v3080 = vld [vmem:[#allocation7 + $0xa8] sm:$0xff]
          %v3081 = vld [vmem:[#allocation7 + $0xb0] sm:$0xff]
          %v3082 = vld [vmem:[#allocation7 + $0xb8] sm:$0xff]
          %v3083 = vld [vmem:[#allocation7 + $0xc0] sm:$0xff]
          %v3084 = vld [vmem:[#allocation7 + $0xc8] sm:$0xff]
          %v3085 = vld [vmem:[#allocation7 + $0xd0] sm:$0xff]
          %v3086 = vld [vmem:[#allocation7 + $0xd8] sm:$0xff]
          %v3087 = vld [vmem:[#allocation7 + $0xe0] sm:$0xff]
          %v3088 = vld [vmem:[#allocation7 + $0xe8] sm:$0xff]
          %v3089 = vld [vmem:[#allocation7 + $0xf0] sm:$0xff]
          %v3090 = vld [vmem:[#allocation7 + $0xf8] sm:$0xff]
          %v3091 = vld [vmem:[#allocation7 + $0x100] sm:$0xff]
          %v3092 = vld [vmem:[#allocation7 + $0x108] sm:$0xff]
          %v3093 = vld [vmem:[#allocation7 + $0x110] sm:$0xff]
          %v3094 = vld [vmem:[#allocation7 + $0x118] sm:$0xff]
          %v3095 = vld [vmem:[#allocation7 + $0x120] sm:$0xff]
          %v3096 = vld [vmem:[#allocation7 + $0x128] sm:$0xff]
          %v3097 = vld [vmem:[#allocation7 + $0x130] sm:$0xff]
          %v3098 = vld [vmem:[#allocation7 + $0x138] sm:$0xff]
          %v3099 = vld [vmem:[#allocation7 + $0x140] sm:$0xff]
          %v3100 = vld [vmem:[#allocation7 + $0x148] sm:$0xff]
          %v3101 = vld [vmem:[#allocation7 + $0x150] sm:$0xff]
          %v3102 = vld [vmem:[#allocation7 + $0x158] sm:$0xff]
          %v3103 = vld [vmem:[#allocation7 + $0x160] sm:$0xff]
          %v3104 = vld [vmem:[#allocation7 + $0x168] sm:$0xff]
          %v3105 = vld [vmem:[#allocation7 + $0x170] sm:$0xff]
          %v3106 = vld [vmem:[#allocation7 + $0x178] sm:$0xff]
          %v3107 = vld [vmem:[#allocation7 + $0x180] sm:$0xff]
          %v3108 = vld [vmem:[#allocation7 + $0x188] sm:$0xff]
          %v3109 = vld [vmem:[#allocation7 + $0x190] sm:$0xff]
          %v3110 = vld [vmem:[#allocation7 + $0x198] sm:$0xff]
          %v3111 = vld [vmem:[#allocation7 + $0x1a0] sm:$0xff]
          %v3112 = vld [vmem:[#allocation7 + $0x1a8] sm:$0xff]
          %v3113 = vld [vmem:[#allocation7 + $0x1b0] sm:$0xff]
          %v3114 = vld [vmem:[#allocation7 + $0x1b8] sm:$0xff]
          %v3115 = vld [vmem:[#allocation7 + $0x1c0] sm:$0xff]
          %v3116 = vld [vmem:[#allocation7 + $0x1c8] sm:$0xff]
          %v3117 = vld [vmem:[#allocation7 + $0x1d0] sm:$0xff]
          %v3118 = vld [vmem:[#allocation7 + $0x1d8] sm:$0xff]
          %v3119 = vld [vmem:[#allocation7 + $0x1e0] sm:$0xff]
          %v3120 = vld [vmem:[#allocation7 + $0x1e8] sm:$0xff]
          %v3121 = vld [vmem:[#allocation7 + $0x1f0] sm:$0xff]
          %v3122 = vld [vmem:[#allocation7 + $0x1f8] sm:$0xff]
          %v3123 = vld [vmem:[#allocation7 + $0x200] sm:$0xff]
          %v3124 = vld [vmem:[#allocation7 + $0x208] sm:$0xff]
          %v3125 = vld [vmem:[#allocation7 + $0x210] sm:$0xff]
          %v3126 = vld [vmem:[#allocation7 + $0x218] sm:$0xff]
          %v3127 = vld [vmem:[#allocation7 + $0x220] sm:$0xff]
          %v3128 = vld [vmem:[#allocation7 + $0x228] sm:$0xff]
          %v3129 = vld [vmem:[#allocation7 + $0x230] sm:$0xff]
          %v3130 = vld [vmem:[#allocation7 + $0x238] sm:$0xff]
          %v3131 = vld [vmem:[#allocation7 + $0x240] sm:$0xff]
          %v3132 = vld [vmem:[#allocation7 + $0x248] sm:$0xff]
          %v3133 = vld [vmem:[#allocation7 + $0x250] sm:$0xff]
          %v3134 = vld [vmem:[#allocation7 + $0x258] sm:$0xff]
          %v3135 = vld [vmem:[#allocation7 + $0x260] sm:$0xff]
          %v3136 = vld [vmem:[#allocation7 + $0x268] sm:$0xff]
          %v3137 = vld [vmem:[#allocation7 + $0x270] sm:$0xff]
          %v3138 = vld [vmem:[#allocation7 + $0x278] sm:$0xff]
          %v3139 = vld [vmem:[#allocation7 + $0x280] sm:$0xff]
          %v3140 = vld [vmem:[#allocation7 + $0x288] sm:$0xff]
          %v3141 = vld [vmem:[#allocation7 + $0x290] sm:$0xff]
          %v3142 = vld [vmem:[#allocation7 + $0x298] sm:$0xff]
          %v3143 = vld [vmem:[#allocation7 + $0x2a0] sm:$0xff]
          %v3144 = vld [vmem:[#allocation7 + $0x2a8] sm:$0xff]
          %v3145 = vld [vmem:[#allocation7 + $0x2b0] sm:$0xff]
          %v3146 = vld [vmem:[#allocation7 + $0x2b8] sm:$0xff]
          %v3147 = vld [vmem:[#allocation7 + $0x2c0] sm:$0xff]
          %v3148 = vld [vmem:[#allocation7 + $0x2c8] sm:$0xff]
          %v3149 = vld [vmem:[#allocation7 + $0x2d0] sm:$0xff]
          %v3150 = vld [vmem:[#allocation7 + $0x2d8] sm:$0xff]
          %v3151 = vld [vmem:[#allocation7 + $0x2e0] sm:$0xff]
          %v3152 = vld [vmem:[#allocation7 + $0x2e8] sm:$0xff]
          %v3153 = vld [vmem:[#allocation7 + $0x2f0] sm:$0xff]
          %v3154 = vld [vmem:[#allocation7 + $0x2f8] sm:$0xff]
          %v3155 = vld [vmem:[#allocation7 + $0x300] sm:$0xff]
          %v3156 = vld [vmem:[#allocation7 + $0x308] sm:$0xff]
          %v3157 = vld [vmem:[#allocation7 + $0x310] sm:$0xff]
          %v3158 = vld [vmem:[#allocation7 + $0x318] sm:$0xff]
          %v3159 = vld [vmem:[#allocation7 + $0x320] sm:$0xff]
          %v3160 = vld [vmem:[#allocation7 + $0x328] sm:$0xff]
          %v3161 = vld [vmem:[#allocation7 + $0x330] sm:$0xff]
          %v3162 = vld [vmem:[#allocation7 + $0x338] sm:$0xff]
          %v3163 = vld [vmem:[#allocation7 + $0x340] sm:$0xff]
          %v3164 = vld [vmem:[#allocation7 + $0x348] sm:$0xff]
          %v3165 = vld [vmem:[#allocation7 + $0x350] sm:$0xff]
          %v3166 = vld [vmem:[#allocation7 + $0x358] sm:$0xff]
          %v3167 = vld [vmem:[#allocation7 + $0x360] sm:$0xff]
          %v3168 = vld [vmem:[#allocation7 + $0x368] sm:$0xff]
          %v3169 = vld [vmem:[#allocation7 + $0x370] sm:$0xff]
          %v3170 = vld [vmem:[#allocation7 + $0x378] sm:$0xff]
          %v3171 = vld [vmem:[#allocation7 + $0x380] sm:$0xff]
          %v3172 = vld [vmem:[#allocation7 + $0x388] sm:$0xff]
          %v3173 = vld [vmem:[#allocation7 + $0x390] sm:$0xff]
          %v3174 = vld [vmem:[#allocation7 + $0x398] sm:$0xff]
          %v3175 = vld [vmem:[#allocation7 + $0x3a0] sm:$0xff]
          %v3176 = vld [vmem:[#allocation7 + $0x3a8] sm:$0xff]
          %v3177 = vld [vmem:[#allocation7 + $0x3b0] sm:$0xff]
          %v3178 = vld [vmem:[#allocation7 + $0x3b8] sm:$0xff]
          %v3179 = vld [vmem:[#allocation7 + $0x3c0] sm:$0xff]
          %v3180 = vld [vmem:[#allocation7 + $0x3c8] sm:$0xff]
          %v3181 = vld [vmem:[#allocation7 + $0x3d0] sm:$0xff]
          %v3182 = vld [vmem:[#allocation7 + $0x3d8] sm:$0xff]
          %v3183 = vld [vmem:[#allocation7 + $0x3e0] sm:$0xff]
          %v3184 = vld [vmem:[#allocation7 + $0x3e8] sm:$0xff]
          %v3185 = vld [vmem:[#allocation7 + $0x3f0] sm:$0xff]
          %v3186 = vld [vmem:[#allocation7 + $0x3f8] sm:$0xff]
          %v3187 = vld [vmem:[#allocation7 + $0x400] sm:$0xff]
          %v3188 = vld [vmem:[#allocation7 + $0x408] sm:$0xff]
          %v3189 = vld [vmem:[#allocation7 + $0x410] sm:$0xff]
          %v3190 = vld [vmem:[#allocation7 + $0x418] sm:$0xff]
          %v3191 = vld [vmem:[#allocation7 + $0x420] sm:$0xff]
          %v3192 = vld [vmem:[#allocation7 + $0x428] sm:$0xff]
          %v3193 = vld [vmem:[#allocation7 + $0x430] sm:$0xff]
          %v3194 = vld [vmem:[#allocation7 + $0x438] sm:$0xff]
          %v3195 = vld [vmem:[#allocation7 + $0x440] sm:$0xff]
          %v3196 = vld [vmem:[#allocation7 + $0x448] sm:$0xff]
          %v3197 = vld [vmem:[#allocation7 + $0x450] sm:$0xff]
          %v3198 = vld [vmem:[#allocation7 + $0x458] sm:$0xff]
          %v3199 = vld [vmem:[#allocation7 + $0x460] sm:$0xff]
          %v3200 = vld [vmem:[#allocation7 + $0x468] sm:$0xff]
          %v3201 = vld [vmem:[#allocation7 + $0x470] sm:$0xff]
          %v3202 = vld [vmem:[#allocation7 + $0x478] sm:$0xff]
          %v3203 = vld [vmem:[#allocation7 + $0x480] sm:$0xff]
          %v3204 = vld [vmem:[#allocation7 + $0x488] sm:$0xff]
          %v3205 = vld [vmem:[#allocation7 + $0x490] sm:$0xff]
          %v3206 = vld [vmem:[#allocation7 + $0x498] sm:$0xff]
          %v3207 = vld [vmem:[#allocation7 + $0x4a0] sm:$0xff]
          %v3208 = vld [vmem:[#allocation7 + $0x4a8] sm:$0xff]
          %v3209 = vld [vmem:[#allocation7 + $0x4b0] sm:$0xff]
          %v3210 = vld [vmem:[#allocation7 + $0x4b8] sm:$0xff]
          %v3211 = vld [vmem:[#allocation7 + $0x4c0] sm:$0xff]
          %v3212 = vld [vmem:[#allocation7 + $0x4c8] sm:$0xff]
          %v3213 = vld [vmem:[#allocation7 + $0x4d0] sm:$0xff]
          %v3214 = vld [vmem:[#allocation7 + $0x4d8] sm:$0xff]
          %v3215 = vld [vmem:[#allocation7 + $0x4e0] sm:$0xff]
          %v3216 = vld [vmem:[#allocation7 + $0x4e8] sm:$0xff]
          %v3217 = vld [vmem:[#allocation7 + $0x4f0] sm:$0xff]
          %v3218 = vld [vmem:[#allocation7 + $0x4f8] sm:$0xff]
          %v3219 = vld [vmem:[#allocation7 + $0x500] sm:$0xff]
          %v3220 = vld [vmem:[#allocation7 + $0x508] sm:$0xff]
          %v3221 = vld [vmem:[#allocation7 + $0x510] sm:$0xff]
          %v3222 = vld [vmem:[#allocation7 + $0x518] sm:$0xff]
          %v3223 = vld [vmem:[#allocation7 + $0x520] sm:$0xff]
          %v3224 = vld [vmem:[#allocation7 + $0x528] sm:$0xff]
          %v3225 = vld [vmem:[#allocation7 + $0x530] sm:$0xff]
          %v3226 = vld [vmem:[#allocation7 + $0x538] sm:$0xff]
          %v3227 = vld [vmem:[#allocation7 + $0x540] sm:$0xff]
          %v3228 = vld [vmem:[#allocation7 + $0x548] sm:$0xff]
          %v3229 = vld [vmem:[#allocation7 + $0x550] sm:$0xff]
          %v3230 = vld [vmem:[#allocation7 + $0x558] sm:$0xff]
          %v3231 = vld [vmem:[#allocation7 + $0x560] sm:$0xff]
          %v3232 = vld [vmem:[#allocation7 + $0x568] sm:$0xff]
          %v3233 = vld [vmem:[#allocation7 + $0x570] sm:$0xff]
          %v3234 = vld [vmem:[#allocation7 + $0x578] sm:$0xff]
          %v3235 = vld [vmem:[#allocation7 + $0x580] sm:$0xff]
          %v3236 = vld [vmem:[#allocation7 + $0x588] sm:$0xff]
          %v3237 = vld [vmem:[#allocation7 + $0x590] sm:$0xff]
          %v3238 = vld [vmem:[#allocation7 + $0x598] sm:$0xff]
          %v3239 = vld [vmem:[#allocation7 + $0x5a0] sm:$0xff]
          %v3240 = vld [vmem:[#allocation7 + $0x5a8] sm:$0xff]
          %v3241 = vld [vmem:[#allocation7 + $0x5b0] sm:$0xff]
          %v3242 = vld [vmem:[#allocation7 + $0x5b8] sm:$0xff]
          %v3243 = vld [vmem:[#allocation7 + $0x5c0] sm:$0xff]
          %v3244 = vld [vmem:[#allocation7 + $0x5c8] sm:$0xff]
          %v3245 = vld [vmem:[#allocation7 + $0x5d0] sm:$0xff]
          %v3246 = vld [vmem:[#allocation7 + $0x5d8] sm:$0xff]
          %v3247 = vld [vmem:[#allocation7 + $0x5e0] sm:$0xff]
          %v3248 = vld [vmem:[#allocation7 + $0x5e8] sm:$0xff]
          %v3249 = vld [vmem:[#allocation7 + $0x5f0] sm:$0xff]
          %v3250 = vld [vmem:[#allocation7 + $0x5f8] sm:$0xff]
          %v3251 = vld [vmem:[#allocation7 + $0x600] sm:$0xff]
          %v3252 = vld [vmem:[#allocation7 + $0x608] sm:$0xff]
          %v3253 = vld [vmem:[#allocation7 + $0x610] sm:$0xff]
          %v3254 = vld [vmem:[#allocation7 + $0x618] sm:$0xff]
          %v3255 = vld [vmem:[#allocation7 + $0x620] sm:$0xff]
          %v3256 = vld [vmem:[#allocation7 + $0x628] sm:$0xff]
          %v3257 = vld [vmem:[#allocation7 + $0x630] sm:$0xff]
          %v3258 = vld [vmem:[#allocation7 + $0x638] sm:$0xff]
          %v3259 = vld [vmem:[#allocation7 + $0x640] sm:$0xff]
          %v3260 = vld [vmem:[#allocation7 + $0x648] sm:$0xff]
          %v3261 = vld [vmem:[#allocation7 + $0x650] sm:$0xff]
          %v3262 = vld [vmem:[#allocation7 + $0x658] sm:$0xff]
          %v3263 = vld [vmem:[#allocation7 + $0x660] sm:$0xff]
          %v3264 = vld [vmem:[#allocation7 + $0x668] sm:$0xff]
          %v3265 = vld [vmem:[#allocation7 + $0x670] sm:$0xff]
          %v3266 = vld [vmem:[#allocation7 + $0x678] sm:$0xff]
          %v3267 = vld [vmem:[#allocation7 + $0x680] sm:$0xff]
          %v3268 = vld [vmem:[#allocation7 + $0x688] sm:$0xff]
          %v3269 = vld [vmem:[#allocation7 + $0x690] sm:$0xff]
          %v3270 = vld [vmem:[#allocation7 + $0x698] sm:$0xff]
          %v3271 = vld [vmem:[#allocation7 + $0x6a0] sm:$0xff]
          %v3272 = vld [vmem:[#allocation7 + $0x6a8] sm:$0xff]
          %v3273 = vld [vmem:[#allocation7 + $0x6b0] sm:$0xff]
          %v3274 = vld [vmem:[#allocation7 + $0x6b8] sm:$0xff]
          %v3275 = vld [vmem:[#allocation7 + $0x6c0] sm:$0xff]
          %v3276 = vld [vmem:[#allocation7 + $0x6c8] sm:$0xff]
          %v3277 = vld [vmem:[#allocation7 + $0x6d0] sm:$0xff]
          %v3278 = vld [vmem:[#allocation7 + $0x6d8] sm:$0xff]
          %v3279 = vld [vmem:[#allocation7 + $0x6e0] sm:$0xff]
          %v3280 = vld [vmem:[#allocation7 + $0x6e8] sm:$0xff]
          %v3281 = vld [vmem:[#allocation7 + $0x6f0] sm:$0xff]
          %v3282 = vld [vmem:[#allocation7 + $0x6f8] sm:$0xff]
          %v3283 = vld [vmem:[#allocation7 + $0x700] sm:$0xff]
          %v3284 = vld [vmem:[#allocation7 + $0x708] sm:$0xff]
          %v3285 = vld [vmem:[#allocation7 + $0x710] sm:$0xff]
          %v3286 = vld [vmem:[#allocation7 + $0x718] sm:$0xff]
          %v3287 = vld [vmem:[#allocation7 + $0x720] sm:$0xff]
          %v3288 = vld [vmem:[#allocation7 + $0x728] sm:$0xff]
          %v3289 = vld [vmem:[#allocation7 + $0x730] sm:$0xff]
          %v3290 = vld [vmem:[#allocation7 + $0x738] sm:$0xff]
          %v3291 = vld [vmem:[#allocation7 + $0x740] sm:$0xff]
          %v3292 = vld [vmem:[#allocation7 + $0x748] sm:$0xff]
          %v3293 = vld [vmem:[#allocation7 + $0x750] sm:$0xff]
          %v3294 = vld [vmem:[#allocation7 + $0x758] sm:$0xff]
          %v3295 = vld [vmem:[#allocation7 + $0x760] sm:$0xff]
          %v3296 = vld [vmem:[#allocation7 + $0x768] sm:$0xff]
          %v3297 = vld [vmem:[#allocation7 + $0x770] sm:$0xff]
          %v3298 = vld [vmem:[#allocation7 + $0x778] sm:$0xff]
          %v3299 = vld [vmem:[#allocation7 + $0x780] sm:$0xff]
          %v3300 = vld [vmem:[#allocation7 + $0x788] sm:$0xff]
          %v3301 = vld [vmem:[#allocation7 + $0x790] sm:$0xff]
          %v3302 = vld [vmem:[#allocation7 + $0x798] sm:$0xff]
          %v3303 = vld [vmem:[#allocation7 + $0x7a0] sm:$0xff]
          %v3304 = vld [vmem:[#allocation7 + $0x7a8] sm:$0xff]
          %v3305 = vld [vmem:[#allocation7 + $0x7b0] sm:$0xff]
          %v3306 = vld [vmem:[#allocation7 + $0x7b8] sm:$0xff]
          %v3307 = vld [vmem:[#allocation7 + $0x7c0] sm:$0xff]
          %v3308 = vld [vmem:[#allocation7 + $0x7c8] sm:$0xff]
          %v3309 = vld [vmem:[#allocation7 + $0x7d0] sm:$0xff]
          %v3310 = vld [vmem:[#allocation7 + $0x7d8] sm:$0xff]
          %v3311 = vld [vmem:[#allocation7 + $0x7e0] sm:$0xff]
          %v3312 = vld [vmem:[#allocation7 + $0x7e8] sm:$0xff]
          %v3313 = vld [vmem:[#allocation7 + $0x7f0] sm:$0xff]
          %v3314 = vld [vmem:[#allocation7 + $0x7f8] sm:$0xff]
          %v3315 = vunpack.c.l.s8.bf16 %v3059
          %v3316 = vunpack.c.l.s8.bf16 %v3060
          %v3317 = vunpack.c.l.s8.bf16 %v3061
          %v3318 = vunpack.c.l.s8.bf16 %v3062
          %v3319 = vunpack.c.l.s8.bf16 %v3063
          %v3320 = vunpack.c.l.s8.bf16 %v3064
          %v3321 = vunpack.c.l.s8.bf16 %v3065
          %v3322 = vunpack.c.l.s8.bf16 %v3066
          %v3323 = vunpack.c.h.s8.bf16 %v3059
          %v3324 = vunpack.c.h.s8.bf16 %v3060
          %v3325 = vunpack.c.h.s8.bf16 %v3061
          %v3326 = vunpack.c.h.s8.bf16 %v3062
          %v3327 = vunpack.c.h.s8.bf16 %v3063
          %v3328 = vunpack.c.h.s8.bf16 %v3064
          %v3329 = vunpack.c.h.s8.bf16 %v3065
          %v3330 = vunpack.c.h.s8.bf16 %v3066
          %v3331 = vunpack.c.l.s8.bf16 %v3067
          %v3332 = vunpack.c.l.s8.bf16 %v3068
          %v3333 = vunpack.c.l.s8.bf16 %v3069
          %v3334 = vunpack.c.l.s8.bf16 %v3070
          %v3335 = vunpack.c.l.s8.bf16 %v3071
          %v3336 = vunpack.c.l.s8.bf16 %v3072
          %v3337 = vunpack.c.l.s8.bf16 %v3073
          %v3338 = vunpack.c.l.s8.bf16 %v3074
          %v3339 = vunpack.c.h.s8.bf16 %v3067
          %v3340 = vunpack.c.h.s8.bf16 %v3068
          %v3341 = vunpack.c.h.s8.bf16 %v3069
          %v3342 = vunpack.c.h.s8.bf16 %v3070
          %v3343 = vunpack.c.h.s8.bf16 %v3071
          %v3344 = vunpack.c.h.s8.bf16 %v3072
          %v3345 = vunpack.c.h.s8.bf16 %v3073
          %v3346 = vunpack.c.h.s8.bf16 %v3074
          %v3347 = vunpack.c.l.s8.bf16 %v3075
          %v3348 = vunpack.c.l.s8.bf16 %v3076
          %v3349 = vunpack.c.l.s8.bf16 %v3077
          %v3350 = vunpack.c.l.s8.bf16 %v3078
          %v3351 = vunpack.c.l.s8.bf16 %v3079
          %v3352 = vunpack.c.l.s8.bf16 %v3080
          %v3353 = vunpack.c.l.s8.bf16 %v3081
          %v3354 = vunpack.c.l.s8.bf16 %v3082
          %v3355 = vunpack.c.h.s8.bf16 %v3075
          %v3356 = vunpack.c.h.s8.bf16 %v3076
          %v3357 = vunpack.c.h.s8.bf16 %v3077
          %v3358 = vunpack.c.h.s8.bf16 %v3078
          %v3359 = vunpack.c.h.s8.bf16 %v3079
          %v3360 = vunpack.c.h.s8.bf16 %v3080
          %v3361 = vunpack.c.h.s8.bf16 %v3081
          %v3362 = vunpack.c.h.s8.bf16 %v3082
          %v3363 = vunpack.c.l.s8.bf16 %v3083
          %v3364 = vunpack.c.l.s8.bf16 %v3084
          %v3365 = vunpack.c.l.s8.bf16 %v3085
          %v3366 = vunpack.c.l.s8.bf16 %v3086
          %v3367 = vunpack.c.l.s8.bf16 %v3087
          %v3368 = vunpack.c.l.s8.bf16 %v3088
          %v3369 = vunpack.c.l.s8.bf16 %v3089
          %v3370 = vunpack.c.l.s8.bf16 %v3090
          %v3371 = vunpack.c.h.s8.bf16 %v3083
          %v3372 = vunpack.c.h.s8.bf16 %v3084
          %v3373 = vunpack.c.h.s8.bf16 %v3085
          %v3374 = vunpack.c.h.s8.bf16 %v3086
          %v3375 = vunpack.c.h.s8.bf16 %v3087
          %v3376 = vunpack.c.h.s8.bf16 %v3088
          %v3377 = vunpack.c.h.s8.bf16 %v3089
          %v3378 = vunpack.c.h.s8.bf16 %v3090
          %v3379 = vunpack.c.l.s8.bf16 %v3091
          %v3380 = vunpack.c.l.s8.bf16 %v3092
          %v3381 = vunpack.c.l.s8.bf16 %v3093
          %v3382 = vunpack.c.l.s8.bf16 %v3094
          %v3383 = vunpack.c.l.s8.bf16 %v3095
          %v3384 = vunpack.c.l.s8.bf16 %v3096
          %v3385 = vunpack.c.l.s8.bf16 %v3097
          %v3386 = vunpack.c.l.s8.bf16 %v3098
          %v3387 = vunpack.c.h.s8.bf16 %v3091
          %v3388 = vunpack.c.h.s8.bf16 %v3092
          %v3389 = vunpack.c.h.s8.bf16 %v3093
          %v3390 = vunpack.c.h.s8.bf16 %v3094
          %v3391 = vunpack.c.h.s8.bf16 %v3095
          %v3392 = vunpack.c.h.s8.bf16 %v3096
          %v3393 = vunpack.c.h.s8.bf16 %v3097
          %v3394 = vunpack.c.h.s8.bf16 %v3098
          %v3395 = vunpack.c.l.s8.bf16 %v3099
          %v3396 = vunpack.c.l.s8.bf16 %v3100
          %v3397 = vunpack.c.l.s8.bf16 %v3101
          %v3398 = vunpack.c.l.s8.bf16 %v3102
          %v3399 = vunpack.c.l.s8.bf16 %v3103
          %v3400 = vunpack.c.l.s8.bf16 %v3104
          %v3401 = vunpack.c.l.s8.bf16 %v3105
          %v3402 = vunpack.c.l.s8.bf16 %v3106
          %v3403 = vunpack.c.h.s8.bf16 %v3099
          %v3404 = vunpack.c.h.s8.bf16 %v3100
          %v3405 = vunpack.c.h.s8.bf16 %v3101
          %v3406 = vunpack.c.h.s8.bf16 %v3102
          %v3407 = vunpack.c.h.s8.bf16 %v3103
          %v3408 = vunpack.c.h.s8.bf16 %v3104
          %v3409 = vunpack.c.h.s8.bf16 %v3105
          %v3410 = vunpack.c.h.s8.bf16 %v3106
          %v3411 = vunpack.c.l.s8.bf16 %v3107
          %v3412 = vunpack.c.l.s8.bf16 %v3108
          %v3413 = vunpack.c.l.s8.bf16 %v3109
          %v3414 = vunpack.c.l.s8.bf16 %v3110
          %v3415 = vunpack.c.l.s8.bf16 %v3111
          %v3416 = vunpack.c.l.s8.bf16 %v3112
          %v3417 = vunpack.c.l.s8.bf16 %v3113
          %v3418 = vunpack.c.l.s8.bf16 %v3114
          %v3419 = vunpack.c.h.s8.bf16 %v3107
          %v3420 = vunpack.c.h.s8.bf16 %v3108
          %v3421 = vunpack.c.h.s8.bf16 %v3109
          %v3422 = vunpack.c.h.s8.bf16 %v3110
          %v3423 = vunpack.c.h.s8.bf16 %v3111
          %v3424 = vunpack.c.h.s8.bf16 %v3112
          %v3425 = vunpack.c.h.s8.bf16 %v3113
          %v3426 = vunpack.c.h.s8.bf16 %v3114
          %v3427 = vunpack.c.l.s8.bf16 %v3115
          %v3428 = vunpack.c.l.s8.bf16 %v3116
          %v3429 = vunpack.c.l.s8.bf16 %v3117
          %v3430 = vunpack.c.l.s8.bf16 %v3118
          %v3431 = vunpack.c.l.s8.bf16 %v3119
          %v3432 = vunpack.c.l.s8.bf16 %v3120
          %v3433 = vunpack.c.l.s8.bf16 %v3121
          %v3434 = vunpack.c.l.s8.bf16 %v3122
          %v3435 = vunpack.c.h.s8.bf16 %v3115
          %v3436 = vunpack.c.h.s8.bf16 %v3116
          %v3437 = vunpack.c.h.s8.bf16 %v3117
          %v3438 = vunpack.c.h.s8.bf16 %v3118
          %v3439 = vunpack.c.h.s8.bf16 %v3119
          %v3440 = vunpack.c.h.s8.bf16 %v3120
          %v3441 = vunpack.c.h.s8.bf16 %v3121
          %v3442 = vunpack.c.h.s8.bf16 %v3122
          %v3443 = vunpack.c.l.s8.bf16 %v3123
          %v3444 = vunpack.c.l.s8.bf16 %v3124
          %v3445 = vunpack.c.l.s8.bf16 %v3125
          %v3446 = vunpack.c.l.s8.bf16 %v3126
          %v3447 = vunpack.c.l.s8.bf16 %v3127
          %v3448 = vunpack.c.l.s8.bf16 %v3128
          %v3449 = vunpack.c.l.s8.bf16 %v3129
          %v3450 = vunpack.c.l.s8.bf16 %v3130
          %v3451 = vunpack.c.h.s8.bf16 %v3123
          %v3452 = vunpack.c.h.s8.bf16 %v3124
          %v3453 = vunpack.c.h.s8.bf16 %v3125
          %v3454 = vunpack.c.h.s8.bf16 %v3126
          %v3455 = vunpack.c.h.s8.bf16 %v3127
          %v3456 = vunpack.c.h.s8.bf16 %v3128
          %v3457 = vunpack.c.h.s8.bf16 %v3129
          %v3458 = vunpack.c.h.s8.bf16 %v3130
          %v3459 = vunpack.c.l.s8.bf16 %v3131
          %v3460 = vunpack.c.l.s8.bf16 %v3132
          %v3461 = vunpack.c.l.s8.bf16 %v3133
          %v3462 = vunpack.c.l.s8.bf16 %v3134
          %v3463 = vunpack.c.l.s8.bf16 %v3135
          %v3464 = vunpack.c.l.s8.bf16 %v3136
          %v3465 = vunpack.c.l.s8.bf16 %v3137
          %v3466 = vunpack.c.l.s8.bf16 %v3138
          %v3467 = vunpack.c.h.s8.bf16 %v3131
          %v3468 = vunpack.c.h.s8.bf16 %v3132
          %v3469 = vunpack.c.h.s8.bf16 %v3133
          %v3470 = vunpack.c.h.s8.bf16 %v3134
          %v3471 = vunpack.c.h.s8.bf16 %v3135
          %v3472 = vunpack.c.h.s8.bf16 %v3136
          %v3473 = vunpack.c.h.s8.bf16 %v3137
          %v3474 = vunpack.c.h.s8.bf16 %v3138
          %v3475 = vunpack.c.l.s8.bf16 %v3139
          %v3476 = vunpack.c.l.s8.bf16 %v3140
          %v3477 = vunpack.c.l.s8.bf16 %v3141
          %v3478 = vunpack.c.l.s8.bf16 %v3142
          %v3479 = vunpack.c.l.s8.bf16 %v3143
          %v3480 = vunpack.c.l.s8.bf16 %v3144
          %v3481 = vunpack.c.l.s8.bf16 %v3145
          %v3482 = vunpack.c.l.s8.bf16 %v3146
          %v3483 = vunpack.c.h.s8.bf16 %v3139
          %v3484 = vunpack.c.h.s8.bf16 %v3140
          %v3485 = vunpack.c.h.s8.bf16 %v3141
          %v3486 = vunpack.c.h.s8.bf16 %v3142
          %v3487 = vunpack.c.h.s8.bf16 %v3143
          %v3488 = vunpack.c.h.s8.bf16 %v3144
          %v3489 = vunpack.c.h.s8.bf16 %v3145
          %v3490 = vunpack.c.h.s8.bf16 %v3146
          %v3491 = vunpack.c.l.s8.bf16 %v3147
          %v3492 = vunpack.c.l.s8.bf16 %v3148
          %v3493 = vunpack.c.l.s8.bf16 %v3149
          %v3494 = vunpack.c.l.s8.bf16 %v3150
          %v3495 = vunpack.c.l.s8.bf16 %v3151
          %v3496 = vunpack.c.l.s8.bf16 %v3152
          %v3497 = vunpack.c.l.s8.bf16 %v3153
          %v3498 = vunpack.c.l.s8.bf16 %v3154
          %v3499 = vunpack.c.h.s8.bf16 %v3147
          %v3500 = vunpack.c.h.s8.bf16 %v3148
          %v3501 = vunpack.c.h.s8.bf16 %v3149
          %v3502 = vunpack.c.h.s8.bf16 %v3150
          %v3503 = vunpack.c.h.s8.bf16 %v3151
          %v3504 = vunpack.c.h.s8.bf16 %v3152
          %v3505 = vunpack.c.h.s8.bf16 %v3153
          %v3506 = vunpack.c.h.s8.bf16 %v3154
          %v3507 = vunpack.c.l.s8.bf16 %v3155
          %v3508 = vunpack.c.l.s8.bf16 %v3156
          %v3509 = vunpack.c.l.s8.bf16 %v3157
          %v3510 = vunpack.c.l.s8.bf16 %v3158
          %v3511 = vunpack.c.l.s8.bf16 %v3159
          %v3512 = vunpack.c.l.s8.bf16 %v3160
          %v3513 = vunpack.c.l.s8.bf16 %v3161
          %v3514 = vunpack.c.l.s8.bf16 %v3162
          %v3515 = vunpack.c.h.s8.bf16 %v3155
          %v3516 = vunpack.c.h.s8.bf16 %v3156
          %v3517 = vunpack.c.h.s8.bf16 %v3157
          %v3518 = vunpack.c.h.s8.bf16 %v3158
          %v3519 = vunpack.c.h.s8.bf16 %v3159
          %v3520 = vunpack.c.h.s8.bf16 %v3160
          %v3521 = vunpack.c.h.s8.bf16 %v3161
          %v3522 = vunpack.c.h.s8.bf16 %v3162
          %v3523 = vunpack.c.l.s8.bf16 %v3163
          %v3524 = vunpack.c.l.s8.bf16 %v3164
          %v3525 = vunpack.c.l.s8.bf16 %v3165
          %v3526 = vunpack.c.l.s8.bf16 %v3166
          %v3527 = vunpack.c.l.s8.bf16 %v3167
          %v3528 = vunpack.c.l.s8.bf16 %v3168
          %v3529 = vunpack.c.l.s8.bf16 %v3169
          %v3530 = vunpack.c.l.s8.bf16 %v3170
          %v3531 = vunpack.c.h.s8.bf16 %v3163
          %v3532 = vunpack.c.h.s8.bf16 %v3164
          %v3533 = vunpack.c.h.s8.bf16 %v3165
          %v3534 = vunpack.c.h.s8.bf16 %v3166
          %v3535 = vunpack.c.h.s8.bf16 %v3167
          %v3536 = vunpack.c.h.s8.bf16 %v3168
          %v3537 = vunpack.c.h.s8.bf16 %v3169
          %v3538 = vunpack.c.h.s8.bf16 %v3170
          %v3539 = vunpack.c.l.s8.bf16 %v3171
          %v3540 = vunpack.c.l.s8.bf16 %v3172
          %v3541 = vunpack.c.l.s8.bf16 %v3173
          %v3542 = vunpack.c.l.s8.bf16 %v3174
          %v3543 = vunpack.c.l.s8.bf16 %v3175
          %v3544 = vunpack.c.l.s8.bf16 %v3176
          %v3545 = vunpack.c.l.s8.bf16 %v3177
          %v3546 = vunpack.c.l.s8.bf16 %v3178
          %v3547 = vunpack.c.h.s8.bf16 %v3171
          %v3548 = vunpack.c.h.s8.bf16 %v3172
          %v3549 = vunpack.c.h.s8.bf16 %v3173
          %v3550 = vunpack.c.h.s8.bf16 %v3174
          %v3551 = vunpack.c.h.s8.bf16 %v3175
          %v3552 = vunpack.c.h.s8.bf16 %v3176
          %v3553 = vunpack.c.h.s8.bf16 %v3177
          %v3554 = vunpack.c.h.s8.bf16 %v3178
          %v3555 = vunpack.c.l.s8.bf16 %v3179
          %v3556 = vunpack.c.l.s8.bf16 %v3180
          %v3557 = vunpack.c.l.s8.bf16 %v3181
          %v3558 = vunpack.c.l.s8.bf16 %v3182
          %v3559 = vunpack.c.l.s8.bf16 %v3183
          %v3560 = vunpack.c.l.s8.bf16 %v3184
          %v3561 = vunpack.c.l.s8.bf16 %v3185
          %v3562 = vunpack.c.l.s8.bf16 %v3186
          %v3563 = vunpack.c.h.s8.bf16 %v3179
          %v3564 = vunpack.c.h.s8.bf16 %v3180
          %v3565 = vunpack.c.h.s8.bf16 %v3181
          %v3566 = vunpack.c.h.s8.bf16 %v3182
          %v3567 = vunpack.c.h.s8.bf16 %v3183
          %v3568 = vunpack.c.h.s8.bf16 %v3184
          %v3569 = vunpack.c.h.s8.bf16 %v3185
          %v3570 = vunpack.c.h.s8.bf16 %v3186
          %v3571 = vunpack.c.l.s8.bf16 %v3187
          %v3572 = vunpack.c.l.s8.bf16 %v3188
          %v3573 = vunpack.c.l.s8.bf16 %v3189
          %v3574 = vunpack.c.l.s8.bf16 %v3190
          %v3575 = vunpack.c.l.s8.bf16 %v3191
          %v3576 = vunpack.c.l.s8.bf16 %v3192
          %v3577 = vunpack.c.l.s8.bf16 %v3193
          %v3578 = vunpack.c.l.s8.bf16 %v3194
          %v3579 = vunpack.c.h.s8.bf16 %v3187
          %v3580 = vunpack.c.h.s8.bf16 %v3188
          %v3581 = vunpack.c.h.s8.bf16 %v3189
          %v3582 = vunpack.c.h.s8.bf16 %v3190
          %v3583 = vunpack.c.h.s8.bf16 %v3191
          %v3584 = vunpack.c.h.s8.bf16 %v3192
          %v3585 = vunpack.c.h.s8.bf16 %v3193
          %v3586 = vunpack.c.h.s8.bf16 %v3194
          %v3587 = vunpack.c.l.s8.bf16 %v3195
          %v3588 = vunpack.c.l.s8.bf16 %v3196
          %v3589 = vunpack.c.l.s8.bf16 %v3197
          %v3590 = vunpack.c.l.s8.bf16 %v3198
          %v3591 = vunpack.c.l.s8.bf16 %v3199
          %v3592 = vunpack.c.l.s8.bf16 %v3200
          %v3593 = vunpack.c.l.s8.bf16 %v3201
          %v3594 = vunpack.c.l.s8.bf16 %v3202
          %v3595 = vunpack.c.h.s8.bf16 %v3195
          %v3596 = vunpack.c.h.s8.bf16 %v3196
          %v3597 = vunpack.c.h.s8.bf16 %v3197
          %v3598 = vunpack.c.h.s8.bf16 %v3198
          %v3599 = vunpack.c.h.s8.bf16 %v3199
          %v3600 = vunpack.c.h.s8.bf16 %v3200
          %v3601 = vunpack.c.h.s8.bf16 %v3201
          %v3602 = vunpack.c.h.s8.bf16 %v3202
          %v3603 = vunpack.c.l.s8.bf16 %v3203
          %v3604 = vunpack.c.l.s8.bf16 %v3204
          %v3605 = vunpack.c.l.s8.bf16 %v3205
          %v3606 = vunpack.c.l.s8.bf16 %v3206
          %v3607 = vunpack.c.l.s8.bf16 %v3207
          %v3608 = vunpack.c.l.s8.bf16 %v3208
          %v3609 = vunpack.c.l.s8.bf16 %v3209
          %v3610 = vunpack.c.l.s8.bf16 %v3210
          %v3611 = vunpack.c.h.s8.bf16 %v3203
          %v3612 = vunpack.c.h.s8.bf16 %v3204
          %v3613 = vunpack.c.h.s8.bf16 %v3205
          %v3614 = vunpack.c.h.s8.bf16 %v3206
          %v3615 = vunpack.c.h.s8.bf16 %v3207
          %v3616 = vunpack.c.h.s8.bf16 %v3208
          %v3617 = vunpack.c.h.s8.bf16 %v3209
          %v3618 = vunpack.c.h.s8.bf16 %v3210
          %v3619 = vunpack.c.l.s8.bf16 %v3211
          %v3620 = vunpack.c.l.s8.bf16 %v3212
          %v3621 = vunpack.c.l.s8.bf16 %v3213
          %v3622 = vunpack.c.l.s8.bf16 %v3214
          %v3623 = vunpack.c.l.s8.bf16 %v3215
          %v3624 = vunpack.c.l.s8.bf16 %v3216
          %v3625 = vunpack.c.l.s8.bf16 %v3217
          %v3626 = vunpack.c.l.s8.bf16 %v3218
          %v3627 = vunpack.c.h.s8.bf16 %v3211
          %v3628 = vunpack.c.h.s8.bf16 %v3212
          %v3629 = vunpack.c.h.s8.bf16 %v3213
          %v3630 = vunpack.c.h.s8.bf16 %v3214
          %v3631 = vunpack.c.h.s8.bf16 %v3215
          %v3632 = vunpack.c.h.s8.bf16 %v3216
          %v3633 = vunpack.c.h.s8.bf16 %v3217
          %v3634 = vunpack.c.h.s8.bf16 %v3218
          %v3635 = vunpack.c.l.s8.bf16 %v3219
          %v3636 = vunpack.c.l.s8.bf16 %v3220
          %v3637 = vunpack.c.l.s8.bf16 %v3221
          %v3638 = vunpack.c.l.s8.bf16 %v3222
          %v3639 = vunpack.c.l.s8.bf16 %v3223
          %v3640 = vunpack.c.l.s8.bf16 %v3224
          %v3641 = vunpack.c.l.s8.bf16 %v3225
          %v3642 = vunpack.c.l.s8.bf16 %v3226
          %v3643 = vunpack.c.h.s8.bf16 %v3219
          %v3644 = vunpack.c.h.s8.bf16 %v3220
          %v3645 = vunpack.c.h.s8.bf16 %v3221
          %v3646 = vunpack.c.h.s8.bf16 %v3222
          %v3647 = vunpack.c.h.s8.bf16 %v3223
          %v3648 = vunpack.c.h.s8.bf16 %v3224
          %v3649 = vunpack.c.h.s8.bf16 %v3225
          %v3650 = vunpack.c.h.s8.bf16 %v3226
          %v3651 = vunpack.c.l.s8.bf16 %v3227
          %v3652 = vunpack.c.l.s8.bf16 %v3228
          %v3653 = vunpack.c.l.s8.bf16 %v3229
          %v3654 = vunpack.c.l.s8.bf16 %v3230
          %v3655 = vunpack.c.l.s8.bf16 %v3231
          %v3656 = vunpack.c.l.s8.bf16 %v3232
          %v3657 = vunpack.c.l.s8.bf16 %v3233
          %v3658 = vunpack.c.l.s8.bf16 %v3234
          %v3659 = vunpack.c.h.s8.bf16 %v3227
          %v3660 = vunpack.c.h.s8.bf16 %v3228
          %v3661 = vunpack.c.h.s8.bf16 %v3229
          %v3662 = vunpack.c.h.s8.bf16 %v3230
          %v3663 = vunpack.c.h.s8.bf16 %v3231
          %v3664 = vunpack.c.h.s8.bf16 %v3232
          %v3665 = vunpack.c.h.s8.bf16 %v3233
          %v3666 = vunpack.c.h.s8.bf16 %v3234
          %v3667 = vunpack.c.l.s8.bf16 %v3235
          %v3668 = vunpack.c.l.s8.bf16 %v3236
          %v3669 = vunpack.c.l.s8.bf16 %v3237
          %v3670 = vunpack.c.l.s8.bf16 %v3238
          %v3671 = vunpack.c.l.s8.bf16 %v3239
          %v3672 = vunpack.c.l.s8.bf16 %v3240
          %v3673 = vunpack.c.l.s8.bf16 %v3241
          %v3674 = vunpack.c.l.s8.bf16 %v3242
          %v3675 = vunpack.c.h.s8.bf16 %v3235
          %v3676 = vunpack.c.h.s8.bf16 %v3236
          %v3677 = vunpack.c.h.s8.bf16 %v3237
          %v3678 = vunpack.c.h.s8.bf16 %v3238
          %v3679 = vunpack.c.h.s8.bf16 %v3239
          %v3680 = vunpack.c.h.s8.bf16 %v3240
          %v3681 = vunpack.c.h.s8.bf16 %v3241
          %v3682 = vunpack.c.h.s8.bf16 %v3242
          %v3683 = vunpack.c.l.s8.bf16 %v3243
          %v3684 = vunpack.c.l.s8.bf16 %v3244
          %v3685 = vunpack.c.l.s8.bf16 %v3245
          %v3686 = vunpack.c.l.s8.bf16 %v3246
          %v3687 = vunpack.c.l.s8.bf16 %v3247
          %v3688 = vunpack.c.l.s8.bf16 %v3248
          %v3689 = vunpack.c.l.s8.bf16 %v3249
          %v3690 = vunpack.c.l.s8.bf16 %v3250
          %v3691 = vunpack.c.h.s8.bf16 %v3243
          %v3692 = vunpack.c.h.s8.bf16 %v3244
          %v3693 = vunpack.c.h.s8.bf16 %v3245
          %v3694 = vunpack.c.h.s8.bf16 %v3246
          %v3695 = vunpack.c.h.s8.bf16 %v3247
          %v3696 = vunpack.c.h.s8.bf16 %v3248
          %v3697 = vunpack.c.h.s8.bf16 %v3249
          %v3698 = vunpack.c.h.s8.bf16 %v3250
          %v3699 = vunpack.c.l.s8.bf16 %v3251
          %v3700 = vunpack.c.l.s8.bf16 %v3252
          %v3701 = vunpack.c.l.s8.bf16 %v3253
          %v3702 = vunpack.c.l.s8.bf16 %v3254
          %v3703 = vunpack.c.l.s8.bf16 %v3255
          %v3704 = vunpack.c.l.s8.bf16 %v3256
          %v3705 = vunpack.c.l.s8.bf16 %v3257
          %v3706 = vunpack.c.l.s8.bf16 %v3258
          %v3707 = vunpack.c.h.s8.bf16 %v3251
          %v3708 = vunpack.c.h.s8.bf16 %v3252
          %v3709 = vunpack.c.h.s8.bf16 %v3253
          %v3710 = vunpack.c.h.s8.bf16 %v3254
          %v3711 = vunpack.c.h.s8.bf16 %v3255
          %v3712 = vunpack.c.h.s8.bf16 %v3256
          %v3713 = vunpack.c.h.s8.bf16 %v3257
          %v3714 = vunpack.c.h.s8.bf16 %v3258
          %v3715 = vunpack.c.l.s8.bf16 %v3259
          %v3716 = vunpack.c.l.s8.bf16 %v3260
          %v3717 = vunpack.c.l.s8.bf16 %v3261
          %v3718 = vunpack.c.l.s8.bf16 %v3262
          %v3719 = vunpack.c.l.s8.bf16 %v3263
          %v3720 = vunpack.c.l.s8.bf16 %v3264
          %v3721 = vunpack.c.l.s8.bf16 %v3265
          %v3722 = vunpack.c.l.s8.bf16 %v3266
          %v3723 = vunpack.c.h.s8.bf16 %v3259
          %v3724 = vunpack.c.h.s8.bf16 %v3260
          %v3725 = vunpack.c.h.s8.bf16 %v3261
          %v3726 = vunpack.c.h.s8.bf16 %v3262
          %v3727 = vunpack.c.h.s8.bf16 %v3263
          %v3728 = vunpack.c.h.s8.bf16 %v3264
          %v3729 = vunpack.c.h.s8.bf16 %v3265
          %v3730 = vunpack.c.h.s8.bf16 %v3266
          %v3731 = vunpack.c.l.s8.bf16 %v3267
          %v3732 = vunpack.c.l.s8.bf16 %v3268
          %v3733 = vunpack.c.l.s8.bf16 %v3269
          %v3734 = vunpack.c.l.s8.bf16 %v3270
          %v3735 = vunpack.c.l.s8.bf16 %v3271
          %v3736 = vunpack.c.l.s8.bf16 %v3272
          %v3737 = vunpack.c.l.s8.bf16 %v3273
          %v3738 = vunpack.c.l.s8.bf16 %v3274
          %v3739 = vunpack.c.h.s8.bf16 %v3267
          %v3740 = vunpack.c.h.s8.bf16 %v3268
          %v3741 = vunpack.c.h.s8.bf16 %v3269
          %v3742 = vunpack.c.h.s8.bf16 %v3270
          %v3743 = vunpack.c.h.s8.bf16 %v3271
          %v3744 = vunpack.c.h.s8.bf16 %v3272
          %v3745 = vunpack.c.h.s8.bf16 %v3273
          %v3746 = vunpack.c.h.s8.bf16 %v3274
          %v3747 = vunpack.c.l.s8.bf16 %v3275
          %v3748 = vunpack.c.l.s8.bf16 %v3276
          %v3749 = vunpack.c.l.s8.bf16 %v3277
          %v3750 = vunpack.c.l.s8.bf16 %v3278
          %v3751 = vunpack.c.l.s8.bf16 %v3279
          %v3752 = vunpack.c.l.s8.bf16 %v3280
          %v3753 = vunpack.c.l.s8.bf16 %v3281
          %v3754 = vunpack.c.l.s8.bf16 %v3282
          %v3755 = vunpack.c.h.s8.bf16 %v3275
          %v3756 = vunpack.c.h.s8.bf16 %v3276
          %v3757 = vunpack.c.h.s8.bf16 %v3277
          %v3758 = vunpack.c.h.s8.bf16 %v3278
          %v3759 = vunpack.c.h.s8.bf16 %v3279
          %v3760 = vunpack.c.h.s8.bf16 %v3280
          %v3761 = vunpack.c.h.s8.bf16 %v3281
          %v3762 = vunpack.c.h.s8.bf16 %v3282
          %v3763 = vunpack.c.l.s8.bf16 %v3283
          %v3764 = vunpack.c.l.s8.bf16 %v3284
          %v3765 = vunpack.c.l.s8.bf16 %v3285
          %v3766 = vunpack.c.l.s8.bf16 %v3286
          %v3767 = vunpack.c.l.s8.bf16 %v3287
          %v3768 = vunpack.c.l.s8.bf16 %v3288
          %v3769 = vunpack.c.l.s8.bf16 %v3289
          %v3770 = vunpack.c.l.s8.bf16 %v3290
          %v3771 = vunpack.c.h.s8.bf16 %v3283
          %v3772 = vunpack.c.h.s8.bf16 %v3284
          %v3773 = vunpack.c.h.s8.bf16 %v3285
          %v3774 = vunpack.c.h.s8.bf16 %v3286
          %v3775 = vunpack.c.h.s8.bf16 %v3287
          %v3776 = vunpack.c.h.s8.bf16 %v3288
          %v3777 = vunpack.c.h.s8.bf16 %v3289
          %v3778 = vunpack.c.h.s8.bf16 %v3290
          %v3779 = vunpack.c.l.s8.bf16 %v3291
          %v3780 = vunpack.c.l.s8.bf16 %v3292
          %v3781 = vunpack.c.l.s8.bf16 %v3293
          %v3782 = vunpack.c.l.s8.bf16 %v3294
          %v3783 = vunpack.c.l.s8.bf16 %v3295
          %v3784 = vunpack.c.l.s8.bf16 %v3296
          %v3785 = vunpack.c.l.s8.bf16 %v3297
          %v3786 = vunpack.c.l.s8.bf16 %v3298
          %v3787 = vunpack.c.h.s8.bf16 %v3291
          %v3788 = vunpack.c.h.s8.bf16 %v3292
          %v3789 = vunpack.c.h.s8.bf16 %v3293
          %v3790 = vunpack.c.h.s8.bf16 %v3294
          %v3791 = vunpack.c.h.s8.bf16 %v3295
          %v3792 = vunpack.c.h.s8.bf16 %v3296
          %v3793 = vunpack.c.h.s8.bf16 %v3297
          %v3794 = vunpack.c.h.s8.bf16 %v3298
          %v3795 = vunpack.c.l.s8.bf16 %v3299
          %v3796 = vunpack.c.l.s8.bf16 %v3300
          %v3797 = vunpack.c.l.s8.bf16 %v3301
          %v3798 = vunpack.c.l.s8.bf16 %v3302
          %v3799 = vunpack.c.l.s8.bf16 %v3303
          %v3800 = vunpack.c.l.s8.bf16 %v3304
          %v3801 = vunpack.c.l.s8.bf16 %v3305
          %v3802 = vunpack.c.l.s8.bf16 %v3306
          %v3803 = vunpack.c.h.s8.bf16 %v3299
          %v3804 = vunpack.c.h.s8.bf16 %v3300
          %v3805 = vunpack.c.h.s8.bf16 %v3301
          %v3806 = vunpack.c.h.s8.bf16 %v3302
          %v3807 = vunpack.c.h.s8.bf16 %v3303
          %v3808 = vunpack.c.h.s8.bf16 %v3304
          %v3809 = vunpack.c.h.s8.bf16 %v3305
          %v3810 = vunpack.c.h.s8.bf16 %v3306
          %v3811 = vunpack.c.l.s8.bf16 %v3307
          %v3812 = vunpack.c.l.s8.bf16 %v3308
          %v3813 = vunpack.c.l.s8.bf16 %v3309
          %v3814 = vunpack.c.l.s8.bf16 %v3310
          %v3815 = vunpack.c.l.s8.bf16 %v3311
          %v3816 = vunpack.c.l.s8.bf16 %v3312
          %v3817 = vunpack.c.l.s8.bf16 %v3313
          %v3818 = vunpack.c.l.s8.bf16 %v3314
          %v3819 = vunpack.c.h.s8.bf16 %v3307
          %v3820 = vunpack.c.h.s8.bf16 %v3308
          %v3821 = vunpack.c.h.s8.bf16 %v3309
          %v3822 = vunpack.c.h.s8.bf16 %v3310
          %v3823 = vunpack.c.h.s8.bf16 %v3311
          %v3824 = vunpack.c.h.s8.bf16 %v3312
          %v3825 = vunpack.c.h.s8.bf16 %v3313
          %v3826 = vunpack.c.h.s8.bf16 %v3314
          %3827 = vmatprep.subr.bf16.mxu0 %v3316
          %3828 = vmatpush1.bf16.msra.mxu0 %v3315
          %3829 = vmatprep.subr.bf16.mxu0 %v3324
          %3830 = vmatpush1.bf16.msra.mxu0 %v3323
          %3831 = vmatprep.subr.bf16.mxu0 %v3332
          %3832 = vmatpush1.bf16.msra.mxu0 %v3331
          %3833 = vmatprep.subr.bf16.mxu0 %v3340
          %3834 = vmatpush1.bf16.msra.mxu0 %v3339
          %3835 = vmatprep.subr.bf16.mxu0 %v3348
          %3836 = vmatpush1.bf16.msra.mxu0 %v3347
          %3837 = vmatprep.subr.bf16.mxu0 %v3356
          %3838 = vmatpush1.bf16.msra.mxu0 %v3355
          %3839 = vmatprep.subr.bf16.mxu0 %v3364
          %3840 = vmatpush1.bf16.msra.mxu0 %v3363
          %3841 = vmatprep.subr.bf16.mxu0 %v3372
          %3842 = vmatpush1.bf16.msra.mxu0 %v3371
          %3843 = vmatprep.subr.bf16.mxu0 %v3380
          %3844 = vmatpush1.bf16.msra.mxu0 %v3379
          %3845 = vmatprep.subr.bf16.mxu0 %v3388
          %3846 = vmatpush1.bf16.msra.mxu0 %v3387
          %3847 = vmatprep.subr.bf16.mxu0 %v3396
          %3848 = vmatpush1.bf16.msra.mxu0 %v3395
          %3849 = vmatprep.subr.bf16.mxu0 %v3404
          %3850 = vmatpush1.bf16.msra.mxu0 %v3403
          %3851 = vmatprep.subr.bf16.mxu0 %v3412
          %3852 = vmatpush1.bf16.msra.mxu0 %v3411
          %3853 = vmatprep.subr.bf16.mxu0 %v3420
          %3854 = vmatpush1.bf16.msra.mxu0 %v3419
          %3855 = vmatprep.subr.bf16.mxu0 %v3428
          %3856 = vmatpush1.bf16.msra.mxu0 %v3427
          %3857 = vmatprep.subr.bf16.mxu0 %v3436
          %3858 = vmatpush1.bf16.msra.mxu0 %v3435
          %3859 = vmatprep.mubr.bf16.mxu0 %v3052
          %3860 = vmatmul.mubr.bf16.gmra.mrb[0].mxu0 %v3051
          %v3861 = vpop.f32.mrb[0].mxu0
          %v3862 = vadd.f32 0.0, %v3861
          %v3863 = vpop.f32.mrb[0].mxu0
          %v3864 = vadd.f32 0.0, %v3863
          %v3865 = vpop.f32.mrb[0].mxu0
          %v3866 = vadd.f32 0.0, %v3865
          %v3867 = vpop.f32.mrb[0].mxu0
          %v3868 = vadd.f32 0.0, %v3867
          %3869 = vdwg.mxu0
          %3870 = vmatprep.subr.bf16.mxu0 %v3444
          %3871 = vmatpush1.bf16.msra.mxu0 %v3443
          %3872 = vmatprep.subr.bf16.mxu0 %v3452
          %3873 = vmatpush1.bf16.msra.mxu0 %v3451
          %3874 = vmatprep.subr.bf16.mxu0 %v3460
          %3875 = vmatpush1.bf16.msra.mxu0 %v3459
          %3876 = vmatprep.subr.bf16.mxu0 %v3468
          %3877 = vmatpush1.bf16.msra.mxu0 %v3467
          %3878 = vmatprep.subr.bf16.mxu0 %v3476
          %3879 = vmatpush1.bf16.msra.mxu0 %v3475
          %3880 = vmatprep.subr.bf16.mxu0 %v3484
          %3881 = vmatpush1.bf16.msra.mxu0 %v3483
          %3882 = vmatprep.subr.bf16.mxu0 %v3492
          %3883 = vmatpush1.bf16.msra.mxu0 %v3491
          %3884 = vmatprep.subr.bf16.mxu0 %v3500
          %3885 = vmatpush1.bf16.msra.mxu0 %v3499
          %3886 = vmatprep.subr.bf16.mxu0 %v3508
          %3887 = vmatpush1.bf16.msra.mxu0 %v3507
          %3888 = vmatprep.subr.bf16.mxu0 %v3516
          %3889 = vmatpush1.bf16.msra.mxu0 %v3515
          %3890 = vmatprep.subr.bf16.mxu0 %v3524
          %3891 = vmatpush1.bf16.msra.mxu0 %v3523
          %3892 = vmatprep.subr.bf16.mxu0 %v3532
          %3893 = vmatpush1.bf16.msra.mxu0 %v3531
          %3894 = vmatprep.subr.bf16.mxu0 %v3540
          %3895 = vmatpush1.bf16.msra.mxu0 %v3539
          %3896 = vmatprep.subr.bf16.mxu0 %v3548
          %3897 = vmatpush1.bf16.msra.mxu0 %v3547
          %3898 = vmatprep.subr.bf16.mxu0 %v3556
          %3899 = vmatpush1.bf16.msra.mxu0 %v3555
          %3900 = vmatprep.subr.bf16.mxu0 %v3564
          %3901 = vmatpush1.bf16.msra.mxu0 %v3563
          %3902 = vmatprep.mubr.bf16.mxu0 %v3054
          %3903 = vmatmul.mubr.bf16.gmra.mrb[0].mxu0 %v3053
          %v3904 = vpop.f32.mrb[0].mxu0
          %v3905 = vadd.f32 %v3862, %v3904
          %v3906 = vpop.f32.mrb[0].mxu0
          %v3907 = vadd.f32 %v3864, %v3906
          %v3908 = vpop.f32.mrb[0].mxu0
          %v3909 = vadd.f32 %v3866, %v3908
          %v3910 = vpop.f32.mrb[0].mxu0
          %v3911 = vadd.f32 %v3868, %v3910
          %3912 = vdwg.mxu0
          %3913 = vmatprep.subr.bf16.mxu0 %v3572
          %3914 = vmatpush1.bf16.msra.mxu0 %v3571
          %3915 = vmatprep.subr.bf16.mxu0 %v3580
          %3916 = vmatpush1.bf16.msra.mxu0 %v3579
          %3917 = vmatprep.subr.bf16.mxu0 %v3588
          %3918 = vmatpush1.bf16.msra.mxu0 %v3587
          %3919 = vmatprep.subr.bf16.mxu0 %v3596
          %3920 = vmatpush1.bf16.msra.mxu0 %v3595
          %3921 = vmatprep.subr.bf16.mxu0 %v3604
          %3922 = vmatpush1.bf16.msra.mxu0 %v3603
          %3923 = vmatprep.subr.bf16.mxu0 %v3612
          %3924 = vmatpush1.bf16.msra.mxu0 %v3611
          %3925 = vmatprep.subr.bf16.mxu0 %v3620
          %3926 = vmatpush1.bf16.msra.mxu0 %v3619
          %3927 = vmatprep.subr.bf16.mxu0 %v3628
          %3928 = vmatpush1.bf16.msra.mxu0 %v3627
          %3929 = vmatprep.subr.bf16.mxu0 %v3636
          %3930 = vmatpush1.bf16.msra.mxu0 %v3635
          %3931 = vmatprep.subr.bf16.mxu0 %v3644
          %3932 = vmatpush1.bf16.msra.mxu0 %v3643
          %3933 = vmatprep.subr.bf16.mxu0 %v3652
          %3934 = vmatpush1.bf16.msra.mxu0 %v3651
          %3935 = vmatprep.subr.bf16.mxu0 %v3660
          %3936 = vmatpush1.bf16.msra.mxu0 %v3659
          %3937 = vmatprep.subr.bf16.mxu0 %v3668
          %3938 = vmatpush1.bf16.msra.mxu0 %v3667
          %3939 = vmatprep.subr.bf16.mxu0 %v3676
          %3940 = vmatpush1.bf16.msra.mxu0 %v3675
          %3941 = vmatprep.subr.bf16.mxu0 %v3684
          %3942 = vmatpush1.bf16.msra.mxu0 %v3683
          %3943 = vmatprep.subr.bf16.mxu0 %v3692
          %3944 = vmatpush1.bf16.msra.mxu0 %v3691
          %3945 = vmatprep.mubr.bf16.mxu0 %v3056
          %3946 = vmatmul.mubr.bf16.gmra.mrb[0].mxu0 %v3055
          %v3947 = vpop.f32.mrb[0].mxu0
          %v3948 = vadd.f32 %v3905, %v3947
          %v3949 = vpop.f32.mrb[0].mxu0
          %v3950 = vadd.f32 %v3907, %v3949
          %v3951 = vpop.f32.mrb[0].mxu0
          %v3952 = vadd.f32 %v3909, %v3951
          %v3953 = vpop.f32.mrb[0].mxu0
          %v3954 = vadd.f32 %v3911, %v3953
          %3955 = vdwg.mxu0
          %3956 = vmatprep.subr.bf16.mxu0 %v3700
          %3957 = vmatpush1.bf16.msra.mxu0 %v3699
          %3958 = vmatprep.subr.bf16.mxu0 %v3708
          %3959 = vmatpush1.bf16.msra.mxu0 %v3707
          %3960 = vmatprep.subr.bf16.mxu0 %v3716
          %3961 = vmatpush1.bf16.msra.mxu0 %v3715
          %3962 = vmatprep.subr.bf16.mxu0 %v3724
          %3963 = vmatpush1.bf16.msra.mxu0 %v3723
          %3964 = vmatprep.subr.bf16.mxu0 %v3732
          %3965 = vmatpush1.bf16.msra.mxu0 %v3731
          %3966 = vmatprep.subr.bf16.mxu0 %v3740
          %3967 = vmatpush1.bf16.msra.mxu0 %v3739
          %3968 = vmatprep.subr.bf16.mxu0 %v3748
          %3969 = vmatpush1.bf16.msra.mxu0 %v3747
          %3970 = vmatprep.subr.bf16.mxu0 %v3756
          %3971 = vmatpush1.bf16.msra.mxu0 %v3755
          %3972 = vmatprep.subr.bf16.mxu0 %v3764
          %3973 = vmatpush1.bf16.msra.mxu0 %v3763
          %3974 = vmatprep.subr.bf16.mxu0 %v3772
          %3975 = vmatpush1.bf16.msra.mxu0 %v3771
          %3976 = vmatprep.subr.bf16.mxu0 %v3780
          %3977 = vmatpush1.bf16.msra.mxu0 %v3779
          %3978 = vmatprep.subr.bf16.mxu0 %v3788
          %3979 = vmatpush1.bf16.msra.mxu0 %v3787
          %3980 = vmatprep.subr.bf16.mxu0 %v3796
          %3981 = vmatpush1.bf16.msra.mxu0 %v3795
          %3982 = vmatprep.subr.bf16.mxu0 %v3804
          %3983 = vmatpush1.bf16.msra.mxu0 %v3803
          %3984 = vmatprep.subr.bf16.mxu0 %v3812
          %3985 = vmatpush1.bf16.msra.mxu0 %v3811
          %3986 = vmatprep.subr.bf16.mxu0 %v3820
          %3987 = vmatpush1.bf16.msra.mxu0 %v3819
          %3988 = vmatprep.mubr.bf16.mxu0 %v3058
          %3989 = vmatmul.mubr.bf16.gmra.mrb[0].mxu0 %v3057
          %v3990 = vpop.f32.mrb[0].mxu0
          %v3991 = vadd.f32 %v3948, %v3990
          %v3992 = vpop.f32.mrb[0].mxu0
          %v3993 = vadd.f32 %v3950, %v3992
          %v3994 = vpop.f32.mrb[0].mxu0
          %v3995 = vadd.f32 %v3952, %v3994
          %v3996 = vpop.f32.mrb[0].mxu0
          %v3997 = vadd.f32 %v3954, %v3996
          %3998 = vdwg.mxu0
          %3999 = vmatprep.subr.bf16.mxu0 %v3318
          %4000 = vmatpush1.bf16.msra.mxu0 %v3317
          %4001 = vmatprep.subr.bf16.mxu0 %v3326
          %4002 = vmatpush1.bf16.msra.mxu0 %v3325
          %4003 = vmatprep.subr.bf16.mxu0 %v3334
          %4004 = vmatpush1.bf16.msra.mxu0 %v3333
          %4005 = vmatprep.subr.bf16.mxu0 %v3342
          %4006 = vmatpush1.bf16.msra.mxu0 %v3341
          %4007 = vmatprep.subr.bf16.mxu0 %v3350
          %4008 = vmatpush1.bf16.msra.mxu0 %v3349
          %4009 = vmatprep.subr.bf16.mxu0 %v3358
          %4010 = vmatpush1.bf16.msra.mxu0 %v3357
          %4011 = vmatprep.subr.bf16.mxu0 %v3366
          %4012 = vmatpush1.bf16.msra.mxu0 %v3365
          %4013 = vmatprep.subr.bf16.mxu0 %v3374
          %4014 = vmatpush1.bf16.msra.mxu0 %v3373
          %4015 = vmatprep.subr.bf16.mxu0 %v3382
          %4016 = vmatpush1.bf16.msra.mxu0 %v3381
          %4017 = vmatprep.subr.bf16.mxu0 %v3390
          %4018 = vmatpush1.bf16.msra.mxu0 %v3389
          %4019 = vmatprep.subr.bf16.mxu0 %v3398
          %4020 = vmatpush1.bf16.msra.mxu0 %v3397
          %4021 = vmatprep.subr.bf16.mxu0 %v3406
          %4022 = vmatpush1.bf16.msra.mxu0 %v3405
          %4023 = vmatprep.subr.bf16.mxu0 %v3414
          %4024 = vmatpush1.bf16.msra.mxu0 %v3413
          %4025 = vmatprep.subr.bf16.mxu0 %v3422
          %4026 = vmatpush1.bf16.msra.mxu0 %v3421
          %4027 = vmatprep.subr.bf16.mxu0 %v3430
          %4028 = vmatpush1.bf16.msra.mxu0 %v3429
          %4029 = vmatprep.subr.bf16.mxu0 %v3438
          %4030 = vmatpush1.bf16.msra.mxu0 %v3437
          %4031 = vmatprep.mubr.bf16.mxu0 %v3052
          %4032 = vmatmul.mubr.bf16.gmra.mrb[0].mxu0 %v3051
          %v4033 = vpop.f32.mrb[0].mxu0
          %v4034 = vadd.f32 0.0, %v4033
          %v4035 = vpop.f32.mrb[0].mxu0
          %v4036 = vadd.f32 0.0, %v4035
          %v4037 = vpop.f32.mrb[0].mxu0
          %v4038 = vadd.f32 0.0, %v4037
          %v4039 = vpop.f32.mrb[0].mxu0
          %v4040 = vadd.f32 0.0, %v4039
          %4041 = vdwg.mxu0
          %4042 = vmatprep.subr.bf16.mxu0 %v3446
          %4043 = vmatpush1.bf16.msra.mxu0 %v3445
          %4044 = vmatprep.subr.bf16.mxu0 %v3454
          %4045 = vmatpush1.bf16.msra.mxu0 %v3453
          %4046 = vmatprep.subr.bf16.mxu0 %v3462
          %4047 = vmatpush1.bf16.msra.mxu0 %v3461
          %4048 = vmatprep.subr.bf16.mxu0 %v3470
          %4049 = vmatpush1.bf16.msra.mxu0 %v3469
          %4050 = vmatprep.subr.bf16.mxu0 %v3478
          %4051 = vmatpush1.bf16.msra.mxu0 %v3477
          %4052 = vmatprep.subr.bf16.mxu0 %v3486
          %4053 = vmatpush1.bf16.msra.mxu0 %v3485
          %4054 = vmatprep.subr.bf16.mxu0 %v3494
          %4055 = vmatpush1.bf16.msra.mxu0 %v3493
          %4056 = vmatprep.subr.bf16.mxu0 %v3502
          %4057 = vmatpush1.bf16.msra.mxu0 %v3501
          %4058 = vmatprep.subr.bf16.mxu0 %v3510
          %4059 = vmatpush1.bf16.msra.mxu0 %v3509
          %4060 = vmatprep.subr.bf16.mxu0 %v3518
          %4061 = vmatpush1.bf16.msra.mxu0 %v3517
          %4062 = vmatprep.subr.bf16.mxu0 %v3526
          %4063 = vmatpush1.bf16.msra.mxu0 %v3525
          %4064 = vmatprep.subr.bf16.mxu0 %v3534
          %4065 = vmatpush1.bf16.msra.mxu0 %v3533
          %4066 = vmatprep.subr.bf16.mxu0 %v3542
          %4067 = vmatpush1.bf16.msra.mxu0 %v3541
          %4068 = vmatprep.subr.bf16.mxu0 %v3550
          %4069 = vmatpush1.bf16.msra.mxu0 %v3549
          %4070 = vmatprep.subr.bf16.mxu0 %v3558
          %4071 = vmatpush1.bf16.msra.mxu0 %v3557
          %4072 = vmatprep.subr.bf16.mxu0 %v3566
          %4073 = vmatpush1.bf16.msra.mxu0 %v3565
          %4074 = vmatprep.mubr.bf16.mxu0 %v3054
          %4075 = vmatmul.mubr.bf16.gmra.mrb[0].mxu0 %v3053
          %v4076 = vpop.f32.mrb[0].mxu0
          %v4077 = vadd.f32 %v4034, %v4076
          %v4078 = vpop.f32.mrb[0].mxu0
          %v4079 = vadd.f32 %v4036, %v4078
          %v4080 = vpop.f32.mrb[0].mxu0
          %v4081 = vadd.f32 %v4038, %v4080
          %v4082 = vpop.f32.mrb[0].mxu0
          %v4083 = vadd.f32 %v4040, %v4082
          %4084 = vdwg.mxu0
          %4085 = vmatprep.subr.bf16.mxu0 %v3574
          %4086 = vmatpush1.bf16.msra.mxu0 %v3573
          %4087 = vmatprep.subr.bf16.mxu0 %v3582
          %4088 = vmatpush1.bf16.msra.mxu0 %v3581
          %4089 = vmatprep.subr.bf16.mxu0 %v3590
          %4090 = vmatpush1.bf16.msra.mxu0 %v3589
          %4091 = vmatprep.subr.bf16.mxu0 %v3598
          %4092 = vmatpush1.bf16.msra.mxu0 %v3597
          %4093 = vmatprep.subr.bf16.mxu0 %v3606
          %4094 = vmatpush1.bf16.msra.mxu0 %v3605
          %4095 = vmatprep.subr.bf16.mxu0 %v3614
          %4096 = vmatpush1.bf16.msra.mxu0 %v3613
          %4097 = vmatprep.subr.bf16.mxu0 %v3622
          %4098 = vmatpush1.bf16.msra.mxu0 %v3621
          %4099 = vmatprep.subr.bf16.mxu0 %v3630
          %4100 = vmatpush1.bf16.msra.mxu0 %v3629
          %4101 = vmatprep.subr.bf16.mxu0 %v3638
          %4102 = vmatpush1.bf16.msra.mxu0 %v3637
          %4103 = vmatprep.subr.bf16.mxu0 %v3646
          %4104 = vmatpush1.bf16.msra.mxu0 %v3645
          %4105 = vmatprep.subr.bf16.mxu0 %v3654
          %4106 = vmatpush1.bf16.msra.mxu0 %v3653
          %4107 = vmatprep.subr.bf16.mxu0 %v3662
          %4108 = vmatpush1.bf16.msra.mxu0 %v3661
          %4109 = vmatprep.subr.bf16.mxu0 %v3670
          %4110 = vmatpush1.bf16.msra.mxu0 %v3669
          %4111 = vmatprep.subr.bf16.mxu0 %v3678
          %4112 = vmatpush1.bf16.msra.mxu0 %v3677
          %4113 = vmatprep.subr.bf16.mxu0 %v3686
          %4114 = vmatpush1.bf16.msra.mxu0 %v3685
          %4115 = vmatprep.subr.bf16.mxu0 %v3694
          %4116 = vmatpush1.bf16.msra.mxu0 %v3693
          %4117 = vmatprep.mubr.bf16.mxu0 %v3056
          %4118 = vmatmul.mubr.bf16.gmra.mrb[0].mxu0 %v3055
          %v4119 = vpop.f32.mrb[0].mxu0
          %v4120 = vadd.f32 %v4077, %v4119
          %v4121 = vpop.f32.mrb[0].mxu0
          %v4122 = vadd.f32 %v4079, %v4121
          %v4123 = vpop.f32.mrb[0].mxu0
          %v4124 = vadd.f32 %v4081, %v4123
          %v4125 = vpop.f32.mrb[0].mxu0
          %v4126 = vadd.f32 %v4083, %v4125
          %4127 = vdwg.mxu0
          %4128 = vmatprep.subr.bf16.mxu0 %v3702
          %4129 = vmatpush1.bf16.msra.mxu0 %v3701
          %4130 = vmatprep.subr.bf16.mxu0 %v3710
          %4131 = vmatpush1.bf16.msra.mxu0 %v3709
          %4132 = vmatprep.subr.bf16.mxu0 %v3718
          %4133 = vmatpush1.bf16.msra.mxu0 %v3717
          %4134 = vmatprep.subr.bf16.mxu0 %v3726
          %4135 = vmatpush1.bf16.msra.mxu0 %v3725
          %4136 = vmatprep.subr.bf16.mxu0 %v3734
          %4137 = vmatpush1.bf16.msra.mxu0 %v3733
          %4138 = vmatprep.subr.bf16.mxu0 %v3742
          %4139 = vmatpush1.bf16.msra.mxu0 %v3741
          %4140 = vmatprep.subr.bf16.mxu0 %v3750
          %4141 = vmatpush1.bf16.msra.mxu0 %v3749
          %4142 = vmatprep.subr.bf16.mxu0 %v3758
          %4143 = vmatpush1.bf16.msra.mxu0 %v3757
          %4144 = vmatprep.subr.bf16.mxu0 %v3766
          %4145 = vmatpush1.bf16.msra.mxu0 %v3765
          %4146 = vmatprep.subr.bf16.mxu0 %v3774
          %4147 = vmatpush1.bf16.msra.mxu0 %v3773
          %4148 = vmatprep.subr.bf16.mxu0 %v3782
          %4149 = vmatpush1.bf16.msra.mxu0 %v3781
          %4150 = vmatprep.subr.bf16.mxu0 %v3790
          %4151 = vmatpush1.bf16.msra.mxu0 %v3789
          %4152 = vmatprep.subr.bf16.mxu0 %v3798
          %4153 = vmatpush1.bf16.msra.mxu0 %v3797
          %4154 = vmatprep.subr.bf16.mxu0 %v3806
          %4155 = vmatpush1.bf16.msra.mxu0 %v3805
          %4156 = vmatprep.subr.bf16.mxu0 %v3814
          %4157 = vmatpush1.bf16.msra.mxu0 %v3813
          %4158 = vmatprep.subr.bf16.mxu0 %v3822
          %4159 = vmatpush1.bf16.msra.mxu0 %v3821
          %4160 = vmatprep.mubr.bf16.mxu0 %v3058
          %4161 = vmatmul.mubr.bf16.gmra.mrb[0].mxu0 %v3057
          %v4162 = vpop.f32.mrb[0].mxu0
          %v4163 = vadd.f32 %v4120, %v4162
          %v4164 = vpop.f32.mrb[0].mxu0
          %v4165 = vadd.f32 %v4122, %v4164
          %v4166 = vpop.f32.mrb[0].mxu0
          %v4167 = vadd.f32 %v4124, %v4166
          %v4168 = vpop.f32.mrb[0].mxu0
          %v4169 = vadd.f32 %v4126, %v4168
          %4170 = vdwg.mxu0
          %4171 = vmatprep.subr.bf16.mxu0 %v3320
          %4172 = vmatpush1.bf16.msra.mxu0 %v3319
          %4173 = vmatprep.subr.bf16.mxu0 %v3328
          %4174 = vmatpush1.bf16.msra.mxu0 %v3327
          %4175 = vmatprep.subr.bf16.mxu0 %v3336
          %4176 = vmatpush1.bf16.msra.mxu0 %v3335
          %4177 = vmatprep.subr.bf16.mxu0 %v3344
          %4178 = vmatpush1.bf16.msra.mxu0 %v3343
          %4179 = vmatprep.subr.bf16.mxu0 %v3352
          %4180 = vmatpush1.bf16.msra.mxu0 %v3351
          %4181 = vmatprep.subr.bf16.mxu0 %v3360
          %4182 = vmatpush1.bf16.msra.mxu0 %v3359
          %4183 = vmatprep.subr.bf16.mxu0 %v3368
          %4184 = vmatpush1.bf16.msra.mxu0 %v3367
          %4185 = vmatprep.subr.bf16.mxu0 %v3376
          %4186 = vmatpush1.bf16.msra.mxu0 %v3375
          %4187 = vmatprep.subr.bf16.mxu0 %v3384
          %4188 = vmatpush1.bf16.msra.mxu0 %v3383
          %4189 = vmatprep.subr.bf16.mxu0 %v3392
          %4190 = vmatpush1.bf16.msra.mxu0 %v3391
          %4191 = vmatprep.subr.bf16.mxu0 %v3400
          %4192 = vmatpush1.bf16.msra.mxu0 %v3399
          %4193 = vmatprep.subr.bf16.mxu0 %v3408
          %4194 = vmatpush1.bf16.msra.mxu0 %v3407
          %4195 = vmatprep.subr.bf16.mxu0 %v3416
          %4196 = vmatpush1.bf16.msra.mxu0 %v3415
          %4197 = vmatprep.subr.bf16.mxu0 %v3424
          %4198 = vmatpush1.bf16.msra.mxu0 %v3423
          %4199 = vmatprep.subr.bf16.mxu0 %v3432
          %4200 = vmatpush1.bf16.msra.mxu0 %v3431
          %4201 = vmatprep.subr.bf16.mxu0 %v3440
          %4202 = vmatpush1.bf16.msra.mxu0 %v3439
          %4203 = vmatprep.mubr.bf16.mxu0 %v3052
          %4204 = vmatmul.mubr.bf16.gmra.mrb[0].mxu0 %v3051
          %v4205 = vpop.f32.mrb[0].mxu0
          %v4206 = vadd.f32 0.0, %v4205
          %v4207 = vpop.f32.mrb[0].mxu0
          %v4208 = vadd.f32 0.0, %v4207
          %v4209 = vpop.f32.mrb[0].mxu0
          %v4210 = vadd.f32 0.0, %v4209
          %v4211 = vpop.f32.mrb[0].mxu0
          %v4212 = vadd.f32 0.0, %v4211
          %4213 = vdwg.mxu0
          %4214 = vmatprep.subr.bf16.mxu0 %v3448
          %4215 = vmatpush1.bf16.msra.mxu0 %v3447
          %4216 = vmatprep.subr.bf16.mxu0 %v3456
          %4217 = vmatpush1.bf16.msra.mxu0 %v3455
          %4218 = vmatprep.subr.bf16.mxu0 %v3464
          %4219 = vmatpush1.bf16.msra.mxu0 %v3463
          %4220 = vmatprep.subr.bf16.mxu0 %v3472
          %4221 = vmatpush1.bf16.msra.mxu0 %v3471
          %4222 = vmatprep.subr.bf16.mxu0 %v3480
          %4223 = vmatpush1.bf16.msra.mxu0 %v3479
          %4224 = vmatprep.subr.bf16.mxu0 %v3488
          %4225 = vmatpush1.bf16.msra.mxu0 %v3487
          %4226 = vmatprep.subr.bf16.mxu0 %v3496
          %4227 = vmatpush1.bf16.msra.mxu0 %v3495
          %4228 = vmatprep.subr.bf16.mxu0 %v3504
          %4229 = vmatpush1.bf16.msra.mxu0 %v3503
          %4230 = vmatprep.subr.bf16.mxu0 %v3512
          %4231 = vmatpush1.bf16.msra.mxu0 %v3511
          %4232 = vmatprep.subr.bf16.mxu0 %v3520
          %4233 = vmatpush1.bf16.msra.mxu0 %v3519
          %4234 = vmatprep.subr.bf16.mxu0 %v3528
          %4235 = vmatpush1.bf16.msra.mxu0 %v3527
          %4236 = vmatprep.subr.bf16.mxu0 %v3536
          %4237 = vmatpush1.bf16.msra.mxu0 %v3535
          %4238 = vmatprep.subr.bf16.mxu0 %v3544
          %4239 = vmatpush1.bf16.msra.mxu0 %v3543
          %4240 = vmatprep.subr.bf16.mxu0 %v3552
          %4241 = vmatpush1.bf16.msra.mxu0 %v3551
          %4242 = vmatprep.subr.bf16.mxu0 %v3560
          %4243 = vmatpush1.bf16.msra.mxu0 %v3559
          %4244 = vmatprep.subr.bf16.mxu0 %v3568
          %4245 = vmatpush1.bf16.msra.mxu0 %v3567
          %4246 = vmatprep.mubr.bf16.mxu0 %v3054
          %4247 = vmatmul.mubr.bf16.gmra.mrb[0].mxu0 %v3053
          %v4248 = vpop.f32.mrb[0].mxu0
          %v4249 = vadd.f32 %v4206, %v4248
          %v4250 = vpop.f32.mrb[0].mxu0
          %v4251 = vadd.f32 %v4208, %v4250
          %v4252 = vpop.f32.mrb[0].mxu0
          %v4253 = vadd.f32 %v4210, %v4252
          %v4254 = vpop.f32.mrb[0].mxu0
          %v4255 = vadd.f32 %v4212, %v4254
          %4256 = vdwg.mxu0
          %4257 = vmatprep.subr.bf16.mxu0 %v3576
          %4258 = vmatpush1.bf16.msra.mxu0 %v3575
          %4259 = vmatprep.subr.bf16.mxu0 %v3584
          %4260 = vmatpush1.bf16.msra.mxu0 %v3583
          %4261 = vmatprep.subr.bf16.mxu0 %v3592
          %4262 = vmatpush1.bf16.msra.mxu0 %v3591
          %4263 = vmatprep.subr.bf16.mxu0 %v3600
          %4264 = vmatpush1.bf16.msra.mxu0 %v3599
          %4265 = vmatprep.subr.bf16.mxu0 %v3608
          %4266 = vmatpush1.bf16.msra.mxu0 %v3607
          %4267 = vmatprep.subr.bf16.mxu0 %v3616
          %4268 = vmatpush1.bf16.msra.mxu0 %v3615
          %4269 = vmatprep.subr.bf16.mxu0 %v3624
          %4270 = vmatpush1.bf16.msra.mxu0 %v3623
          %4271 = vmatprep.subr.bf16.mxu0 %v3632
          %4272 = vmatpush1.bf16.msra.mxu0 %v3631
          %4273 = vmatprep.subr.bf16.mxu0 %v3640
          %4274 = vmatpush1.bf16.msra.mxu0 %v3639
          %4275 = vmatprep.subr.bf16.mxu0 %v3648
          %4276 = vmatpush1.bf16.msra.mxu0 %v3647
          %4277 = vmatprep.subr.bf16.mxu0 %v3656
          %4278 = vmatpush1.bf16.msra.mxu0 %v3655
          %4279 = vmatprep.subr.bf16.mxu0 %v3664
          %4280 = vmatpush1.bf16.msra.mxu0 %v3663
          %4281 = vmatprep.subr.bf16.mxu0 %v3672
          %4282 = vmatpush1.bf16.msra.mxu0 %v3671
          %4283 = vmatprep.subr.bf16.mxu0 %v3680
          %4284 = vmatpush1.bf16.msra.mxu0 %v3679
          %4285 = vmatprep.subr.bf16.mxu0 %v3688
          %4286 = vmatpush1.bf16.msra.mxu0 %v3687
          %4287 = vmatprep.subr.bf16.mxu0 %v3696
          %4288 = vmatpush1.bf16.msra.mxu0 %v3695
          %4289 = vmatprep.mubr.bf16.mxu0 %v3056
          %4290 = vmatmul.mubr.bf16.gmra.mrb[0].mxu0 %v3055
          %v4291 = vpop.f32.mrb[0].mxu0
          %v4292 = vadd.f32 %v4249, %v4291
          %v4293 = vpop.f32.mrb[0].mxu0
          %v4294 = vadd.f32 %v4251, %v4293
          %v4295 = vpop.f32.mrb[0].mxu0
          %v4296 = vadd.f32 %v4253, %v4295
          %v4297 = vpop.f32.mrb[0].mxu0
          %v4298 = vadd.f32 %v4255, %v4297
          %4299 = vdwg.mxu0
          %4300 = vmatprep.subr.bf16.mxu0 %v3704
          %4301 = vmatpush1.bf16.msra.mxu0 %v3703
          %4302 = vmatprep.subr.bf16.mxu0 %v3712
          %4303 = vmatpush1.bf16.msra.mxu0 %v3711
          %4304 = vmatprep.subr.bf16.mxu0 %v3720
          %4305 = vmatpush1.bf16.msra.mxu0 %v3719
          %4306 = vmatprep.subr.bf16.mxu0 %v3728
          %4307 = vmatpush1.bf16.msra.mxu0 %v3727
          %4308 = vmatprep.subr.bf16.mxu0 %v3736
          %4309 = vmatpush1.bf16.msra.mxu0 %v3735
          %4310 = vmatprep.subr.bf16.mxu0 %v3744
          %4311 = vmatpush1.bf16.msra.mxu0 %v3743
          %4312 = vmatprep.subr.bf16.mxu0 %v3752
          %4313 = vmatpush1.bf16.msra.mxu0 %v3751
          %4314 = vmatprep.subr.bf16.mxu0 %v3760
          %4315 = vmatpush1.bf16.msra.mxu0 %v3759
          %4316 = vmatprep.subr.bf16.mxu0 %v3768
          %4317 = vmatpush1.bf16.msra.mxu0 %v3767
          %4318 = vmatprep.subr.bf16.mxu0 %v3776
          %4319 = vmatpush1.bf16.msra.mxu0 %v3775
          %4320 = vmatprep.subr.bf16.mxu0 %v3784
          %4321 = vmatpush1.bf16.msra.mxu0 %v3783
          %4322 = vmatprep.subr.bf16.mxu0 %v3792
          %4323 = vmatpush1.bf16.msra.mxu0 %v3791
          %4324 = vmatprep.subr.bf16.mxu0 %v3800
          %4325 = vmatpush1.bf16.msra.mxu0 %v3799
          %4326 = vmatprep.subr.bf16.mxu0 %v3808
          %4327 = vmatpush1.bf16.msra.mxu0 %v3807
          %4328 = vmatprep.subr.bf16.mxu0 %v3816
          %4329 = vmatpush1.bf16.msra.mxu0 %v3815
          %4330 = vmatprep.subr.bf16.mxu0 %v3824
          %4331 = vmatpush1.bf16.msra.mxu0 %v3823
          %4332 = vmatprep.mubr.bf16.mxu0 %v3058
          %4333 = vmatmul.mubr.bf16.gmra.mrb[0].mxu0 %v3057
          %v4334 = vpop.f32.mrb[0].mxu0
          %v4335 = vadd.f32 %v4292, %v4334
          %v4336 = vpop.f32.mrb[0].mxu0
          %v4337 = vadd.f32 %v4294, %v4336
          %v4338 = vpop.f32.mrb[0].mxu0
          %v4339 = vadd.f32 %v4296, %v4338
          %v4340 = vpop.f32.mrb[0].mxu0
          %v4341 = vadd.f32 %v4298, %v4340
          %4342 = vdwg.mxu0
          %4343 = vmatprep.subr.bf16.mxu0 %v3322
          %4344 = vmatpush1.bf16.msra.mxu0 %v3321
          %4345 = vmatprep.subr.bf16.mxu0 %v3330
          %4346 = vmatpush1.bf16.msra.mxu0 %v3329
          %4347 = vmatprep.subr.bf16.mxu0 %v3338
          %4348 = vmatpush1.bf16.msra.mxu0 %v3337
          %4349 = vmatprep.subr.bf16.mxu0 %v3346
          %4350 = vmatpush1.bf16.msra.mxu0 %v3345
          %4351 = vmatprep.subr.bf16.mxu0 %v3354
          %4352 = vmatpush1.bf16.msra.mxu0 %v3353
          %4353 = vmatprep.subr.bf16.mxu0 %v3362
          %4354 = vmatpush1.bf16.msra.mxu0 %v3361
          %4355 = vmatprep.subr.bf16.mxu0 %v3370
          %4356 = vmatpush1.bf16.msra.mxu0 %v3369
          %4357 = vmatprep.subr.bf16.mxu0 %v3378
          %4358 = vmatpush1.bf16.msra.mxu0 %v3377
          %4359 = vmatprep.subr.bf16.mxu0 %v3386
          %4360 = vmatpush1.bf16.msra.mxu0 %v3385
          %4361 = vmatprep.subr.bf16.mxu0 %v3394
          %4362 = vmatpush1.bf16.msra.mxu0 %v3393
          %4363 = vmatprep.subr.bf16.mxu0 %v3402
          %4364 = vmatpush1.bf16.msra.mxu0 %v3401
          %4365 = vmatprep.subr.bf16.mxu0 %v3410
          %4366 = vmatpush1.bf16.msra.mxu0 %v3409
          %4367 = vmatprep.subr.bf16.mxu0 %v3418
          %4368 = vmatpush1.bf16.msra.mxu0 %v3417
          %4369 = vmatprep.subr.bf16.mxu0 %v3426
          %4370 = vmatpush1.bf16.msra.mxu0 %v3425
          %4371 = vmatprep.subr.bf16.mxu0 %v3434
          %4372 = vmatpush1.bf16.msra.mxu0 %v3433
          %4373 = vmatprep.subr.bf16.mxu0 %v3442
          %4374 = vmatpush1.bf16.msra.mxu0 %v3441
          %4375 = vmatprep.mubr.bf16.mxu0 %v3052
          %4376 = vmatmul.mubr.bf16.gmra.mrb[0].mxu0 %v3051
          %v4377 = vpop.f32.mrb[0].mxu0
          %v4378 = vadd.f32 0.0, %v4377
          %v4379 = vpop.f32.mrb[0].mxu0
          %v4380 = vadd.f32 0.0, %v4379
          %v4381 = vpop.f32.mrb[0].mxu0
          %v4382 = vadd.f32 0.0, %v4381
          %v4383 = vpop.f32.mrb[0].mxu0
          %v4384 = vadd.f32 0.0, %v4383
          %4385 = vdwg.mxu0
          %4386 = vmatprep.subr.bf16.mxu0 %v3450
          %4387 = vmatpush1.bf16.msra.mxu0 %v3449
          %4388 = vmatprep.subr.bf16.mxu0 %v3458
          %4389 = vmatpush1.bf16.msra.mxu0 %v3457
          %4390 = vmatprep.subr.bf16.mxu0 %v3466
          %4391 = vmatpush1.bf16.msra.mxu0 %v3465
          %4392 = vmatprep.subr.bf16.mxu0 %v3474
          %4393 = vmatpush1.bf16.msra.mxu0 %v3473
          %4394 = vmatprep.subr.bf16.mxu0 %v3482
          %4395 = vmatpush1.bf16.msra.mxu0 %v3481
          %4396 = vmatprep.subr.bf16.mxu0 %v3490
          %4397 = vmatpush1.bf16.msra.mxu0 %v3489
          %4398 = vmatprep.subr.bf16.mxu0 %v3498
          %4399 = vmatpush1.bf16.msra.mxu0 %v3497
          %4400 = vmatprep.subr.bf16.mxu0 %v3506
          %4401 = vmatpush1.bf16.msra.mxu0 %v3505
          %4402 = vmatprep.subr.bf16.mxu0 %v3514
          %4403 = vmatpush1.bf16.msra.mxu0 %v3513
          %4404 = vmatprep.subr.bf16.mxu0 %v3522
          %4405 = vmatpush1.bf16.msra.mxu0 %v3521
          %4406 = vmatprep.subr.bf16.mxu0 %v3530
          %4407 = vmatpush1.bf16.msra.mxu0 %v3529
          %4408 = vmatprep.subr.bf16.mxu0 %v3538
          %4409 = vmatpush1.bf16.msra.mxu0 %v3537
          %4410 = vmatprep.subr.bf16.mxu0 %v3546
          %4411 = vmatpush1.bf16.msra.mxu0 %v3545
          %4412 = vmatprep.subr.bf16.mxu0 %v3554
          %4413 = vmatpush1.bf16.msra.mxu0 %v3553
          %4414 = vmatprep.subr.bf16.mxu0 %v3562
          %4415 = vmatpush1.bf16.msra.mxu0 %v3561
          %4416 = vmatprep.subr.bf16.mxu0 %v3570
          %4417 = vmatpush1.bf16.msra.mxu0 %v3569
          %4418 = vmatprep.mubr.bf16.mxu0 %v3054
          %4419 = vmatmul.mubr.bf16.gmra.mrb[0].mxu0 %v3053
          %v4420 = vpop.f32.mrb[0].mxu0
          %v4421 = vadd.f32 %v4378, %v4420
          %v4422 = vpop.f32.mrb[0].mxu0
          %v4423 = vadd.f32 %v4380, %v4422
          %v4424 = vpop.f32.mrb[0].mxu0
          %v4425 = vadd.f32 %v4382, %v4424
          %v4426 = vpop.f32.mrb[0].mxu0
          %v4427 = vadd.f32 %v4384, %v4426
          %4428 = vdwg.mxu0
          %4429 = vmatprep.subr.bf16.mxu0 %v3578
          %4430 = vmatpush1.bf16.msra.mxu0 %v3577
          %4431 = vmatprep.subr.bf16.mxu0 %v3586
          %4432 = vmatpush1.bf16.msra.mxu0 %v3585
          %4433 = vmatprep.subr.bf16.mxu0 %v3594
          %4434 = vmatpush1.bf16.msra.mxu0 %v3593
          %4435 = vmatprep.subr.bf16.mxu0 %v3602
          %4436 = vmatpush1.bf16.msra.mxu0 %v3601
          %4437 = vmatprep.subr.bf16.mxu0 %v3610
          %4438 = vmatpush1.bf16.msra.mxu0 %v3609
          %4439 = vmatprep.subr.bf16.mxu0 %v3618
          %4440 = vmatpush1.bf16.msra.mxu0 %v3617
          %4441 = vmatprep.subr.bf16.mxu0 %v3626
          %4442 = vmatpush1.bf16.msra.mxu0 %v3625
          %4443 = vmatprep.subr.bf16.mxu0 %v3634
          %4444 = vmatpush1.bf16.msra.mxu0 %v3633
          %4445 = vmatprep.subr.bf16.mxu0 %v3642
          %4446 = vmatpush1.bf16.msra.mxu0 %v3641
          %4447 = vmatprep.subr.bf16.mxu0 %v3650
          %4448 = vmatpush1.bf16.msra.mxu0 %v3649
          %4449 = vmatprep.subr.bf16.mxu0 %v3658
          %4450 = vmatpush1.bf16.msra.mxu0 %v3657
          %4451 = vmatprep.subr.bf16.mxu0 %v3666
          %4452 = vmatpush1.bf16.msra.mxu0 %v3665
          %4453 = vmatprep.subr.bf16.mxu0 %v3674
          %4454 = vmatpush1.bf16.msra.mxu0 %v3673
          %4455 = vmatprep.subr.bf16.mxu0 %v3682
          %4456 = vmatpush1.bf16.msra.mxu0 %v3681
          %4457 = vmatprep.subr.bf16.mxu0 %v3690
          %4458 = vmatpush1.bf16.msra.mxu0 %v3689
          %4459 = vmatprep.subr.bf16.mxu0 %v3698
          %4460 = vmatpush1.bf16.msra.mxu0 %v3697
          %4461 = vmatprep.mubr.bf16.mxu0 %v3056
          %4462 = vmatmul.mubr.bf16.gmra.mrb[0].mxu0 %v3055
          %v4463 = vpop.f32.mrb[0].mxu0
          %v4464 = vadd.f32 %v4421, %v4463
          %v4465 = vpop.f32.mrb[0].mxu0
          %v4466 = vadd.f32 %v4423, %v4465
          %v4467 = vpop.f32.mrb[0].mxu0
          %v4468 = vadd.f32 %v4425, %v4467
          %v4469 = vpop.f32.mrb[0].mxu0
          %v4470 = vadd.f32 %v4427, %v4469
          %4471 = vdwg.mxu0
          %4472 = vmatprep.subr.bf16.mxu0 %v3706
          %4473 = vmatpush1.bf16.msra.mxu0 %v3705
          %4474 = vmatprep.subr.bf16.mxu0 %v3714
          %4475 = vmatpush1.bf16.msra.mxu0 %v3713
          %4476 = vmatprep.subr.bf16.mxu0 %v3722
          %4477 = vmatpush1.bf16.msra.mxu0 %v3721
          %4478 = vmatprep.subr.bf16.mxu0 %v3730
          %4479 = vmatpush1.bf16.msra.mxu0 %v3729
          %4480 = vmatprep.subr.bf16.mxu0 %v3738
          %4481 = vmatpush1.bf16.msra.mxu0 %v3737
          %4482 = vmatprep.subr.bf16.mxu0 %v3746
          %4483 = vmatpush1.bf16.msra.mxu0 %v3745
          %4484 = vmatprep.subr.bf16.mxu0 %v3754
          %4485 = vmatpush1.bf16.msra.mxu0 %v3753
          %4486 = vmatprep.subr.bf16.mxu0 %v3762
          %4487 = vmatpush1.bf16.msra.mxu0 %v3761
          %4488 = vmatprep.subr.bf16.mxu0 %v3770
          %4489 = vmatpush1.bf16.msra.mxu0 %v3769
          %4490 = vmatprep.subr.bf16.mxu0 %v3778
          %4491 = vmatpush1.bf16.msra.mxu0 %v3777
          %4492 = vmatprep.subr.bf16.mxu0 %v3786
          %4493 = vmatpush1.bf16.msra.mxu0 %v3785
          %4494 = vmatprep.subr.bf16.mxu0 %v3794
          %4495 = vmatpush1.bf16.msra.mxu0 %v3793
          %4496 = vmatprep.subr.bf16.mxu0 %v3802
          %4497 = vmatpush1.bf16.msra.mxu0 %v3801
          %4498 = vmatprep.subr.bf16.mxu0 %v3810
          %4499 = vmatpush1.bf16.msra.mxu0 %v3809
          %4500 = vmatprep.subr.bf16.mxu0 %v3818
          %4501 = vmatpush1.bf16.msra.mxu0 %v3817
          %4502 = vmatprep.subr.bf16.mxu0 %v3826
          %4503 = vmatpush1.bf16.msra.mxu0 %v3825
          %4504 = vmatprep.mubr.bf16.mxu0 %v3058
          %4505 = vmatmul.mubr.bf16.gmra.mrb[0].mxu0 %v3057
          %v4506 = vpop.f32.mrb[0].mxu0
          %v4507 = vadd.f32 %v4464, %v4506
          %v4508 = vpop.f32.mrb[0].mxu0
          %v4509 = vadd.f32 %v4466, %v4508
          %v4510 = vpop.f32.mrb[0].mxu0
          %v4511 = vadd.f32 %v4468, %v4510
          %v4512 = vpop.f32.mrb[0].mxu0
          %v4513 = vadd.f32 %v4470, %v4512
          %4514 = vdwg.mxu0
          %v4515 = vld [vmem:[%s8] sm:$0xff]
          %v4517 = vlaneseq
          %v4518 = vshrl.u32 %v4517, 7
          %v4519 = vsub.s32 0, %v4518
          %v4520 = vrot.slane %v4515, %v4519
          %v4521 = vlaneseq
          %v4522 = vshrl.u32 %v4521, 7
          %v4523 = vsub.s32 1, %v4522
          %v4524 = vrot.slane %v4515, %v4523
          %v4525 = vlaneseq
          %v4526 = vshrl.u32 %v4525, 7
          %v4527 = vsub.s32 2, %v4526
          %v4528 = vrot.slane %v4515, %v4527
          %v4529 = vlaneseq
          %v4530 = vshrl.u32 %v4529, 7
          %v4531 = vsub.s32 3, %v4530
          %v4532 = vrot.slane %v4515, %v4531
          %v4533 = vlaneseq
          %v4534 = vshrl.u32 %v4533, 7
          %v4535 = vsub.s32 4, %v4534
          %v4536 = vrot.slane %v4515, %v4535
          %v4537 = vlaneseq
          %v4538 = vshrl.u32 %v4537, 7
          %v4539 = vsub.s32 5, %v4538
          %v4540 = vrot.slane %v4515, %v4539
          %v4541 = vlaneseq
          %v4542 = vshrl.u32 %v4541, 7
          %v4543 = vsub.s32 6, %v4542
          %v4544 = vrot.slane %v4515, %v4543
          %v4545 = vlaneseq
          %v4546 = vshrl.u32 %v4545, 7
          %v4547 = vsub.s32 7, %v4546
          %v4548 = vrot.slane %v4515, %v4547
          %v4557 = vmul.f32 %v3991, %v4520
          %v4558 = vmul.f32 %v3993, %v4524
          %v4559 = vmul.f32 %v4163, %v4528
          %v4560 = vmul.f32 %v4165, %v4532
          %v4561 = vmul.f32 %v4335, %v4536
          %v4562 = vmul.f32 %v4337, %v4540
          %v4563 = vmul.f32 %v4507, %v4544
          %v4564 = vmul.f32 %v4509, %v4548
          %v4565 = vmul.f32 %v3995, %v4520
          %v4566 = vmul.f32 %v3997, %v4524
          %v4567 = vmul.f32 %v4167, %v4528
          %v4568 = vmul.f32 %v4169, %v4532
          %v4569 = vmul.f32 %v4339, %v4536
          %v4570 = vmul.f32 %v4341, %v4540
          %v4571 = vmul.f32 %v4511, %v4544
          %v4572 = vmul.f32 %v4513, %v4548
          %v4573 = vld [vmem:[%s9] sm:$0xff]
          %v4575 = vlaneseq
          %v4576 = vshrl.u32 %v4575, 7
          %v4577 = vsub.s32 0, %v4576
          %v4578 = vrot.slane %v4573, %v4577
          %v4579 = vlaneseq
          %v4580 = vshrl.u32 %v4579, 7
          %v4581 = vsub.s32 1, %v4580
          %v4582 = vrot.slane %v4573, %v4581
          %v4583 = vlaneseq
          %v4584 = vshrl.u32 %v4583, 7
          %v4585 = vsub.s32 2, %v4584
          %v4586 = vrot.slane %v4573, %v4585
          %v4587 = vlaneseq
          %v4588 = vshrl.u32 %v4587, 7
          %v4589 = vsub.s32 3, %v4588
          %v4590 = vrot.slane %v4573, %v4589
          %v4591 = vlaneseq
          %v4592 = vshrl.u32 %v4591, 7
          %v4593 = vsub.s32 4, %v4592
          %v4594 = vrot.slane %v4573, %v4593
          %v4595 = vlaneseq
          %v4596 = vshrl.u32 %v4595, 7
          %v4597 = vsub.s32 5, %v4596
          %v4598 = vrot.slane %v4573, %v4597
          %v4599 = vlaneseq
          %v4600 = vshrl.u32 %v4599, 7
          %v4601 = vsub.s32 6, %v4600
          %v4602 = vrot.slane %v4573, %v4601
          %v4603 = vlaneseq
          %v4604 = vshrl.u32 %v4603, 7
          %v4605 = vsub.s32 7, %v4604
          %v4606 = vrot.slane %v4573, %v4605
          %v4615 = vadd.f32 %v4557, %v4578
          %v4616 = vadd.f32 %v4558, %v4582
          %v4617 = vadd.f32 %v4559, %v4586
          %v4618 = vadd.f32 %v4560, %v4590
          %v4619 = vadd.f32 %v4561, %v4594
          %v4620 = vadd.f32 %v4562, %v4598
          %v4621 = vadd.f32 %v4563, %v4602
          %v4622 = vadd.f32 %v4564, %v4606
          %v4623 = vadd.f32 %v4565, %v4578
          %v4624 = vadd.f32 %v4566, %v4582
          %v4625 = vadd.f32 %v4567, %v4586
          %v4626 = vadd.f32 %v4568, %v4590
          %v4627 = vadd.f32 %v4569, %v4594
          %v4628 = vadd.f32 %v4570, %v4598
          %v4629 = vadd.f32 %v4571, %v4602
          %v4630 = vadd.f32 %v4572, %v4606
          %v4631 = vmax.f32 %v4615, 0.0
          %v4632 = vmax.f32 %v4616, 0.0
          %v4633 = vmax.f32 %v4617, 0.0
          %v4634 = vmax.f32 %v4618, 0.0
          %v4635 = vmax.f32 %v4619, 0.0
          %v4636 = vmax.f32 %v4620, 0.0
          %v4637 = vmax.f32 %v4621, 0.0
          %v4638 = vmax.f32 %v4622, 0.0
          %v4639 = vmax.f32 %v4623, 0.0
          %v4640 = vmax.f32 %v4624, 0.0
          %v4641 = vmax.f32 %v4625, 0.0
          %v4642 = vmax.f32 %v4626, 0.0
          %v4643 = vmax.f32 %v4627, 0.0
          %v4644 = vmax.f32 %v4628, 0.0
          %v4645 = vmax.f32 %v4629, 0.0
          %v4646 = vmax.f32 %v4630, 0.0
          %v4647 = vpack.c.bf16 %v4639, %v4631
          %v4648 = vpack.c.bf16 %v4640, %v4632
          %v4649 = vpack.c.bf16 %v4641, %v4633
          %v4650 = vpack.c.bf16 %v4642, %v4634
          %v4651 = vpack.c.bf16 %v4643, %v4635
          %v4652 = vpack.c.bf16 %v4644, %v4636
          %v4653 = vpack.c.bf16 %v4645, %v4637
          %v4654 = vpack.c.bf16 %v4646, %v4638
          %4655 = vst [vmem:[#allocation2] sm:$0xff] %v4647
          %4656 = vst [vmem:[#allocation2 + $0x8] sm:$0xff] %v4648
          %4657 = vst [vmem:[#allocation2 + $0x10] sm:$0xff] %v4649
          %4658 = vst [vmem:[#allocation2 + $0x18] sm:$0xff] %v4650
          %4659 = vst [vmem:[#allocation2 + $0x20] sm:$0xff] %v4651
          %4660 = vst [vmem:[#allocation2 + $0x28] sm:$0xff] %v4652
          %4661 = vst [vmem:[#allocation2 + $0x30] sm:$0xff] %v4653
          %4662 = vst [vmem:[#allocation2 + $0x38] sm:$0xff] %v4654
        $region92: #{_lambda_.1} parent=71 // pred_fallthru
          _
        %v4663 = vld [vmem:[%s498] sm:$0xff]
        %v4664 = vld [vmem:[%s498 + $0x8] sm:$0xff]
        %v4665 = vld [vmem:[%s498 + $0x10] sm:$0xff]
        %v4666 = vld [vmem:[%s498 + $0x18] sm:$0xff]
        %v4667 = vld [vmem:[%s498 + $0x20] sm:$0xff]
        %v4668 = vld [vmem:[%s498 + $0x28] sm:$0xff]
        %v4669 = vld [vmem:[%s498 + $0x30] sm:$0xff]
        %v4670 = vld [vmem:[%s498 + $0x38] sm:$0xff]
        %v4671 = vld [vmem:[%s498 + $0x40] sm:$0xff]
        %v4672 = vld [vmem:[%s498 + $0x48] sm:$0xff]
        %v4673 = vld [vmem:[%s498 + $0x50] sm:$0xff]
        %v4674 = vld [vmem:[%s498 + $0x58] sm:$0xff]
        %v4675 = vld [vmem:[%s498 + $0x60] sm:$0xff]
        %v4676 = vld [vmem:[%s498 + $0x68] sm:$0xff]
        %v4677 = vld [vmem:[%s498 + $0x70] sm:$0xff]
        %v4678 = vld [vmem:[%s498 + $0x78] sm:$0xff]
        %v4679 = vld [vmem:[%s498 + $0x80] sm:$0xff]
        %v4680 = vld [vmem:[%s498 + $0x88] sm:$0xff]
        %v4681 = vld [vmem:[%s498 + $0x90] sm:$0xff]
        %v4682 = vld [vmem:[%s498 + $0x98] sm:$0xff]
        %v4683 = vld [vmem:[%s498 + $0xa0] sm:$0xff]
        %v4684 = vld [vmem:[%s498 + $0xa8] sm:$0xff]
        %v4685 = vld [vmem:[%s498 + $0xb0] sm:$0xff]
        %v4686 = vld [vmem:[%s498 + $0xb8] sm:$0xff]
        %v4687 = vld [vmem:[%s498 + $0xc0] sm:$0xff]
        %v4688 = vld [vmem:[%s498 + $0xc8] sm:$0xff]
        %v4689 = vld [vmem:[%s498 + $0xd0] sm:$0xff]
        %v4690 = vld [vmem:[%s498 + $0xd8] sm:$0xff]
        %v4691 = vld [vmem:[%s498 + $0xe0] sm:$0xff]
        %v4692 = vld [vmem:[%s498 + $0xe8] sm:$0xff]
        %v4693 = vld [vmem:[%s498 + $0xf0] sm:$0xff]
        %v4694 = vld [vmem:[%s498 + $0xf8] sm:$0xff]
        %v4695 = vunpack.c.l.s8.bf16 %v4663
        %v4696 = vunpack.c.h.s8.bf16 %v4663
        %v4697 = vunpack.c.l.s8.bf16 %v4664
        %v4698 = vunpack.c.h.s8.bf16 %v4664
        %v4699 = vunpack.c.l.s8.bf16 %v4665
        %v4700 = vunpack.c.h.s8.bf16 %v4665
        %v4701 = vunpack.c.l.s8.bf16 %v4666
        %v4702 = vunpack.c.h.s8.bf16 %v4666
        %v4703 = vunpack.c.l.s8.bf16 %v4667
        %v4704 = vunpack.c.h.s8.bf16 %v4667
        %v4705 = vunpack.c.l.s8.bf16 %v4668
        %v4706 = vunpack.c.h.s8.bf16 %v4668
        %v4707 = vunpack.c.l.s8.bf16 %v4669
        %v4708 = vunpack.c.h.s8.bf16 %v4669
        %v4709 = vunpack.c.l.s8.bf16 %v4670
        %v4710 = vunpack.c.h.s8.bf16 %v4670
        %v4711 = vunpack.c.l.s8.bf16 %v4671
        %v4712 = vunpack.c.h.s8.bf16 %v4671
        %v4713 = vunpack.c.l.s8.bf16 %v4672
        %v4714 = vunpack.c.h.s8.bf16 %v4672
        %v4715 = vunpack.c.l.s8.bf16 %v4673
        %v4716 = vunpack.c.h.s8.bf16 %v4673
        %v4717 = vunpack.c.l.s8.bf16 %v4674
        %v4718 = vunpack.c.h.s8.bf16 %v4674
        %v4719 = vunpack.c.l.s8.bf16 %v4675
        %v4720 = vunpack.c.h.s8.bf16 %v4675
        %v4721 = vunpack.c.l.s8.bf16 %v4676
        %v4722 = vunpack.c.h.s8.bf16 %v4676
        %v4723 = vunpack.c.l.s8.bf16 %v4677
        %v4724 = vunpack.c.h.s8.bf16 %v4677
        %v4725 = vunpack.c.l.s8.bf16 %v4678
        %v4726 = vunpack.c.h.s8.bf16 %v4678
        %v4727 = vunpack.c.l.s8.bf16 %v4679
        %v4728 = vunpack.c.h.s8.bf16 %v4679
        %v4729 = vunpack.c.l.s8.bf16 %v4680
        %v4730 = vunpack.c.h.s8.bf16 %v4680
        %v4731 = vunpack.c.l.s8.bf16 %v4681
        %v4732 = vunpack.c.h.s8.bf16 %v4681
        %v4733 = vunpack.c.l.s8.bf16 %v4682
        %v4734 = vunpack.c.h.s8.bf16 %v4682
        %v4735 = vunpack.c.l.s8.bf16 %v4683
        %v4736 = vunpack.c.h.s8.bf16 %v4683
        %v4737 = vunpack.c.l.s8.bf16 %v4684
        %v4738 = vunpack.c.h.s8.bf16 %v4684
        %v4739 = vunpack.c.l.s8.bf16 %v4685
        %v4740 = vunpack.c.h.s8.bf16 %v4685
        %v4741 = vunpack.c.l.s8.bf16 %v4686
        %v4742 = vunpack.c.h.s8.bf16 %v4686
        %v4743 = vunpack.c.l.s8.bf16 %v4687
        %v4744 = vunpack.c.h.s8.bf16 %v4687
        %v4745 = vunpack.c.l.s8.bf16 %v4688
        %v4746 = vunpack.c.h.s8.bf16 %v4688
        %v4747 = vunpack.c.l.s8.bf16 %v4689
        %v4748 = vunpack.c.h.s8.bf16 %v4689
        %v4749 = vunpack.c.l.s8.bf16 %v4690
        %v4750 = vunpack.c.h.s8.bf16 %v4690
        %v4751 = vunpack.c.l.s8.bf16 %v4691
        %v4752 = vunpack.c.h.s8.bf16 %v4691
        %v4753 = vunpack.c.l.s8.bf16 %v4692
        %v4754 = vunpack.c.h.s8.bf16 %v4692
        %v4755 = vunpack.c.l.s8.bf16 %v4693
        %v4756 = vunpack.c.h.s8.bf16 %v4693
        %v4757 = vunpack.c.l.s8.bf16 %v4694
        %v4758 = vunpack.c.h.s8.bf16 %v4694
        %v4759 = vld [vmem:[#allocation2] sm:$0xff]
        %v4760 = vld [vmem:[#allocation2 + $0x8] sm:$0xff]
        %v4761 = vld [vmem:[#allocation2 + $0x10] sm:$0xff]
        %v4762 = vld [vmem:[#allocation2 + $0x18] sm:$0xff]
        %v4763 = vld [vmem:[#allocation2 + $0x20] sm:$0xff]
        %v4764 = vld [vmem:[#allocation2 + $0x28] sm:$0xff]
        %v4765 = vld [vmem:[#allocation2 + $0x30] sm:$0xff]
        %v4766 = vld [vmem:[#allocation2 + $0x38] sm:$0xff]
        %4767 = vmatprep.subr.bf16.mxu0 0
        %4768 = vmatpush1.bf16.msra.mxu0 %v4695
        %4769 = vmatprep.subr.bf16.mxu0 0
        %4770 = vmatpush1.bf16.msra.mxu0 %v4696
        %4771 = vmatprep.subr.bf16.mxu0 0
        %4772 = vmatpush1.bf16.msra.mxu0 %v4697
        %4773 = vmatprep.subr.bf16.mxu0 0
        %4774 = vmatpush1.bf16.msra.mxu0 %v4698
        %4775 = vmatprep.subr.bf16.mxu0 0
        %4776 = vmatpush1.bf16.msra.mxu0 %v4699
        %4777 = vmatprep.subr.bf16.mxu0 0
        %4778 = vmatpush1.bf16.msra.mxu0 %v4700
        %4779 = vmatprep.subr.bf16.mxu0 0
        %4780 = vmatpush1.bf16.msra.mxu0 %v4701
        %4781 = vmatprep.subr.bf16.mxu0 0
        %4782 = vmatpush1.bf16.msra.mxu0 %v4702
        %4783 = vmatprep.subr.bf16.mxu0 0
        %4784 = vmatpush1.bf16.msra.mxu0 %v4703
        %4785 = vmatprep.subr.bf16.mxu0 0
        %4786 = vmatpush1.bf16.msra.mxu0 %v4704
        %4787 = vmatprep.subr.bf16.mxu0 0
        %4788 = vmatpush1.bf16.msra.mxu0 %v4705
        %4789 = vmatprep.subr.bf16.mxu0 0
        %4790 = vmatpush1.bf16.msra.mxu0 %v4706
        %4791 = vmatprep.subr.bf16.mxu0 0
        %4792 = vmatpush1.bf16.msra.mxu0 %v4707
        %4793 = vmatprep.subr.bf16.mxu0 0
        %4794 = vmatpush1.bf16.msra.mxu0 %v4708
        %4795 = vmatprep.subr.bf16.mxu0 0
        %4796 = vmatpush1.bf16.msra.mxu0 %v4709
        %4797 = vmatprep.subr.bf16.mxu0 0
        %4798 = vmatpush1.bf16.msra.mxu0 %v4710
        %4799 = vmatprep.mubr.bf16.mxu0 %v4760
        %4800 = vmatmul.mubr.bf16.gmra.mrb[0].mxu0 %v4759
        %v4801 = vpop.f32.mrb[0].mxu0
        %v4802 = vadd.f32 0.0, %v4801
        %v4803 = vpop.f32.mrb[0].mxu0
        %v4804 = vpop.f32.mrb[0].mxu0
        %v4805 = vadd.f32 0.0, %v4804
        %v4806 = vpop.f32.mrb[0].mxu0
        %4807 = vdwg.mxu0
        %4808 = vmatprep.subr.bf16.mxu0 0
        %4809 = vmatpush1.bf16.msra.mxu0 %v4711
        %4810 = vmatprep.subr.bf16.mxu0 0
        %4811 = vmatpush1.bf16.msra.mxu0 %v4712
        %4812 = vmatprep.subr.bf16.mxu0 0
        %4813 = vmatpush1.bf16.msra.mxu0 %v4713
        %4814 = vmatprep.subr.bf16.mxu0 0
        %4815 = vmatpush1.bf16.msra.mxu0 %v4714
        %4816 = vmatprep.subr.bf16.mxu0 0
        %4817 = vmatpush1.bf16.msra.mxu0 %v4715
        %4818 = vmatprep.subr.bf16.mxu0 0
        %4819 = vmatpush1.bf16.msra.mxu0 %v4716
        %4820 = vmatprep.subr.bf16.mxu0 0
        %4821 = vmatpush1.bf16.msra.mxu0 %v4717
        %4822 = vmatprep.subr.bf16.mxu0 0
        %4823 = vmatpush1.bf16.msra.mxu0 %v4718
        %4824 = vmatprep.subr.bf16.mxu0 0
        %4825 = vmatpush1.bf16.msra.mxu0 %v4719
        %4826 = vmatprep.subr.bf16.mxu0 0
        %4827 = vmatpush1.bf16.msra.mxu0 %v4720
        %4828 = vmatprep.subr.bf16.mxu0 0
        %4829 = vmatpush1.bf16.msra.mxu0 %v4721
        %4830 = vmatprep.subr.bf16.mxu0 0
        %4831 = vmatpush1.bf16.msra.mxu0 %v4722
        %4832 = vmatprep.subr.bf16.mxu0 0
        %4833 = vmatpush1.bf16.msra.mxu0 %v4723
        %4834 = vmatprep.subr.bf16.mxu0 0
        %4835 = vmatpush1.bf16.msra.mxu0 %v4724
        %4836 = vmatprep.subr.bf16.mxu0 0
        %4837 = vmatpush1.bf16.msra.mxu0 %v4725
        %4838 = vmatprep.subr.bf16.mxu0 0
        %4839 = vmatpush1.bf16.msra.mxu0 %v4726
        %4840 = vmatprep.mubr.bf16.mxu0 %v4762
        %4841 = vmatmul.mubr.bf16.gmra.mrb[0].mxu0 %v4761
        %v4842 = vpop.f32.mrb[0].mxu0
        %v4843 = vadd.f32 %v4802, %v4842
        %v4844 = vpop.f32.mrb[0].mxu0
        %v4845 = vpop.f32.mrb[0].mxu0
        %v4846 = vadd.f32 %v4805, %v4845
        %v4847 = vpop.f32.mrb[0].mxu0
        %4848 = vdwg.mxu0
        %4849 = vmatprep.subr.bf16.mxu0 0
        %4850 = vmatpush1.bf16.msra.mxu0 %v4727
        %4851 = vmatprep.subr.bf16.mxu0 0
        %4852 = vmatpush1.bf16.msra.mxu0 %v4728
        %4853 = vmatprep.subr.bf16.mxu0 0
        %4854 = vmatpush1.bf16.msra.mxu0 %v4729
        %4855 = vmatprep.subr.bf16.mxu0 0
        %4856 = vmatpush1.bf16.msra.mxu0 %v4730
        %4857 = vmatprep.subr.bf16.mxu0 0
        %4858 = vmatpush1.bf16.msra.mxu0 %v4731
        %4859 = vmatprep.subr.bf16.mxu0 0
        %4860 = vmatpush1.bf16.msra.mxu0 %v4732
        %4861 = vmatprep.subr.bf16.mxu0 0
        %4862 = vmatpush1.bf16.msra.mxu0 %v4733
        %4863 = vmatprep.subr.bf16.mxu0 0
        %4864 = vmatpush1.bf16.msra.mxu0 %v4734
        %4865 = vmatprep.subr.bf16.mxu0 0
        %4866 = vmatpush1.bf16.msra.mxu0 %v4735
        %4867 = vmatprep.subr.bf16.mxu0 0
        %4868 = vmatpush1.bf16.msra.mxu0 %v4736
        %4869 = vmatprep.subr.bf16.mxu0 0
        %4870 = vmatpush1.bf16.msra.mxu0 %v4737
        %4871 = vmatprep.subr.bf16.mxu0 0
        %4872 = vmatpush1.bf16.msra.mxu0 %v4738
        %4873 = vmatprep.subr.bf16.mxu0 0
        %4874 = vmatpush1.bf16.msra.mxu0 %v4739
        %4875 = vmatprep.subr.bf16.mxu0 0
        %4876 = vmatpush1.bf16.msra.mxu0 %v4740
        %4877 = vmatprep.subr.bf16.mxu0 0
        %4878 = vmatpush1.bf16.msra.mxu0 %v4741
        %4879 = vmatprep.subr.bf16.mxu0 0
        %4880 = vmatpush1.bf16.msra.mxu0 %v4742
        %4881 = vmatprep.mubr.bf16.mxu0 %v4764
        %4882 = vmatmul.mubr.bf16.gmra.mrb[0].mxu0 %v4763
        %v4883 = vpop.f32.mrb[0].mxu0
        %v4884 = vadd.f32 %v4843, %v4883
        %v4885 = vpop.f32.mrb[0].mxu0
        %v4886 = vpop.f32.mrb[0].mxu0
        %v4887 = vadd.f32 %v4846, %v4886
        %v4888 = vpop.f32.mrb[0].mxu0
        %4889 = vdwg.mxu0
        %4890 = vmatprep.subr.bf16.mxu0 0
        %4891 = vmatpush1.bf16.msra.mxu0 %v4743
        %4892 = vmatprep.subr.bf16.mxu0 0
        %4893 = vmatpush1.bf16.msra.mxu0 %v4744
        %4894 = vmatprep.subr.bf16.mxu0 0
        %4895 = vmatpush1.bf16.msra.mxu0 %v4745
        %4896 = vmatprep.subr.bf16.mxu0 0
        %4897 = vmatpush1.bf16.msra.mxu0 %v4746
        %4898 = vmatprep.subr.bf16.mxu0 0
        %4899 = vmatpush1.bf16.msra.mxu0 %v4747
        %4900 = vmatprep.subr.bf16.mxu0 0
        %4901 = vmatpush1.bf16.msra.mxu0 %v4748
        %4902 = vmatprep.subr.bf16.mxu0 0
        %4903 = vmatpush1.bf16.msra.mxu0 %v4749
        %4904 = vmatprep.subr.bf16.mxu0 0
        %4905 = vmatpush1.bf16.msra.mxu0 %v4750
        %4906 = vmatprep.subr.bf16.mxu0 0
        %4907 = vmatpush1.bf16.msra.mxu0 %v4751
        %4908 = vmatprep.subr.bf16.mxu0 0
        %4909 = vmatpush1.bf16.msra.mxu0 %v4752
        %4910 = vmatprep.subr.bf16.mxu0 0
        %4911 = vmatpush1.bf16.msra.mxu0 %v4753
        %4912 = vmatprep.subr.bf16.mxu0 0
        %4913 = vmatpush1.bf16.msra.mxu0 %v4754
        %4914 = vmatprep.subr.bf16.mxu0 0
        %4915 = vmatpush1.bf16.msra.mxu0 %v4755
        %4916 = vmatprep.subr.bf16.mxu0 0
        %4917 = vmatpush1.bf16.msra.mxu0 %v4756
        %4918 = vmatprep.subr.bf16.mxu0 0
        %4919 = vmatpush1.bf16.msra.mxu0 %v4757
        %4920 = vmatprep.subr.bf16.mxu0 0
        %4921 = vmatpush1.bf16.msra.mxu0 %v4758
        %4922 = vmatprep.mubr.bf16.mxu0 %v4766
        %4923 = vmatmul.mubr.bf16.gmra.mrb[0].mxu0 %v4765
        %v4924 = vpop.f32.mrb[0].mxu0
        %v4925 = vadd.f32 %v4884, %v4924
        %v4926 = vpop.f32.mrb[0].mxu0
        %v4927 = vpop.f32.mrb[0].mxu0
        %v4928 = vadd.f32 %v4887, %v4927
        %v4929 = vpop.f32.mrb[0].mxu0
        %4930 = vdwg.mxu0
        %v4931 = vld [vmem:[%s561] sm:$0x1]
        %v4933 = vlaneseq
        %v4934 = vshrl.u32 %v4933, 7
        %v4935 = vsub.s32 0, %v4934
        %v4936 = vrot.slane %v4931, %v4935
        %v4938 = vmul.f32 %v4925, %v4936
        %v4939 = vmul.f32 %v4928, %v4936
        %v4940 = vld [vmem:[%s564] sm:$0x1]
        %v4942 = vlaneseq
        %v4943 = vshrl.u32 %v4942, 7
        %v4944 = vsub.s32 0, %v4943
        %v4945 = vrot.slane %v4940, %v4944
        %v4947 = vadd.f32 %v4938, %v4945
        %v4948 = vadd.f32 %v4939, %v4945
        %4949 = vst [vmem:[%s551] sm:$0xff] %v4947
        %4950 = vst [vmem:[%s551 + $0x8] sm:$0xff] %v4948
        %s4951 = sand.u32 %s344, 1
        %s4952 = sand.u32 %s344, 1
        %s4953 = smul.addr %s4952, 16
        %s4954 = scalar_lea.vmem [#allocation10], %s4953
        // Predicated region
        $region93: #{_lambda_.1} parent=71 // pred_check
          %p4955 = pneg %p354
        $region94: #{_lambda_.1} parent=71 // pred_check_branch
          %4957 = sbr.rel (%p4955) target = $region96
        $region95: #{_lambda_.1} parent=71 // pred_region
          %s4958 = smul.u32 2, %s33
          %s4959 = smul.addr %s4958, 2
          %s4960 = sadd.s32 %s34, %s4959
          %s4961 = smul.addr %s4960, 8
          %s4962 = scalar_lea.vmem %s13, %s4961
          // Predicated region
          $region97: #{_lambda_.1} parent=95 // pred_check
            _
          $region98: #{_lambda_.1} parent=95 // pred_check_branch
            %4964 = sbr.rel (0) target = $region100
          $region99: #{_lambda_.1} parent=95 // pred_region
            // Predicated region
            $region101: #{_lambda_.1} parent=99 // pred_check
              _
            $region102: #{_lambda_.1} parent=99 // pred_check_branch
              %4966 = sbr.rel (0) target = $region104
            $region103: #{_lambda_.1} parent=99 // pred_region
              // Predicated region
              $region116: #{_lambda_.1} parent=103 // pred_check
                _
              $region117: #{_lambda_.1} parent=103 // pred_check_branch
                %4983 = sbr.rel (0) target = $region119
              $region118: #{_lambda_.1} parent=103 // pred_region
                loop: start=0, step=1, limit=1
                $region120: #{_lambda_.1} parent=118 // loop_pre_header
                  _
                $region121: #{_lambda_.1} parent=118 // loop_header
                  %s4985 = sphi 0, %s4989
                  %p4986 = scmp.ge.s32.totalorder %s4985, 1
                  %s4990 = sphi %s4954, %s4954
                  %s4991 = sphi %s4962, %s4962
                $region122: #{_lambda_.1} parent=118 // loop_header_branch
                  %4988 = sbr.rel (%p4986) target = $region126
                $region123: #{_lambda_.1} parent=118 // loop_body
                  %v4992 = vld [vmem:[%s4990] sm:$0xff]
                  %4993 = vst [vmem:[%s4991] sm:$0xff] %v4992
                  %v4994 = vld [vmem:[%s4990 + $0x8] sm:$0xff]
                  %4995 = vst [vmem:[%s4991 + $0x10] sm:$0xff] %v4994
                $region124: #{_lambda_.1} parent=118 // loop_footer
                  %s4989 = sadd.s32 1, %s4985
                $region125: #{_lambda_.1} parent=118 // loop_footer_branch
                  %4984 = sbr.rel target = $region121
                $region126: #{_lambda_.1} parent=118 // loop_exit
                  _
              $region119: #{_lambda_.1} parent=103 // pred_fallthru
                _
              // Predicated region
              $region127: #{_lambda_.1} parent=103 // pred_check
                _
              $region128: #{_lambda_.1} parent=103 // pred_check_branch
                %4997 = sbr.rel target = $region130
              $region129: #{_lambda_.1} parent=103 // pred_region
                _
              $region130: #{_lambda_.1} parent=103 // pred_fallthru
                _
            $region104: #{_lambda_.1} parent=99 // pred_fallthru
              _
            // Predicated region
            $region105: #{_lambda_.1} parent=99 // pred_check
              _
            $region106: #{_lambda_.1} parent=99 // pred_check_branch
              %4968 = sbr.rel target = $region108
            $region107: #{_lambda_.1} parent=99 // pred_region
              loop: start=0, step=1, limit=1
              $region109: #{_lambda_.1} parent=107 // loop_pre_header
                _
              $region110: #{_lambda_.1} parent=107 // loop_header
                %s4971 = sphi 0, %s4975
                %p4972 = scmp.ge.s32.totalorder %s4971, 1
                %s4976 = sphi %s4954, %s4954
                %s4977 = sphi %s4962, %s4962
              $region111: #{_lambda_.1} parent=107 // loop_header_branch
                %4974 = sbr.rel (%p4972) target = $region115
              $region112: #{_lambda_.1} parent=107 // loop_body
                %v4978 = vld [vmem:[%s4976] sm:$0xff]
                %4979 = vst [vmem:[%s4977] sm:$0xff] %v4978
                %v4980 = vld [vmem:[%s4976 + $0x8] sm:$0xff]
                %4981 = vst [vmem:[%s4977 + $0x10] sm:$0xff] %v4980
              $region113: #{_lambda_.1} parent=107 // loop_footer
                %s4975 = sadd.s32 1, %s4971
              $region114: #{_lambda_.1} parent=107 // loop_footer_branch
                %4970 = sbr.rel target = $region110
              $region115: #{_lambda_.1} parent=107 // loop_exit
                _
            $region108: #{_lambda_.1} parent=99 // pred_fallthru
              _
          $region100: #{_lambda_.1} parent=95 // pred_fallthru
            _
          %4998 = vnop
        $region96: #{_lambda_.1} parent=71 // pred_fallthru
          _
      $region72: #{_lambda_.1} parent=5 // pred_fallthru
        _
      %p4999 = scmp.le.s32.totalorder 2, %s24
      // Predicated region
      $region131: #{_lambda_.1} parent=5 // pred_check
        %p5000 = pneg %p4999
      $region132: #{_lambda_.1} parent=5 // pred_check_branch
        %5002 = sbr.rel (%p5000) target = $region134
      $region133: #{_lambda_.1} parent=5 // pred_region
        %s5003 = ssub.s32 %s24, 2
        // Predicated region
        $region135: #{_lambda_.1} parent=133 // pred_check
          %p5004 = pneg %p360
        $region136: #{_lambda_.1} parent=133 // pred_check_branch
          %5006 = sbr.rel (%p5004) target = $region138
        $region137: #{_lambda_.1} parent=133 // pred_region
          %s5007 = sand.u32 %s345, 1
          %s5008 = sand.u32 %s345, 1
          %s5009 = smul.addr %s5008, 16
          %s5010 = scalar_lea.vmem [#allocation10], %s5009
        $region138: #{_lambda_.1} parent=133 // pred_fallthru
          _
      $region134: #{_lambda_.1} parent=5 // pred_fallthru
        _
    $region6: #{_lambda_.1} parent=1 // loop_footer
      %s28 = sadd.s32 1, %s24
    $region7: #{_lambda_.1} parent=1 // loop_footer_branch
      %23 = sbr.rel target = $region3
    $region8: #{_lambda_.1} parent=1 // loop_exit
      _
    %5011 = vsyncpa [#allocation4], 1
    %s5012 = scalar_lea.sflag [#allocation4], 1
    %5013 = vsyncpa %s5012, 1
    %5014 = vsyncpa [#allocation6], 1
    %5015 = vsyncpa [#allocation9], 1
    %s5016 = scalar_lea.sflag [#allocation9], 1
    %5017 = vsyncpa %s5016, 1

</llo_original>
